<compile_context>
chip_gen: v5e
topology: v5e:2x2
jax: 0.10.0
libtpu: 0.0.40
codegen_flags: <defaults>
</compile_context>

<pallas_src>
import math

import jax
import jax.numpy as jnp
from jax.experimental import pallas as pl
from jax.experimental.pallas import tpu as pltpu


def _erf_f32(z):
    """Elementwise erf via Abramowitz & Stegun 7.1.26 (max abs err ~1.5e-7).

    Only uses ops that always lower on the Mosaic TPU backend.  The
    reciprocal is an EUP approx-recip refined by one Newton step (back to
    ~f32 precision) so the divide does not burn VALU slots.
    """
    a1 = 0.254829592
    a2 = -0.284496736
    a3 = 1.421413741
    a4 = -1.453152027
    a5 = 1.061405429
    p = 0.3275911
    az = jnp.abs(z)
    d = 1.0 + p * az
    t = pl.reciprocal(d, approx=True)      # EUP slot (otherwise idle)
    t = t * (2.0 - d * t)                  # one Newton step -> ~f32 precision
    poly = ((((a5 * t + a4) * t + a3) * t + a2) * t + a1) * t
    y = 1.0 - poly * jnp.exp(-az * az)     # exp on EUP
    return jnp.where(z < 0.0, -y, y)


def _gelu_exact(x):
    """Exact (erf-based) GELU, matching torch.nn.GELU() default."""
    return 0.5 * x * (1.0 + _erf_f32(x * 0.7071067811865476))


def _mlp_kernel(x_ref, wfc_ref, bfc_ref, wproj_ref, bproj_ref, o_ref, acc_ref):
    # grid = (m_blocks, h_blocks); h is the (arbitrary) reduction axis.
    h_idx = pl.program_id(1)

    @pl.when(h_idx == 0)
    def _init():
        acc_ref[...] = jnp.zeros_like(acc_ref)

    # Cast the activation block in-register (VPU filler) instead of paying an
    # extra HBM pass for a wrapper-side cast.  For the f32 path this is a
    # no-op.
    x = x_ref[...].astype(wfc_ref.dtype)
    h = jnp.dot(x, wfc_ref[...], preferred_element_type=jnp.float32)
    h = h + bfc_ref[...]                   # (1, tile_h) broadcasts over rows
    a = _gelu_exact(h)                     # GELU in f32 (VPU + EUP)
    a = a.astype(wproj_ref.dtype)          # match second matmul operand dtype
    acc_ref[...] += jnp.dot(a, wproj_ref[...], preferred_element_type=jnp.float32)

    @pl.when(h_idx == pl.num_programs(1) - 1)
    def _finalize():
        o_ref[...] = (acc_ref[...] + bproj_ref[...]).astype(o_ref.dtype)


def _round_up(a, b):
    return (a + b - 1) // b * b


def mlp_forward(x, w_fc, b_fc, w_proj, b_proj, *,
                tile_m=None, tile_h=None, compute_dtype=jnp.bfloat16):
    """
    x:      (B, T, C)
    w_fc:   (C, 4C)   (transposed vs. nn.Linear's (4C, C))
    b_fc:   (4C,)
    w_proj: (4C, C)   (transposed vs. nn.Linear's (C, 4C))
    b_proj: (C,)
    compute_dtype: dtype of the matmul operands (default bf16 -> native MXU
                   path on v5e/v6e/v7x); accumulation / GELU stay f32.
    """
    B, T, C = x.shape
    H = w_fc.shape[1]
    assert w_fc.shape == (C, H) and w_proj.shape == (H, C)
    assert b_fc.shape == (H,) and b_proj.shape == (C,)
    out_dtype = x.dtype

    # Flatten (B, T) into one M axis so the MXU sees many rows per block.
    M = B * T
    M8 = _round_up(M, 8)
    if tile_m is None:
        if M8 <= 512:
            # Single large block: best on 1-TC v5e/v6e; at this size the
            # problem is overhead-dominated on v7x anyway.
            tile_m = M8
        else:
            # Prefer 256-row tiles (>=4 grid steps for M>=1024 so both v7x
            # cores get pipelined work) and a divisor of M so no padding.
            tile_m = 256
            for cand in (256, 512, 384, 128, 192, 64):
                if M8 % cand == 0:
                    tile_m = cand
                    break
    n_m = pl.cdiv(M8, tile_m)
    M_pad = n_m * tile_m

    # Hidden-dim tiling bounds weight VMEM and the (tile_m, tile_h) f32
    # intermediate; tile_h must be a multiple of 128 (lane dim of w_fc tile).
    if tile_h is None:
        if H % 512 == 0:
            tile_h = min(H, 512)
        elif H % 256 == 0:
            tile_h = min(H, 256)
        elif H % 128 == 0:
            tile_h = min(H, 128)
        else:
            tile_h = H  # fallback: whole hidden dim in one tile
    assert H % tile_h == 0
    n_h = H // tile_h

    x2 = x.reshape(M, C)
    if M_pad != M:
        # TODO(synk): handle the ragged last block with an in-kernel masked
        # store instead of a wrapper-side pad for very large, odd-sized M.
        x2 = jnp.pad(x2, ((0, M_pad - M), (0, 0)))

    # Only the (resident-in-HBM) weights are cast in the wrapper; the
    # activation stays f32 and is cast inside the kernel.
    w_fc = w_fc.astype(compute_dtype)
    w_proj = w_proj.astype(compute_dtype)

    # Biases as 2-D (1, N) so they map onto (sublane, lane) and broadcast.
    b_fc2 = b_fc.reshape(1, H).astype(jnp.float32)
    b_proj2 = b_proj.reshape(1, C).astype(jnp.float32)

    x_bytes = jnp.dtype(x2.dtype).itemsize
    w_bytes = jnp.dtype(compute_dtype).itemsize
    o_bytes = jnp.dtype(out_dtype).itemsize

    # VMEM budget: double-buffered x/out/weights/biases + f32 accumulator
    # scratch + headroom for the (tile_m, tile_h) f32 intermediate.
    vmem_need = (2 * tile_m * C * x_bytes
                 + 2 * tile_m * C * o_bytes
                 + tile_m * C * 4
                 + 4 * C * tile_h * w_bytes
                 + 4 * (tile_h + C) * 4
                 + 2 * tile_m * tile_h * 4)
    vmem_limit = int(min(max(2 * vmem_need, 32 * 1024 * 1024),
                         64 * 1024 * 1024))  # cap at v7x physical VMEM/TC

    cost = pl.CostEstimate(
        flops=4 * M_pad * C * H + 16 * M_pad * H,
        transcendentals=2 * M_pad * H,            # exp + recip per hidden elem
        bytes_accessed=(M_pad * C * (x_bytes + o_bytes)
                        + 2 * C * H * w_bytes + (H + C) * 4),
    )

    out = pl.pallas_call(
        _mlp_kernel,
        out_shape=jax.ShapeDtypeStruct((M_pad, C), out_dtype),
        grid_spec=pltpu.PrefetchScalarGridSpec(
            num_scalar_prefetch=0,
            grid=(n_m, n_h),
            in_specs=[
                pl.BlockSpec((tile_m, C), lambda i, h: (i, 0)),   # x rows (f32)
                pl.BlockSpec((C, tile_h), lambda i, h: (0, h)),   # w_fc tile
                pl.BlockSpec((1, tile_h), lambda i, h: (0, h)),   # b_fc tile
                pl.BlockSpec((tile_h, C), lambda i, h: (h, 0)),   # w_proj tile
                pl.BlockSpec((1, C), lambda i, h: (0, 0)),        # b_proj
            ],
            out_specs=pl.BlockSpec((tile_m, C), lambda i, h: (i, 0)),
            scratch_shapes=[pltpu.VMEM((tile_m, C), jnp.float32)],  # f32 acc
        ),
        compiler_params=pltpu.CompilerParams(
            dimension_semantics=("parallel", "arbitrary"),
            vmem_limit_bytes=vmem_limit),
        cost_estimate=cost,
    )(x2, w_fc, b_fc2, w_proj, b_proj2)

    return out[:M].reshape(B, T, C)


def _reference(x, w_fc, b_fc, w_proj, b_proj):
    """Pure-JAX reference mirroring the PyTorch MLP forward (exact GELU)."""
    h = x @ w_fc + b_fc
    h = jax.nn.gelu(h, approximate=False)   # torch.nn.GELU() default (erf)
    return h @ w_proj + b_proj


if __name__ == "__main__":
    # config: n_embd=128 (lane-dense, (8,128)-aligned tiles), B=4, T=64
    # -> M = 256 rows in a single 256-row block; H = 512 -> one hidden tile.
    B, T, C = 4, 64, 128
    H = 4 * C

    key = jax.random.PRNGKey(0)
    kx, k1, k2, k3, k4 = jax.random.split(key, 5)

    # deterministic nn.Linear-style init (uniform in +-1/sqrt(fan_in))
    bound_fc = 1.0 / math.sqrt(C)
    bound_proj = 1.0 / math.sqrt(H)
    x = jax.random.normal(kx, (B, T, C), dtype=jnp.float32)
    w_fc = jax.random.uniform(k1, (C, H), jnp.float32, -bound_fc, bound_fc)
    b_fc = jax.random.uniform(k2, (H,), jnp.float32, -bound_fc, bound_fc)
    w_proj = jax.random.uniform(k3, (H, C), jnp.float32, -bound_proj, bound_proj)
    b_proj = jax.random.uniform(k4, (C,), jnp.float32, -bound_proj, bound_proj)

    ref = _reference(x, w_fc, b_fc, w_proj, b_proj)

    # Default path: bf16 MXU operands, f32 accumulation & GELU.
    out_bf16 = jax.block_until_ready(mlp_forward(x, w_fc, b_fc, w_proj, b_proj))
    assert out_bf16.shape == (B, T, C)
    assert jnp.allclose(out_bf16, ref, atol=5e-2, rtol=5e-2), "bf16 mismatch vs reference"

    # f32-operand path (tight check).
    out_f32 = jax.block_until_ready(
        mlp_forward(x, w_fc, b_fc, w_proj, b_proj, compute_dtype=jnp.float32))
    assert jnp.allclose(out_f32, ref, atol=1e-4, rtol=1e-4), "f32 mismatch vs reference"

    print("KERNEL_OK")
</pallas_src>

<mosaic_0001>
module attributes {stable_mosaic.version = 11 : i64} {
  func.func @_mlp_kernel(%arg0: i32, %arg1: i32, %arg2: memref<256x128xf32, #tpu.memory_space<vmem>>, %arg3: memref<128x512xbf16, #tpu.memory_space<vmem>>, %arg4: memref<1x512xf32, #tpu.memory_space<vmem>>, %arg5: memref<512x128xbf16, #tpu.memory_space<vmem>>, %arg6: memref<1x128xf32, #tpu.memory_space<vmem>>, %arg7: memref<256x128xf32, #tpu.memory_space<vmem>>, %arg8: memref<256x128xf32, #tpu.memory_space<vmem>>) attributes {dimension_semantics = [#tpu.dimension_semantics<parallel>, #tpu.dimension_semantics<arbitrary>], iteration_bounds = array<i64: 1, 1>, scalar_prefetch = 0 : i64, scratch_operands = 1 : i64, tpu.core_type = #tpu.core_type<tc>, window_params = [{transform_indices = @transform_0, window_bounds = array<i64: 256, 128>}, {transform_indices = @transform_1, window_bounds = array<i64: 128, 512>}, {transform_indices = @transform_2, window_bounds = array<i64: 1, 512>}, {transform_indices = @transform_3, window_bounds = array<i64: 512, 128>}, {pipeline_mode = #tpu.pipeline_mode<synchronous>, transform_indices = @transform_4, window_bounds = array<i64: 1, 128>}, {transform_indices = @transform_5, window_bounds = array<i64: 256, 128>}]} {
    %c0_i32 = arith.constant 0 : i32
    %0 = arith.cmpi eq, %arg1, %c0_i32 : i32
    %1 = arith.extui %0 : i1 to i32
    %c0_i32_0 = arith.constant 0 : i32
    %2 = arith.cmpi ne, %1, %c0_i32_0 : i32
    scf.if %2 {
      %cst_30 = arith.constant 0.000000e+00 : f32
      %62 = vector.broadcast %cst_30 : f32 to vector<256x128xf32>
      %c0_31 = arith.constant 0 : index
      %c0_32 = arith.constant 0 : index
      %63 = vector.load %arg8[%c0_31, %c0_32] : memref<256x128xf32, #tpu.memory_space<vmem>>, vector<256x128xf32>
      tpu.vector_store %arg8[%c0_31, %c0_32], %62 {strides = array<i32>} : memref<256x128xf32, #tpu.memory_space<vmem>>, vector<256x128xf32>,
    } else {
    }
    %c0 = arith.constant 0 : index
    %c0_1 = arith.constant 0 : index
    %3 = vector.load %arg2[%c0, %c0_1] : memref<256x128xf32, #tpu.memory_space<vmem>>, vector<256x128xf32>
    %4 = arith.truncf %3 : vector<256x128xf32> to vector<256x128xbf16>
    %c0_2 = arith.constant 0 : index
    %c0_3 = arith.constant 0 : index
    %5 = vector.load %arg3[%c0_2, %c0_3] : memref<128x512xbf16, #tpu.memory_space<vmem>>, vector<128x512xbf16>
    %cst = arith.constant dense<0.000000e+00> : vector<256x512xf32>
    %6 = tpu.matmul %4, %5, %cst {dimension_numbers = #tpu.dot_dimension_numbers<[1], [0], [0], [1], [0, 0, 1, 1], [], []>} : vector<256x128xbf16>, vector<128x512xbf16>, vector<256x512xf32> -> vector<256x512xf32>
    %c0_4 = arith.constant 0 : index
    %c0_5 = arith.constant 0 : index
    %7 = vector.load %arg4[%c0_4, %c0_5] : memref<1x512xf32, #tpu.memory_space<vmem>>, vector<1x512xf32>
    %8 = vector.broadcast %7 : vector<1x512xf32> to vector<256x512xf32>
    %9 = arith.addf %6, %8 : vector<256x512xf32>
    %cst_6 = arith.constant 5.000000e-01 : f32
    %10 = vector.broadcast %cst_6 : f32 to vector<256x512xf32>
    %11 = arith.mulf %10, %9 : vector<256x512xf32>
    %cst_7 = arith.constant 0.707106769 : f32
    %12 = vector.broadcast %cst_7 : f32 to vector<256x512xf32>
    %13 = arith.mulf %9, %12 : vector<256x512xf32>
    %14 = math.absf %13 : vector<256x512xf32>
    %cst_8 = arith.constant 0.327591091 : f32
    %15 = vector.broadcast %cst_8 : f32 to vector<256x512xf32>
    %16 = arith.mulf %15, %14 : vector<256x512xf32>
    %cst_9 = arith.constant 1.000000e+00 : f32
    %17 = vector.broadcast %cst_9 : f32 to vector<256x512xf32>
    %18 = arith.addf %17, %16 : vector<256x512xf32>
    %19 = tpu.reciprocal %18 {approx = true} : vector<256x512xf32> -> vector<256x512xf32>
    %20 = arith.mulf %18, %19 : vector<256x512xf32>
    %cst_10 = arith.constant 2.000000e+00 : f32
    %21 = vector.broadcast %cst_10 : f32 to vector<256x512xf32>
    %22 = arith.subf %21, %20 : vector<256x512xf32>
    %23 = arith.mulf %19, %22 : vector<256x512xf32>
    %cst_11 = arith.constant 1.06140542 : f32
    %24 = vector.broadcast %cst_11 : f32 to vector<256x512xf32>
    %25 = arith.mulf %24, %23 : vector<256x512xf32>
    %cst_12 = arith.constant -1.45315206 : f32
    %26 = vector.broadcast %cst_12 : f32 to vector<256x512xf32>
    %27 = arith.addf %25, %26 : vector<256x512xf32>
    %28 = arith.mulf %27, %23 : vector<256x512xf32>
    %cst_13 = arith.constant 1.42141378 : f32
    %29 = vector.broadcast %cst_13 : f32 to vector<256x512xf32>
    %30 = arith.addf %28, %29 : vector<256x512xf32>
    %31 = arith.mulf %30, %23 : vector<256x512xf32>
    %cst_14 = arith.constant -0.284496725 : f32
    %32 = vector.broadcast %cst_14 : f32 to vector<256x512xf32>
    %33 = arith.addf %31, %32 : vector<256x512xf32>
    %34 = arith.mulf %33, %23 : vector<256x512xf32>
    %cst_15 = arith.constant 0.254829586 : f32
    %35 = vector.broadcast %cst_15 : f32 to vector<256x512xf32>
    %36 = arith.addf %34, %35 : vector<256x512xf32>
    %37 = arith.mulf %36, %23 : vector<256x512xf32>
    %cst_16 = arith.constant 0.000000e+00 : f32
    %38 = vector.broadcast %cst_16 : f32 to vector<256x512xf32>
    %39 = arith.subf %38, %14 : vector<256x512xf32>
    %40 = arith.mulf %39, %14 : vector<256x512xf32>
    %41 = math.exp %40 : vector<256x512xf32>
    %42 = arith.mulf %37, %41 : vector<256x512xf32>
    %cst_17 = arith.constant 1.000000e+00 : f32
    %43 = vector.broadcast %cst_17 : f32 to vector<256x512xf32>
    %44 = arith.subf %43, %42 : vector<256x512xf32>
    %cst_18 = arith.constant 0.000000e+00 : f32
    %45 = vector.broadcast %cst_18 : f32 to vector<256x512xf32>
    %46 = arith.cmpf olt, %13, %45 : vector<256x512xf32>
    %cst_19 = arith.constant 0.000000e+00 : f32
    %47 = vector.broadcast %cst_19 : f32 to vector<256x512xf32>
    %48 = arith.subf %47, %44 : vector<256x512xf32>
    %49 = arith.select %46, %48, %44 : vector<256x512xi1>, vector<256x512xf32>
    %cst_20 = arith.constant 1.000000e+00 : f32
    %50 = vector.broadcast %cst_20 : f32 to vector<256x512xf32>
    %51 = arith.addf %50, %49 : vector<256x512xf32>
    %52 = arith.mulf %11, %51 : vector<256x512xf32>
    %53 = arith.truncf %52 : vector<256x512xf32> to vector<256x512xbf16>
    %c0_21 = arith.constant 0 : index
    %c0_22 = arith.constant 0 : index
    %54 = vector.load %arg8[%c0_21, %c0_22] : memref<256x128xf32, #tpu.memory_space<vmem>>, vector<256x128xf32>
    %c0_23 = arith.constant 0 : index
    %c0_24 = arith.constant 0 : index
    %55 = vector.load %arg5[%c0_23, %c0_24] : memref<512x128xbf16, #tpu.memory_space<vmem>>, vector<512x128xbf16>
    %cst_25 = arith.constant dense<0.000000e+00> : vector<256x128xf32>
    %56 = tpu.matmul %53, %55, %cst_25 {dimension_numbers = #tpu.dot_dimension_numbers<[1], [0], [0], [1], [0, 0, 1, 1], [], []>} : vector<256x512xbf16>, vector<512x128xbf16>, vector<256x128xf32> -> vector<256x128xf32>
    %57 = arith.addf %54, %56 : vector<256x128xf32>
    %c0_26 = arith.constant 0 : index
    %c0_27 = arith.constant 0 : index
    %58 = vector.load %arg8[%c0_26, %c0_27] : memref<256x128xf32, #tpu.memory_space<vmem>>, vector<256x128xf32>
    tpu.vector_store %arg8[%c0_26, %c0_27], %57 {strides = array<i32>} : memref<256x128xf32, #tpu.memory_space<vmem>>, vector<256x128xf32>,
    %c0_i32_28 = arith.constant 0 : i32
    %59 = arith.cmpi eq, %arg1, %c0_i32_28 : i32
    %60 = arith.extui %59 : i1 to i32
    %c0_i32_29 = arith.constant 0 : i32
    %61 = arith.cmpi ne, %60, %c0_i32_29 : i32
    scf.if %61 {
      %c0_30 = arith.constant 0 : index
      %c0_31 = arith.constant 0 : index
      %62 = vector.load %arg8[%c0_30, %c0_31] : memref<256x128xf32, #tpu.memory_space<vmem>>, vector<256x128xf32>
      %c0_32 = arith.constant 0 : index
      %c0_33 = arith.constant 0 : index
      %63 = vector.load %arg6[%c0_32, %c0_33] : memref<1x128xf32, #tpu.memory_space<vmem>>, vector<1x128xf32>
      %64 = vector.broadcast %63 : vector<1x128xf32> to vector<256x128xf32>
      %65 = arith.addf %62, %64 : vector<256x128xf32>
      %c0_34 = arith.constant 0 : index
      %c0_35 = arith.constant 0 : index
      %66 = vector.load %arg7[%c0_34, %c0_35] : memref<256x128xf32, #tpu.memory_space<vmem>>, vector<256x128xf32>
      tpu.vector_store %arg7[%c0_34, %c0_35], %65 {strides = array<i32>} : memref<256x128xf32, #tpu.memory_space<vmem>>, vector<256x128xf32>,
    } else {
    }
    return
  }
  func.func @transform_0(%arg0: i32, %arg1: i32) -> (i32, i32) {
    %c0_i32 = arith.constant 0 : i32
    %c0_i32_0 = arith.constant 0 : i32
    return %arg0, %c0_i32 : i32, i32
  }
  func.func @transform_1(%arg0: i32, %arg1: i32) -> (i32, i32) {
    %c0_i32 = arith.constant 0 : i32
    %c0_i32_0 = arith.constant 0 : i32
    return %c0_i32, %arg1 : i32, i32
  }
  func.func @transform_2(%arg0: i32, %arg1: i32) -> (i32, i32) {
    %c0_i32 = arith.constant 0 : i32
    %c0_i32_0 = arith.constant 0 : i32
    return %c0_i32, %arg1 : i32, i32
  }
  func.func @transform_3(%arg0: i32, %arg1: i32) -> (i32, i32) {
    %c0_i32 = arith.constant 0 : i32
    %c0_i32_0 = arith.constant 0 : i32
    return %arg1, %c0_i32 : i32, i32
  }
  func.func @transform_4(%arg0: i32, %arg1: i32) -> (i32, i32) {
    %c0_i32 = arith.constant 0 : i32
    %c0_i32_0 = arith.constant 0 : i32
    %c0_i32_1 = arith.constant 0 : i32
    return %c0_i32, %c0_i32_0 : i32, i32
  }
  func.func @transform_5(%arg0: i32, %arg1: i32) -> (i32, i32) {
    %c0_i32 = arith.constant 0 : i32
    %c0_i32_0 = arith.constant 0 : i32
    return %arg0, %c0_i32 : i32, i32
  }
}

</mosaic_0001>

<llo_original>
// kernel: tpu_custom_call.1
$region0: #{tpu_custom_call.1}
  #allocation0 [shape = 'u32[]', space=smem, size = 0x4, offset = 0x4, fixed_abs, tag = 'smem constant byte address 0x4 - core index']
  #allocation1 [shape = 'u32[72,128]{1,0:T(1,128)}', space=vmem, size = 0x9000, scoped, tag = 'internal scratch']
  #allocation2 [shape = 'f32[256,128]{1,0:T(8,128)}', space=vmem, size = 0x20000, scoped, tag = 'scratch operand']
  %s0 = inlined_call_operand.hbm [shape: f32[256,128], index: 0, kind: input, shape index: {}]
  %s1 = inlined_call_operand.hbm [shape: bf16[128,512], index: 1, kind: input, shape index: {}]
  %s2 = inlined_call_operand.hbm [shape: f32[1,512], index: 2, kind: input, shape index: {}]
  %s3 = inlined_call_operand.hbm [shape: bf16[512,128], index: 3, kind: input, shape index: {}]
  %s4 = inlined_call_operand.vmem [shape: f32[1,128], index: 4, kind: input, shape index: {}]
  %s5 = inlined_call_operand.hbm [shape: f32[256,128], index: 5, kind: output, shape index: {}]
  %s6 = sld [smem:[#allocation0]]
  $region54: #{tpu_custom_call.1} parent=0
    _
  %s8 = ssub.s32 1, %s6
  %s9 = scalar_select 0, %s8, %s6
  $region1: #{tpu_custom_call.1} parent=0
    #allocation3 [shape = 'u8[131072]{0}', space=vmem, size = 0x20000, scoped, tag = 'input window, operand 0, single buffered']
    #allocation4 [shape = 's32[1]{0}', space=sflag, size = 0x4, scoped, tag = 'scoped memory for tpu_custom_call.1']
    #allocation5 [shape = 's32[1]{0}', space=sflag, size = 0x4, scoped, tag = 'scoped memory for tpu_custom_call.1']
    #allocation6 [shape = 'u8[131072]{0}', space=vmem, size = 0x20000, scoped, tag = 'input window, operand 1, single buffered']
    #allocation7 [shape = 's32[1]{0}', space=sflag, size = 0x4, scoped, tag = 'scoped memory for tpu_custom_call.1']
    #allocation8 [shape = 'u8[2048]{0}', space=vmem, size = 0x800, scoped, tag = 'input window, operand 2, single buffered']
    #allocation9 [shape = 'u8[131072]{0}', space=vmem, size = 0x20000, scoped, tag = 'input window, operand 3, single buffered']
    #allocation10 [shape = 's32[1]{0}', space=sflag, size = 0x4, scoped, tag = 'scoped memory for tpu_custom_call.1']
    #allocation11 [shape = 'u8[131072]{0}', space=vmem, size = 0x20000, scoped, tag = 'output window, operand 0, single buffered']
    %10 = vsyncpa [#allocation4], 0
    %11 = vsyncpa [#allocation7], 0
    %12 = vsyncpa [#allocation10], 0
    %13 = vsyncpa [#allocation5], 0
    // Predicated region
    $region2: #{tpu_custom_call.1} parent=1 // pred_check
      _
    $region3: #{tpu_custom_call.1} parent=1 // pred_check_branch
      %15 = sbr.rel (0) target = $region5
    $region4: #{tpu_custom_call.1} parent=1 // pred_region
      %17 = vsyncadd [#allocation4], 0
      %s18 = sshll.u32 %s0, 4
      %s19 = int_to_ptr.hbm [resolvable:$true] %s18
      %s20 = sshll.u32 [#allocation3], 4
      %s21 = int_to_ptr.vmem [resolvable:$true] %s20
      %26 = dma.hbm_to_vmem [thread:$0]  %s19, 4096, %s21, [#allocation4], 128, 128, 8
    $region5: #{tpu_custom_call.1} parent=1 // pred_fallthru
      _
    // Predicated region
    $region6: #{tpu_custom_call.1} parent=1 // pred_check
      _
    $region7: #{tpu_custom_call.1} parent=1 // pred_check_branch
      %28 = sbr.rel (0) target = $region9
    $region8: #{tpu_custom_call.1} parent=1 // pred_region
      %30 = vsyncadd [#allocation7], 0
      %s31 = sshll.u32 %s1, 4
      %s32 = int_to_ptr.hbm [resolvable:$true] %s31
      %s33 = sshll.u32 [#allocation6], 4
      %s34 = int_to_ptr.vmem [resolvable:$true] %s33
      %39 = dma.hbm_to_vmem [thread:$0]  %s32, 4096, %s34, [#allocation7], 256, 256, 16
    $region9: #{tpu_custom_call.1} parent=1 // pred_fallthru
      _
    // Predicated region
    $region10: #{tpu_custom_call.1} parent=1 // pred_check
      _
    $region11: #{tpu_custom_call.1} parent=1 // pred_check_branch
      %41 = sbr.rel (0) target = $region13
    $region12: #{tpu_custom_call.1} parent=1 // pred_region
      %43 = vsyncadd [#allocation7], 0
      %s45 = sshll.u32 %s2, 4
      %s46 = int_to_ptr.hbm [resolvable:$true] %s45
      %s47 = sshll.u32 [#allocation8], 4
      %s48 = int_to_ptr.vmem [resolvable:$true] %s47
      %50 = dma.hbm_to_vmem [thread:$0]  %s46, 64, %s48, [#allocation7]
    $region13: #{tpu_custom_call.1} parent=1 // pred_fallthru
      _
    // Predicated region
    $region14: #{tpu_custom_call.1} parent=1 // pred_check
      _
    $region15: #{tpu_custom_call.1} parent=1 // pred_check_branch
      %52 = sbr.rel (0) target = $region17
    $region16: #{tpu_custom_call.1} parent=1 // pred_region
      %54 = vsyncadd [#allocation10], 0
      %s55 = sshll.u32 %s3, 4
      %s56 = int_to_ptr.hbm [resolvable:$true] %s55
      %s57 = sshll.u32 [#allocation9], 4
      %s58 = int_to_ptr.vmem [resolvable:$true] %s57
      %63 = dma.hbm_to_vmem [thread:$0]  %s56, 4096, %s58, [#allocation10], 64, 64, 4
    $region17: #{tpu_custom_call.1} parent=1 // pred_fallthru
      _
    // Predicated region
    $region18: #{tpu_custom_call.1} parent=1 // pred_check
      _
    $region19: #{tpu_custom_call.1} parent=1 // pred_check_branch
      %65 = sbr.rel (0) target = $region21
    $region20: #{tpu_custom_call.1} parent=1 // pred_region
      _
    $region21: #{tpu_custom_call.1} parent=1 // pred_fallthru
      _
    // Predicated region
    $region22: #{tpu_custom_call.1} parent=1 // pred_check
      _
    $region23: #{tpu_custom_call.1} parent=1 // pred_check_branch
      %67 = sbr.rel (0) target = $region25
    $region24: #{tpu_custom_call.1} parent=1 // pred_region
      %69 = dma.done [#allocation4], 4096
    $region25: #{tpu_custom_call.1} parent=1 // pred_fallthru
      _
    // Predicated region
    $region26: #{tpu_custom_call.1} parent=1 // pred_check
      _
    $region27: #{tpu_custom_call.1} parent=1 // pred_check_branch
      %71 = sbr.rel (0) target = $region29
    $region28: #{tpu_custom_call.1} parent=1 // pred_region
      %73 = dma.done [#allocation7], 4096
    $region29: #{tpu_custom_call.1} parent=1 // pred_fallthru
      _
    // Predicated region
    $region30: #{tpu_custom_call.1} parent=1 // pred_check
      _
    $region31: #{tpu_custom_call.1} parent=1 // pred_check_branch
      %75 = sbr.rel (0) target = $region33
    $region32: #{tpu_custom_call.1} parent=1 // pred_region
      %77 = dma.done [#allocation7], 64
    $region33: #{tpu_custom_call.1} parent=1 // pred_fallthru
      _
    // Predicated region
    $region34: #{tpu_custom_call.1} parent=1 // pred_check
      _
    $region35: #{tpu_custom_call.1} parent=1 // pred_check_branch
      %79 = sbr.rel (0) target = $region37
    $region36: #{tpu_custom_call.1} parent=1 // pred_region
      %81 = dma.done [#allocation10], 4096
    $region37: #{tpu_custom_call.1} parent=1 // pred_fallthru
      _
    %p82 = scmp.eq.s32.totalorder 0, 0
    // Predicated region
    $region38: #{tpu_custom_call.1} parent=1 // pred_check
      %p83 = pneg %p82
    $region39: #{tpu_custom_call.1} parent=1 // pred_check_branch
      %85 = sbr.rel (%p83) target = $region41
    $region40: #{tpu_custom_call.1} parent=1 // pred_region
      %86 = vst [vmem:[#allocation2] sm:$0xff] 0.0
      %87 = vst [vmem:[#allocation2 + $0x8] sm:$0xff] 0.0
      %88 = vst [vmem:[#allocation2 + $0x10] sm:$0xff] 0.0
      %89 = vst [vmem:[#allocation2 + $0x18] sm:$0xff] 0.0
      %90 = vst [vmem:[#allocation2 + $0x20] sm:$0xff] 0.0
      %91 = vst [vmem:[#allocation2 + $0x28] sm:$0xff] 0.0
      %92 = vst [vmem:[#allocation2 + $0x30] sm:$0xff] 0.0
      %93 = vst [vmem:[#allocation2 + $0x38] sm:$0xff] 0.0
      %94 = vst [vmem:[#allocation2 + $0x40] sm:$0xff] 0.0
      %95 = vst [vmem:[#allocation2 + $0x48] sm:$0xff] 0.0
      %96 = vst [vmem:[#allocation2 + $0x50] sm:$0xff] 0.0
      %97 = vst [vmem:[#allocation2 + $0x58] sm:$0xff] 0.0
      %98 = vst [vmem:[#allocation2 + $0x60] sm:$0xff] 0.0
      %99 = vst [vmem:[#allocation2 + $0x68] sm:$0xff] 0.0
      %100 = vst [vmem:[#allocation2 + $0x70] sm:$0xff] 0.0
      %101 = vst [vmem:[#allocation2 + $0x78] sm:$0xff] 0.0
      %102 = vst [vmem:[#allocation2 + $0x80] sm:$0xff] 0.0
      %103 = vst [vmem:[#allocation2 + $0x88] sm:$0xff] 0.0
      %104 = vst [vmem:[#allocation2 + $0x90] sm:$0xff] 0.0
      %105 = vst [vmem:[#allocation2 + $0x98] sm:$0xff] 0.0
      %106 = vst [vmem:[#allocation2 + $0xa0] sm:$0xff] 0.0
      %107 = vst [vmem:[#allocation2 + $0xa8] sm:$0xff] 0.0
      %108 = vst [vmem:[#allocation2 + $0xb0] sm:$0xff] 0.0
      %109 = vst [vmem:[#allocation2 + $0xb8] sm:$0xff] 0.0
      %110 = vst [vmem:[#allocation2 + $0xc0] sm:$0xff] 0.0
      %111 = vst [vmem:[#allocation2 + $0xc8] sm:$0xff] 0.0
      %112 = vst [vmem:[#allocation2 + $0xd0] sm:$0xff] 0.0
      %113 = vst [vmem:[#allocation2 + $0xd8] sm:$0xff] 0.0
      %114 = vst [vmem:[#allocation2 + $0xe0] sm:$0xff] 0.0
      %115 = vst [vmem:[#allocation2 + $0xe8] sm:$0xff] 0.0
      %116 = vst [vmem:[#allocation2 + $0xf0] sm:$0xff] 0.0
      %117 = vst [vmem:[#allocation2 + $0xf8] sm:$0xff] 0.0
    $region41: #{tpu_custom_call.1} parent=1 // pred_fallthru
      _
    %v118 = vld [vmem:[#allocation3] sm:$0xff]
    %v119 = vld [vmem:[#allocation3 + $0x8] sm:$0xff]
    %v120 = vld [vmem:[#allocation3 + $0x10] sm:$0xff]
    %v121 = vld [vmem:[#allocation3 + $0x18] sm:$0xff]
    %v122 = vld [vmem:[#allocation3 + $0x20] sm:$0xff]
    %v123 = vld [vmem:[#allocation3 + $0x28] sm:$0xff]
    %v124 = vld [vmem:[#allocation3 + $0x30] sm:$0xff]
    %v125 = vld [vmem:[#allocation3 + $0x38] sm:$0xff]
    %v126 = vld [vmem:[#allocation3 + $0x40] sm:$0xff]
    %v127 = vld [vmem:[#allocation3 + $0x48] sm:$0xff]
    %v128 = vld [vmem:[#allocation3 + $0x50] sm:$0xff]
    %v129 = vld [vmem:[#allocation3 + $0x58] sm:$0xff]
    %v130 = vld [vmem:[#allocation3 + $0x60] sm:$0xff]
    %v131 = vld [vmem:[#allocation3 + $0x68] sm:$0xff]
    %v132 = vld [vmem:[#allocation3 + $0x70] sm:$0xff]
    %v133 = vld [vmem:[#allocation3 + $0x78] sm:$0xff]
    %v134 = vld [vmem:[#allocation3 + $0x80] sm:$0xff]
    %v135 = vld [vmem:[#allocation3 + $0x88] sm:$0xff]
    %v136 = vld [vmem:[#allocation3 + $0x90] sm:$0xff]
    %v137 = vld [vmem:[#allocation3 + $0x98] sm:$0xff]
    %v138 = vld [vmem:[#allocation3 + $0xa0] sm:$0xff]
    %v139 = vld [vmem:[#allocation3 + $0xa8] sm:$0xff]
    %v140 = vld [vmem:[#allocation3 + $0xb0] sm:$0xff]
    %v141 = vld [vmem:[#allocation3 + $0xb8] sm:$0xff]
    %v142 = vld [vmem:[#allocation3 + $0xc0] sm:$0xff]
    %v143 = vld [vmem:[#allocation3 + $0xc8] sm:$0xff]
    %v144 = vld [vmem:[#allocation3 + $0xd0] sm:$0xff]
    %v145 = vld [vmem:[#allocation3 + $0xd8] sm:$0xff]
    %v146 = vld [vmem:[#allocation3 + $0xe0] sm:$0xff]
    %v147 = vld [vmem:[#allocation3 + $0xe8] sm:$0xff]
    %v148 = vld [vmem:[#allocation3 + $0xf0] sm:$0xff]
    %v149 = vld [vmem:[#allocation3 + $0xf8] sm:$0xff]
    %v150 = vpack.c.bf16 %v119, %v118
    %v151 = vpack.c.bf16 %v121, %v120
    %v152 = vpack.c.bf16 %v123, %v122
    %v153 = vpack.c.bf16 %v125, %v124
    %v154 = vpack.c.bf16 %v127, %v126
    %v155 = vpack.c.bf16 %v129, %v128
    %v156 = vpack.c.bf16 %v131, %v130
    %v157 = vpack.c.bf16 %v133, %v132
    %v158 = vpack.c.bf16 %v135, %v134
    %v159 = vpack.c.bf16 %v137, %v136
    %v160 = vpack.c.bf16 %v139, %v138
    %v161 = vpack.c.bf16 %v141, %v140
    %v162 = vpack.c.bf16 %v143, %v142
    %v163 = vpack.c.bf16 %v145, %v144
    %v164 = vpack.c.bf16 %v147, %v146
    %v165 = vpack.c.bf16 %v149, %v148
    %v166 = vld [vmem:[#allocation6] sm:$0xff]
    %v167 = vld [vmem:[#allocation6 + $0x8] sm:$0xff]
    %v168 = vld [vmem:[#allocation6 + $0x10] sm:$0xff]
    %v169 = vld [vmem:[#allocation6 + $0x18] sm:$0xff]
    %v170 = vld [vmem:[#allocation6 + $0x20] sm:$0xff]
    %v171 = vld [vmem:[#allocation6 + $0x28] sm:$0xff]
    %v172 = vld [vmem:[#allocation6 + $0x30] sm:$0xff]
    %v173 = vld [vmem:[#allocation6 + $0x38] sm:$0xff]
    %v174 = vld [vmem:[#allocation6 + $0x40] sm:$0xff]
    %v175 = vld [vmem:[#allocation6 + $0x48] sm:$0xff]
    %v176 = vld [vmem:[#allocation6 + $0x50] sm:$0xff]
    %v177 = vld [vmem:[#allocation6 + $0x58] sm:$0xff]
    %v178 = vld [vmem:[#allocation6 + $0x60] sm:$0xff]
    %v179 = vld [vmem:[#allocation6 + $0x68] sm:$0xff]
    %v180 = vld [vmem:[#allocation6 + $0x70] sm:$0xff]
    %v181 = vld [vmem:[#allocation6 + $0x78] sm:$0xff]
    %v182 = vld [vmem:[#allocation6 + $0x80] sm:$0xff]
    %v183 = vld [vmem:[#allocation6 + $0x88] sm:$0xff]
    %v184 = vld [vmem:[#allocation6 + $0x90] sm:$0xff]
    %v185 = vld [vmem:[#allocation6 + $0x98] sm:$0xff]
    %v186 = vld [vmem:[#allocation6 + $0xa0] sm:$0xff]
    %v187 = vld [vmem:[#allocation6 + $0xa8] sm:$0xff]
    %v188 = vld [vmem:[#allocation6 + $0xb0] sm:$0xff]
    %v189 = vld [vmem:[#allocation6 + $0xb8] sm:$0xff]
    %v190 = vld [vmem:[#allocation6 + $0xc0] sm:$0xff]
    %v191 = vld [vmem:[#allocation6 + $0xc8] sm:$0xff]
    %v192 = vld [vmem:[#allocation6 + $0xd0] sm:$0xff]
    %v193 = vld [vmem:[#allocation6 + $0xd8] sm:$0xff]
    %v194 = vld [vmem:[#allocation6 + $0xe0] sm:$0xff]
    %v195 = vld [vmem:[#allocation6 + $0xe8] sm:$0xff]
    %v196 = vld [vmem:[#allocation6 + $0xf0] sm:$0xff]
    %v197 = vld [vmem:[#allocation6 + $0xf8] sm:$0xff]
    %v198 = vld [vmem:[#allocation8] sm:$0xf]
    %v200 = vperm.slane %v198, 0
    %v201 = vperm.slane %v198, 1
    %v202 = vperm.slane %v198, 2
    %v203 = vperm.slane %v198, 3
    %v240 = vunpack.c.l.b16 %v166
    %v241 = vunpack.c.h.b16 %v166
    %v242 = vunpack.c.l.b16 %v167
    %v243 = vunpack.c.h.b16 %v167
    %v244 = vunpack.c.l.b16 %v168
    %v245 = vunpack.c.h.b16 %v168
    %v246 = vunpack.c.l.b16 %v169
    %v247 = vunpack.c.h.b16 %v169
    %v248 = vunpack.c.l.b16 %v170
    %v249 = vunpack.c.h.b16 %v170
    %v250 = vunpack.c.l.b16 %v171
    %v251 = vunpack.c.h.b16 %v171
    %v252 = vunpack.c.l.b16 %v172
    %v253 = vunpack.c.h.b16 %v172
    %v254 = vunpack.c.l.b16 %v173
    %v255 = vunpack.c.h.b16 %v173
    %v256 = vunpack.c.l.b16 %v174
    %v257 = vunpack.c.h.b16 %v174
    %v258 = vunpack.c.l.b16 %v175
    %v259 = vunpack.c.h.b16 %v175
    %v260 = vunpack.c.l.b16 %v176
    %v261 = vunpack.c.h.b16 %v176
    %v262 = vunpack.c.l.b16 %v177
    %v263 = vunpack.c.h.b16 %v177
    %v264 = vunpack.c.l.b16 %v178
    %v265 = vunpack.c.h.b16 %v178
    %v266 = vunpack.c.l.b16 %v179
    %v267 = vunpack.c.h.b16 %v179
    %v268 = vunpack.c.l.b16 %v180
    %v269 = vunpack.c.h.b16 %v180
    %v270 = vunpack.c.l.b16 %v181
    %v271 = vunpack.c.h.b16 %v181
    %v272 = vunpack.c.l.b16 %v182
    %v273 = vunpack.c.h.b16 %v182
    %v274 = vunpack.c.l.b16 %v183
    %v275 = vunpack.c.h.b16 %v183
    %v276 = vunpack.c.l.b16 %v184
    %v277 = vunpack.c.h.b16 %v184
    %v278 = vunpack.c.l.b16 %v185
    %v279 = vunpack.c.h.b16 %v185
    %v280 = vunpack.c.l.b16 %v186
    %v281 = vunpack.c.h.b16 %v186
    %v282 = vunpack.c.l.b16 %v187
    %v283 = vunpack.c.h.b16 %v187
    %v284 = vunpack.c.l.b16 %v188
    %v285 = vunpack.c.h.b16 %v188
    %v286 = vunpack.c.l.b16 %v189
    %v287 = vunpack.c.h.b16 %v189
    %v288 = vunpack.c.l.b16 %v190
    %v289 = vunpack.c.h.b16 %v190
    %v290 = vunpack.c.l.b16 %v191
    %v291 = vunpack.c.h.b16 %v191
    %v292 = vunpack.c.l.b16 %v192
    %v293 = vunpack.c.h.b16 %v192
    %v294 = vunpack.c.l.b16 %v193
    %v295 = vunpack.c.h.b16 %v193
    %v296 = vunpack.c.l.b16 %v194
    %v297 = vunpack.c.h.b16 %v194
    %v298 = vunpack.c.l.b16 %v195
    %v299 = vunpack.c.h.b16 %v195
    %v300 = vunpack.c.l.b16 %v196
    %v301 = vunpack.c.h.b16 %v196
    %v302 = vunpack.c.l.b16 %v197
    %v303 = vunpack.c.h.b16 %v197
    %v304 = vpack.c.b16 %v244, %v240
    %v305 = vpack.c.b16 %v245, %v241
    %v306 = vpack.c.b16 %v246, %v242
    %v307 = vpack.c.b16 %v247, %v243
    %v308 = vpack.c.b16 %v252, %v248
    %v309 = vpack.c.b16 %v253, %v249
    %v310 = vpack.c.b16 %v254, %v250
    %v311 = vpack.c.b16 %v255, %v251
    %v312 = vpack.c.b16 %v260, %v256
    %v313 = vpack.c.b16 %v261, %v257
    %v314 = vpack.c.b16 %v262, %v258
    %v315 = vpack.c.b16 %v263, %v259
    %v316 = vpack.c.b16 %v268, %v264
    %v317 = vpack.c.b16 %v269, %v265
    %v318 = vpack.c.b16 %v270, %v266
    %v319 = vpack.c.b16 %v271, %v267
    %v320 = vpack.c.b16 %v276, %v272
    %v321 = vpack.c.b16 %v277, %v273
    %v322 = vpack.c.b16 %v278, %v274
    %v323 = vpack.c.b16 %v279, %v275
    %v324 = vpack.c.b16 %v284, %v280
    %v325 = vpack.c.b16 %v285, %v281
    %v326 = vpack.c.b16 %v286, %v282
    %v327 = vpack.c.b16 %v287, %v283
    %v328 = vpack.c.b16 %v292, %v288
    %v329 = vpack.c.b16 %v293, %v289
    %v330 = vpack.c.b16 %v294, %v290
    %v331 = vpack.c.b16 %v295, %v291
    %v332 = vpack.c.b16 %v300, %v296
    %v333 = vpack.c.b16 %v301, %v297
    %v334 = vpack.c.b16 %v302, %v298
    %v335 = vpack.c.b16 %v303, %v299
    %368 = vmatpush.bf16.msra.mxu0 %v332
    %369 = vmatpush.bf16.msra.mxu0 %v328
    %370 = vmatpush.bf16.msra.mxu0 %v324
    %371 = vmatpush.bf16.msra.mxu0 %v320
    %372 = vmatpush.bf16.msra.mxu0 %v316
    %373 = vmatpush.bf16.msra.mxu0 %v312
    %374 = vmatpush.bf16.msra.mxu0 %v308
    %375 = vmatpush.bf16.msra.mxu0 %v304
    %376 = vmatmul.bf16.gmra.mxu0 %v150
    %v377 = vpop.f32.mrf.mxu0
    %v378 = vadd.f32 %v200, %v377
    %v379 = vpop.f32.mrf.mxu0
    %v380 = vadd.f32 %v200, %v379
    %381 = vmatmul.bf16.gmra.mxu0 %v151
    %v382 = vpop.f32.mrf.mxu0
    %v383 = vadd.f32 %v200, %v382
    %v384 = vpop.f32.mrf.mxu0
    %v385 = vadd.f32 %v200, %v384
    %386 = vmatmul.bf16.gmra.mxu0 %v152
    %v387 = vpop.f32.mrf.mxu0
    %v388 = vadd.f32 %v200, %v387
    %v389 = vpop.f32.mrf.mxu0
    %v390 = vadd.f32 %v200, %v389
    %391 = vmatmul.bf16.gmra.mxu0 %v153
    %v392 = vpop.f32.mrf.mxu0
    %v393 = vadd.f32 %v200, %v392
    %v394 = vpop.f32.mrf.mxu0
    %v395 = vadd.f32 %v200, %v394
    %396 = vmatmul.bf16.gmra.mxu0 %v154
    %v397 = vpop.f32.mrf.mxu0
    %v398 = vadd.f32 %v200, %v397
    %v399 = vpop.f32.mrf.mxu0
    %v400 = vadd.f32 %v200, %v399
    %401 = vmatmul.bf16.gmra.mxu0 %v155
    %v402 = vpop.f32.mrf.mxu0
    %v403 = vadd.f32 %v200, %v402
    %v404 = vpop.f32.mrf.mxu0
    %v405 = vadd.f32 %v200, %v404
    %406 = vmatmul.bf16.gmra.mxu0 %v156
    %v407 = vpop.f32.mrf.mxu0
    %v408 = vadd.f32 %v200, %v407
    %v409 = vpop.f32.mrf.mxu0
    %v410 = vadd.f32 %v200, %v409
    %411 = vmatmul.bf16.gmra.mxu0 %v157
    %v412 = vpop.f32.mrf.mxu0
    %v413 = vadd.f32 %v200, %v412
    %v414 = vpop.f32.mrf.mxu0
    %v415 = vadd.f32 %v200, %v414
    %416 = vmatmul.bf16.gmra.mxu0 %v158
    %v417 = vpop.f32.mrf.mxu0
    %v418 = vadd.f32 %v200, %v417
    %v419 = vpop.f32.mrf.mxu0
    %v420 = vadd.f32 %v200, %v419
    %421 = vmatmul.bf16.gmra.mxu0 %v159
    %v422 = vpop.f32.mrf.mxu0
    %v423 = vadd.f32 %v200, %v422
    %v424 = vpop.f32.mrf.mxu0
    %v425 = vadd.f32 %v200, %v424
    %426 = vmatmul.bf16.gmra.mxu0 %v160
    %v427 = vpop.f32.mrf.mxu0
    %v428 = vadd.f32 %v200, %v427
    %v429 = vpop.f32.mrf.mxu0
    %v430 = vadd.f32 %v200, %v429
    %431 = vmatmul.bf16.gmra.mxu0 %v161
    %v432 = vpop.f32.mrf.mxu0
    %v433 = vadd.f32 %v200, %v432
    %v434 = vpop.f32.mrf.mxu0
    %v435 = vadd.f32 %v200, %v434
    %436 = vmatmul.bf16.gmra.mxu0 %v162
    %v437 = vpop.f32.mrf.mxu0
    %v438 = vadd.f32 %v200, %v437
    %v439 = vpop.f32.mrf.mxu0
    %v440 = vadd.f32 %v200, %v439
    %441 = vmatmul.bf16.gmra.mxu0 %v163
    %v442 = vpop.f32.mrf.mxu0
    %v443 = vadd.f32 %v200, %v442
    %v444 = vpop.f32.mrf.mxu0
    %v445 = vadd.f32 %v200, %v444
    %446 = vmatmul.bf16.gmra.mxu0 %v164
    %v447 = vpop.f32.mrf.mxu0
    %v448 = vadd.f32 %v200, %v447
    %v449 = vpop.f32.mrf.mxu0
    %v450 = vadd.f32 %v200, %v449
    %451 = vmatmul.bf16.gmra.mxu0 %v165
    %v452 = vpop.f32.mrf.mxu0
    %v453 = vadd.f32 %v200, %v452
    %v454 = vpop.f32.mrf.mxu0
    %v455 = vadd.f32 %v200, %v454
    %456 = vdwg.mxu0
    %457 = vmatpush.bf16.msra.mxu0 %v333
    %458 = vmatpush.bf16.msra.mxu0 %v329
    %459 = vmatpush.bf16.msra.mxu0 %v325
    %460 = vmatpush.bf16.msra.mxu0 %v321
    %461 = vmatpush.bf16.msra.mxu0 %v317
    %462 = vmatpush.bf16.msra.mxu0 %v313
    %463 = vmatpush.bf16.msra.mxu0 %v309
    %464 = vmatpush.bf16.msra.mxu0 %v305
    %465 = vmatmul.bf16.gmra.mxu0 %v150
    %v466 = vpop.f32.mrf.mxu0
    %v467 = vadd.f32 %v201, %v466
    %v468 = vpop.f32.mrf.mxu0
    %v469 = vadd.f32 %v201, %v468
    %470 = vmatmul.bf16.gmra.mxu0 %v151
    %v471 = vpop.f32.mrf.mxu0
    %v472 = vadd.f32 %v201, %v471
    %v473 = vpop.f32.mrf.mxu0
    %v474 = vadd.f32 %v201, %v473
    %475 = vmatmul.bf16.gmra.mxu0 %v152
    %v476 = vpop.f32.mrf.mxu0
    %v477 = vadd.f32 %v201, %v476
    %v478 = vpop.f32.mrf.mxu0
    %v479 = vadd.f32 %v201, %v478
    %480 = vmatmul.bf16.gmra.mxu0 %v153
    %v481 = vpop.f32.mrf.mxu0
    %v482 = vadd.f32 %v201, %v481
    %v483 = vpop.f32.mrf.mxu0
    %v484 = vadd.f32 %v201, %v483
    %485 = vmatmul.bf16.gmra.mxu0 %v154
    %v486 = vpop.f32.mrf.mxu0
    %v487 = vadd.f32 %v201, %v486
    %v488 = vpop.f32.mrf.mxu0
    %v489 = vadd.f32 %v201, %v488
    %490 = vmatmul.bf16.gmra.mxu0 %v155
    %v491 = vpop.f32.mrf.mxu0
    %v492 = vadd.f32 %v201, %v491
    %v493 = vpop.f32.mrf.mxu0
    %v494 = vadd.f32 %v201, %v493
    %495 = vmatmul.bf16.gmra.mxu0 %v156
    %v496 = vpop.f32.mrf.mxu0
    %v497 = vadd.f32 %v201, %v496
    %v498 = vpop.f32.mrf.mxu0
    %v499 = vadd.f32 %v201, %v498
    %500 = vmatmul.bf16.gmra.mxu0 %v157
    %v501 = vpop.f32.mrf.mxu0
    %v502 = vadd.f32 %v201, %v501
    %v503 = vpop.f32.mrf.mxu0
    %v504 = vadd.f32 %v201, %v503
    %505 = vmatmul.bf16.gmra.mxu0 %v158
    %v506 = vpop.f32.mrf.mxu0
    %v507 = vadd.f32 %v201, %v506
    %v508 = vpop.f32.mrf.mxu0
    %v509 = vadd.f32 %v201, %v508
    %510 = vmatmul.bf16.gmra.mxu0 %v159
    %v511 = vpop.f32.mrf.mxu0
    %v512 = vadd.f32 %v201, %v511
    %v513 = vpop.f32.mrf.mxu0
    %v514 = vadd.f32 %v201, %v513
    %515 = vmatmul.bf16.gmra.mxu0 %v160
    %v516 = vpop.f32.mrf.mxu0
    %v517 = vadd.f32 %v201, %v516
    %v518 = vpop.f32.mrf.mxu0
    %v519 = vadd.f32 %v201, %v518
    %520 = vmatmul.bf16.gmra.mxu0 %v161
    %v521 = vpop.f32.mrf.mxu0
    %v522 = vadd.f32 %v201, %v521
    %v523 = vpop.f32.mrf.mxu0
    %v524 = vadd.f32 %v201, %v523
    %525 = vmatmul.bf16.gmra.mxu0 %v162
    %v526 = vpop.f32.mrf.mxu0
    %v527 = vadd.f32 %v201, %v526
    %v528 = vpop.f32.mrf.mxu0
    %v529 = vadd.f32 %v201, %v528
    %530 = vmatmul.bf16.gmra.mxu0 %v163
    %v531 = vpop.f32.mrf.mxu0
    %v532 = vadd.f32 %v201, %v531
    %v533 = vpop.f32.mrf.mxu0
    %v534 = vadd.f32 %v201, %v533
    %535 = vmatmul.bf16.gmra.mxu0 %v164
    %v536 = vpop.f32.mrf.mxu0
    %v537 = vadd.f32 %v201, %v536
    %v538 = vpop.f32.mrf.mxu0
    %v539 = vadd.f32 %v201, %v538
    %540 = vmatmul.bf16.gmra.mxu0 %v165
    %v541 = vpop.f32.mrf.mxu0
    %v542 = vadd.f32 %v201, %v541
    %v543 = vpop.f32.mrf.mxu0
    %v544 = vadd.f32 %v201, %v543
    %545 = vdwg.mxu0
    %546 = vmatpush.bf16.msra.mxu0 %v334
    %547 = vmatpush.bf16.msra.mxu0 %v330
    %548 = vmatpush.bf16.msra.mxu0 %v326
    %549 = vmatpush.bf16.msra.mxu0 %v322
    %550 = vmatpush.bf16.msra.mxu0 %v318
    %551 = vmatpush.bf16.msra.mxu0 %v314
    %552 = vmatpush.bf16.msra.mxu0 %v310
    %553 = vmatpush.bf16.msra.mxu0 %v306
    %554 = vmatmul.bf16.gmra.mxu0 %v150
    %v555 = vpop.f32.mrf.mxu0
    %v556 = vadd.f32 %v202, %v555
    %v557 = vpop.f32.mrf.mxu0
    %v558 = vadd.f32 %v202, %v557
    %559 = vmatmul.bf16.gmra.mxu0 %v151
    %v560 = vpop.f32.mrf.mxu0
    %v561 = vadd.f32 %v202, %v560
    %v562 = vpop.f32.mrf.mxu0
    %v563 = vadd.f32 %v202, %v562
    %564 = vmatmul.bf16.gmra.mxu0 %v152
    %v565 = vpop.f32.mrf.mxu0
    %v566 = vadd.f32 %v202, %v565
    %v567 = vpop.f32.mrf.mxu0
    %v568 = vadd.f32 %v202, %v567
    %569 = vmatmul.bf16.gmra.mxu0 %v153
    %v570 = vpop.f32.mrf.mxu0
    %v571 = vadd.f32 %v202, %v570
    %v572 = vpop.f32.mrf.mxu0
    %v573 = vadd.f32 %v202, %v572
    %574 = vmatmul.bf16.gmra.mxu0 %v154
    %v575 = vpop.f32.mrf.mxu0
    %v576 = vadd.f32 %v202, %v575
    %v577 = vpop.f32.mrf.mxu0
    %v578 = vadd.f32 %v202, %v577
    %579 = vmatmul.bf16.gmra.mxu0 %v155
    %v580 = vpop.f32.mrf.mxu0
    %v581 = vadd.f32 %v202, %v580
    %v582 = vpop.f32.mrf.mxu0
    %v583 = vadd.f32 %v202, %v582
    %584 = vmatmul.bf16.gmra.mxu0 %v156
    %v585 = vpop.f32.mrf.mxu0
    %v586 = vadd.f32 %v202, %v585
    %v587 = vpop.f32.mrf.mxu0
    %v588 = vadd.f32 %v202, %v587
    %589 = vmatmul.bf16.gmra.mxu0 %v157
    %v590 = vpop.f32.mrf.mxu0
    %v591 = vadd.f32 %v202, %v590
    %v592 = vpop.f32.mrf.mxu0
    %v593 = vadd.f32 %v202, %v592
    %594 = vmatmul.bf16.gmra.mxu0 %v158
    %v595 = vpop.f32.mrf.mxu0
    %v596 = vadd.f32 %v202, %v595
    %v597 = vpop.f32.mrf.mxu0
    %v598 = vadd.f32 %v202, %v597
    %599 = vmatmul.bf16.gmra.mxu0 %v159
    %v600 = vpop.f32.mrf.mxu0
    %v601 = vadd.f32 %v202, %v600
    %v602 = vpop.f32.mrf.mxu0
    %v603 = vadd.f32 %v202, %v602
    %604 = vmatmul.bf16.gmra.mxu0 %v160
    %v605 = vpop.f32.mrf.mxu0
    %v606 = vadd.f32 %v202, %v605
    %v607 = vpop.f32.mrf.mxu0
    %v608 = vadd.f32 %v202, %v607
    %609 = vmatmul.bf16.gmra.mxu0 %v161
    %v610 = vpop.f32.mrf.mxu0
    %v611 = vadd.f32 %v202, %v610
    %v612 = vpop.f32.mrf.mxu0
    %v613 = vadd.f32 %v202, %v612
    %614 = vmatmul.bf16.gmra.mxu0 %v162
    %v615 = vpop.f32.mrf.mxu0
    %v616 = vadd.f32 %v202, %v615
    %v617 = vpop.f32.mrf.mxu0
    %v618 = vadd.f32 %v202, %v617
    %619 = vmatmul.bf16.gmra.mxu0 %v163
    %v620 = vpop.f32.mrf.mxu0
    %v621 = vadd.f32 %v202, %v620
    %v622 = vpop.f32.mrf.mxu0
    %v623 = vadd.f32 %v202, %v622
    %624 = vmatmul.bf16.gmra.mxu0 %v164
    %v625 = vpop.f32.mrf.mxu0
    %v626 = vadd.f32 %v202, %v625
    %v627 = vpop.f32.mrf.mxu0
    %v628 = vadd.f32 %v202, %v627
    %629 = vmatmul.bf16.gmra.mxu0 %v165
    %v630 = vpop.f32.mrf.mxu0
    %v631 = vadd.f32 %v202, %v630
    %v632 = vpop.f32.mrf.mxu0
    %v633 = vadd.f32 %v202, %v632
    %634 = vdwg.mxu0
    %635 = vmatpush.bf16.msra.mxu0 %v335
    %636 = vmatpush.bf16.msra.mxu0 %v331
    %637 = vmatpush.bf16.msra.mxu0 %v327
    %638 = vmatpush.bf16.msra.mxu0 %v323
    %639 = vmatpush.bf16.msra.mxu0 %v319
    %640 = vmatpush.bf16.msra.mxu0 %v315
    %641 = vmatpush.bf16.msra.mxu0 %v311
    %642 = vmatpush.bf16.msra.mxu0 %v307
    %643 = vmatmul.bf16.gmra.mxu0 %v150
    %v644 = vpop.f32.mrf.mxu0
    %v645 = vadd.f32 %v203, %v644
    %v646 = vpop.f32.mrf.mxu0
    %v647 = vadd.f32 %v203, %v646
    %648 = vmatmul.bf16.gmra.mxu0 %v151
    %v649 = vpop.f32.mrf.mxu0
    %v650 = vadd.f32 %v203, %v649
    %v651 = vpop.f32.mrf.mxu0
    %v652 = vadd.f32 %v203, %v651
    %653 = vmatmul.bf16.gmra.mxu0 %v152
    %v654 = vpop.f32.mrf.mxu0
    %v655 = vadd.f32 %v203, %v654
    %v656 = vpop.f32.mrf.mxu0
    %v657 = vadd.f32 %v203, %v656
    %658 = vmatmul.bf16.gmra.mxu0 %v153
    %v659 = vpop.f32.mrf.mxu0
    %v660 = vadd.f32 %v203, %v659
    %v661 = vpop.f32.mrf.mxu0
    %v662 = vadd.f32 %v203, %v661
    %663 = vmatmul.bf16.gmra.mxu0 %v154
    %v664 = vpop.f32.mrf.mxu0
    %v665 = vadd.f32 %v203, %v664
    %v666 = vpop.f32.mrf.mxu0
    %v667 = vadd.f32 %v203, %v666
    %668 = vmatmul.bf16.gmra.mxu0 %v155
    %v669 = vpop.f32.mrf.mxu0
    %v670 = vadd.f32 %v203, %v669
    %v671 = vpop.f32.mrf.mxu0
    %v672 = vadd.f32 %v203, %v671
    %673 = vmatmul.bf16.gmra.mxu0 %v156
    %v674 = vpop.f32.mrf.mxu0
    %v675 = vadd.f32 %v203, %v674
    %v676 = vpop.f32.mrf.mxu0
    %v677 = vadd.f32 %v203, %v676
    %678 = vmatmul.bf16.gmra.mxu0 %v157
    %v679 = vpop.f32.mrf.mxu0
    %v680 = vadd.f32 %v203, %v679
    %v681 = vpop.f32.mrf.mxu0
    %v682 = vadd.f32 %v203, %v681
    %683 = vmatmul.bf16.gmra.mxu0 %v158
    %v684 = vpop.f32.mrf.mxu0
    %v685 = vadd.f32 %v203, %v684
    %v686 = vpop.f32.mrf.mxu0
    %v687 = vadd.f32 %v203, %v686
    %688 = vmatmul.bf16.gmra.mxu0 %v159
    %v689 = vpop.f32.mrf.mxu0
    %v690 = vadd.f32 %v203, %v689
    %v691 = vpop.f32.mrf.mxu0
    %v692 = vadd.f32 %v203, %v691
    %693 = vmatmul.bf16.gmra.mxu0 %v160
    %v694 = vpop.f32.mrf.mxu0
    %v695 = vadd.f32 %v203, %v694
    %v696 = vpop.f32.mrf.mxu0
    %v697 = vadd.f32 %v203, %v696
    %698 = vmatmul.bf16.gmra.mxu0 %v161
    %v699 = vpop.f32.mrf.mxu0
    %v700 = vadd.f32 %v203, %v699
    %v701 = vpop.f32.mrf.mxu0
    %v702 = vadd.f32 %v203, %v701
    %703 = vmatmul.bf16.gmra.mxu0 %v162
    %v704 = vpop.f32.mrf.mxu0
    %v705 = vadd.f32 %v203, %v704
    %v706 = vpop.f32.mrf.mxu0
    %v707 = vadd.f32 %v203, %v706
    %708 = vmatmul.bf16.gmra.mxu0 %v163
    %v709 = vpop.f32.mrf.mxu0
    %v710 = vadd.f32 %v203, %v709
    %v711 = vpop.f32.mrf.mxu0
    %v712 = vadd.f32 %v203, %v711
    %713 = vmatmul.bf16.gmra.mxu0 %v164
    %v714 = vpop.f32.mrf.mxu0
    %v715 = vadd.f32 %v203, %v714
    %v716 = vpop.f32.mrf.mxu0
    %v717 = vadd.f32 %v203, %v716
    %718 = vmatmul.bf16.gmra.mxu0 %v165
    %v719 = vpop.f32.mrf.mxu0
    %v720 = vadd.f32 %v203, %v719
    %v721 = vpop.f32.mrf.mxu0
    %v722 = vadd.f32 %v203, %v721
    %723 = vdwg.mxu0
    %v724 = vmul.f32 %v378, 0.5
    %v725 = vmul.f32 %v467, 0.5
    %v726 = vmul.f32 %v556, 0.5
    %v727 = vmul.f32 %v645, 0.5
    %v728 = vmul.f32 %v380, 0.5
    %v729 = vmul.f32 %v469, 0.5
    %v730 = vmul.f32 %v558, 0.5
    %v731 = vmul.f32 %v647, 0.5
    %v732 = vmul.f32 %v383, 0.5
    %v733 = vmul.f32 %v472, 0.5
    %v734 = vmul.f32 %v561, 0.5
    %v735 = vmul.f32 %v650, 0.5
    %v736 = vmul.f32 %v385, 0.5
    %v737 = vmul.f32 %v474, 0.5
    %v738 = vmul.f32 %v563, 0.5
    %v739 = vmul.f32 %v652, 0.5
    %v740 = vmul.f32 %v388, 0.5
    %v741 = vmul.f32 %v477, 0.5
    %v742 = vmul.f32 %v566, 0.5
    %v743 = vmul.f32 %v655, 0.5
    %v744 = vmul.f32 %v390, 0.5
    %v745 = vmul.f32 %v479, 0.5
    %v746 = vmul.f32 %v568, 0.5
    %v747 = vmul.f32 %v657, 0.5
    %v748 = vmul.f32 %v393, 0.5
    %v749 = vmul.f32 %v482, 0.5
    %v750 = vmul.f32 %v571, 0.5
    %v751 = vmul.f32 %v660, 0.5
    %v752 = vmul.f32 %v395, 0.5
    %v753 = vmul.f32 %v484, 0.5
    %v754 = vmul.f32 %v573, 0.5
    %v755 = vmul.f32 %v662, 0.5
    %v756 = vmul.f32 %v398, 0.5
    %v757 = vmul.f32 %v487, 0.5
    %v758 = vmul.f32 %v576, 0.5
    %v759 = vmul.f32 %v665, 0.5
    %v760 = vmul.f32 %v400, 0.5
    %v761 = vmul.f32 %v489, 0.5
    %v762 = vmul.f32 %v578, 0.5
    %v763 = vmul.f32 %v667, 0.5
    %v764 = vmul.f32 %v403, 0.5
    %v765 = vmul.f32 %v492, 0.5
    %v766 = vmul.f32 %v581, 0.5
    %v767 = vmul.f32 %v670, 0.5
    %v768 = vmul.f32 %v405, 0.5
    %v769 = vmul.f32 %v494, 0.5
    %v770 = vmul.f32 %v583, 0.5
    %v771 = vmul.f32 %v672, 0.5
    %v772 = vmul.f32 %v408, 0.5
    %v773 = vmul.f32 %v497, 0.5
    %v774 = vmul.f32 %v586, 0.5
    %v775 = vmul.f32 %v675, 0.5
    %v776 = vmul.f32 %v410, 0.5
    %v777 = vmul.f32 %v499, 0.5
    %v778 = vmul.f32 %v588, 0.5
    %v779 = vmul.f32 %v677, 0.5
    %v780 = vmul.f32 %v413, 0.5
    %v781 = vmul.f32 %v502, 0.5
    %v782 = vmul.f32 %v591, 0.5
    %v783 = vmul.f32 %v680, 0.5
    %v784 = vmul.f32 %v415, 0.5
    %v785 = vmul.f32 %v504, 0.5
    %v786 = vmul.f32 %v593, 0.5
    %v787 = vmul.f32 %v682, 0.5
    %v788 = vmul.f32 %v418, 0.5
    %v789 = vmul.f32 %v507, 0.5
    %v790 = vmul.f32 %v596, 0.5
    %v791 = vmul.f32 %v685, 0.5
    %v792 = vmul.f32 %v420, 0.5
    %v793 = vmul.f32 %v509, 0.5
    %v794 = vmul.f32 %v598, 0.5
    %v795 = vmul.f32 %v687, 0.5
    %v796 = vmul.f32 %v423, 0.5
    %v797 = vmul.f32 %v512, 0.5
    %v798 = vmul.f32 %v601, 0.5
    %v799 = vmul.f32 %v690, 0.5
    %v800 = vmul.f32 %v425, 0.5
    %v801 = vmul.f32 %v514, 0.5
    %v802 = vmul.f32 %v603, 0.5
    %v803 = vmul.f32 %v692, 0.5
    %v804 = vmul.f32 %v428, 0.5
    %v805 = vmul.f32 %v517, 0.5
    %v806 = vmul.f32 %v606, 0.5
    %v807 = vmul.f32 %v695, 0.5
    %v808 = vmul.f32 %v430, 0.5
    %v809 = vmul.f32 %v519, 0.5
    %v810 = vmul.f32 %v608, 0.5
    %v811 = vmul.f32 %v697, 0.5
    %v812 = vmul.f32 %v433, 0.5
    %v813 = vmul.f32 %v522, 0.5
    %v814 = vmul.f32 %v611, 0.5
    %v815 = vmul.f32 %v700, 0.5
    %v816 = vmul.f32 %v435, 0.5
    %v817 = vmul.f32 %v524, 0.5
    %v818 = vmul.f32 %v613, 0.5
    %v819 = vmul.f32 %v702, 0.5
    %v820 = vmul.f32 %v438, 0.5
    %v821 = vmul.f32 %v527, 0.5
    %v822 = vmul.f32 %v616, 0.5
    %v823 = vmul.f32 %v705, 0.5
    %v824 = vmul.f32 %v440, 0.5
    %v825 = vmul.f32 %v529, 0.5
    %v826 = vmul.f32 %v618, 0.5
    %v827 = vmul.f32 %v707, 0.5
    %v828 = vmul.f32 %v443, 0.5
    %v829 = vmul.f32 %v532, 0.5
    %v830 = vmul.f32 %v621, 0.5
    %v831 = vmul.f32 %v710, 0.5
    %v832 = vmul.f32 %v445, 0.5
    %v833 = vmul.f32 %v534, 0.5
    %v834 = vmul.f32 %v623, 0.5
    %v835 = vmul.f32 %v712, 0.5
    %v836 = vmul.f32 %v448, 0.5
    %v837 = vmul.f32 %v537, 0.5
    %v838 = vmul.f32 %v626, 0.5
    %v839 = vmul.f32 %v715, 0.5
    %v840 = vmul.f32 %v450, 0.5
    %v841 = vmul.f32 %v539, 0.5
    %v842 = vmul.f32 %v628, 0.5
    %v843 = vmul.f32 %v717, 0.5
    %v844 = vmul.f32 %v453, 0.5
    %v845 = vmul.f32 %v542, 0.5
    %v846 = vmul.f32 %v631, 0.5
    %v847 = vmul.f32 %v720, 0.5
    %v848 = vmul.f32 %v455, 0.5
    %v849 = vmul.f32 %v544, 0.5
    %v850 = vmul.f32 %v633, 0.5
    %v851 = vmul.f32 %v722, 0.5
    %v852 = vmul.f32 %v378, 0.70710677
    %v853 = vmul.f32 %v467, 0.70710677
    %v854 = vmul.f32 %v556, 0.70710677
    %v855 = vmul.f32 %v645, 0.70710677
    %v856 = vmul.f32 %v380, 0.70710677
    %v857 = vmul.f32 %v469, 0.70710677
    %v858 = vmul.f32 %v558, 0.70710677
    %v859 = vmul.f32 %v647, 0.70710677
    %v860 = vmul.f32 %v383, 0.70710677
    %v861 = vmul.f32 %v472, 0.70710677
    %v862 = vmul.f32 %v561, 0.70710677
    %v863 = vmul.f32 %v650, 0.70710677
    %v864 = vmul.f32 %v385, 0.70710677
    %v865 = vmul.f32 %v474, 0.70710677
    %v866 = vmul.f32 %v563, 0.70710677
    %v867 = vmul.f32 %v652, 0.70710677
    %v868 = vmul.f32 %v388, 0.70710677
    %v869 = vmul.f32 %v477, 0.70710677
    %v870 = vmul.f32 %v566, 0.70710677
    %v871 = vmul.f32 %v655, 0.70710677
    %v872 = vmul.f32 %v390, 0.70710677
    %v873 = vmul.f32 %v479, 0.70710677
    %v874 = vmul.f32 %v568, 0.70710677
    %v875 = vmul.f32 %v657, 0.70710677
    %v876 = vmul.f32 %v393, 0.70710677
    %v877 = vmul.f32 %v482, 0.70710677
    %v878 = vmul.f32 %v571, 0.70710677
    %v879 = vmul.f32 %v660, 0.70710677
    %v880 = vmul.f32 %v395, 0.70710677
    %v881 = vmul.f32 %v484, 0.70710677
    %v882 = vmul.f32 %v573, 0.70710677
    %v883 = vmul.f32 %v662, 0.70710677
    %v884 = vmul.f32 %v398, 0.70710677
    %v885 = vmul.f32 %v487, 0.70710677
    %v886 = vmul.f32 %v576, 0.70710677
    %v887 = vmul.f32 %v665, 0.70710677
    %v888 = vmul.f32 %v400, 0.70710677
    %v889 = vmul.f32 %v489, 0.70710677
    %v890 = vmul.f32 %v578, 0.70710677
    %v891 = vmul.f32 %v667, 0.70710677
    %v892 = vmul.f32 %v403, 0.70710677
    %v893 = vmul.f32 %v492, 0.70710677
    %v894 = vmul.f32 %v581, 0.70710677
    %v895 = vmul.f32 %v670, 0.70710677
    %v896 = vmul.f32 %v405, 0.70710677
    %v897 = vmul.f32 %v494, 0.70710677
    %v898 = vmul.f32 %v583, 0.70710677
    %v899 = vmul.f32 %v672, 0.70710677
    %v900 = vmul.f32 %v408, 0.70710677
    %v901 = vmul.f32 %v497, 0.70710677
    %v902 = vmul.f32 %v586, 0.70710677
    %v903 = vmul.f32 %v675, 0.70710677
    %v904 = vmul.f32 %v410, 0.70710677
    %v905 = vmul.f32 %v499, 0.70710677
    %v906 = vmul.f32 %v588, 0.70710677
    %v907 = vmul.f32 %v677, 0.70710677
    %v908 = vmul.f32 %v413, 0.70710677
    %v909 = vmul.f32 %v502, 0.70710677
    %v910 = vmul.f32 %v591, 0.70710677
    %v911 = vmul.f32 %v680, 0.70710677
    %v912 = vmul.f32 %v415, 0.70710677
    %v913 = vmul.f32 %v504, 0.70710677
    %v914 = vmul.f32 %v593, 0.70710677
    %v915 = vmul.f32 %v682, 0.70710677
    %v916 = vmul.f32 %v418, 0.70710677
    %v917 = vmul.f32 %v507, 0.70710677
    %v918 = vmul.f32 %v596, 0.70710677
    %v919 = vmul.f32 %v685, 0.70710677
    %v920 = vmul.f32 %v420, 0.70710677
    %v921 = vmul.f32 %v509, 0.70710677
    %v922 = vmul.f32 %v598, 0.70710677
    %v923 = vmul.f32 %v687, 0.70710677
    %v924 = vmul.f32 %v423, 0.70710677
    %v925 = vmul.f32 %v512, 0.70710677
    %v926 = vmul.f32 %v601, 0.70710677
    %v927 = vmul.f32 %v690, 0.70710677
    %v928 = vmul.f32 %v425, 0.70710677
    %v929 = vmul.f32 %v514, 0.70710677
    %v930 = vmul.f32 %v603, 0.70710677
    %v931 = vmul.f32 %v692, 0.70710677
    %v932 = vmul.f32 %v428, 0.70710677
    %v933 = vmul.f32 %v517, 0.70710677
    %v934 = vmul.f32 %v606, 0.70710677
    %v935 = vmul.f32 %v695, 0.70710677
    %v936 = vmul.f32 %v430, 0.70710677
    %v937 = vmul.f32 %v519, 0.70710677
    %v938 = vmul.f32 %v608, 0.70710677
    %v939 = vmul.f32 %v697, 0.70710677
    %v940 = vmul.f32 %v433, 0.70710677
    %v941 = vmul.f32 %v522, 0.70710677
    %v942 = vmul.f32 %v611, 0.70710677
    %v943 = vmul.f32 %v700, 0.70710677
    %v944 = vmul.f32 %v435, 0.70710677
    %v945 = vmul.f32 %v524, 0.70710677
    %v946 = vmul.f32 %v613, 0.70710677
    %v947 = vmul.f32 %v702, 0.70710677
    %v948 = vmul.f32 %v438, 0.70710677
    %v949 = vmul.f32 %v527, 0.70710677
    %v950 = vmul.f32 %v616, 0.70710677
    %v951 = vmul.f32 %v705, 0.70710677
    %v952 = vmul.f32 %v440, 0.70710677
    %v953 = vmul.f32 %v529, 0.70710677
    %v954 = vmul.f32 %v618, 0.70710677
    %v955 = vmul.f32 %v707, 0.70710677
    %v956 = vmul.f32 %v443, 0.70710677
    %v957 = vmul.f32 %v532, 0.70710677
    %v958 = vmul.f32 %v621, 0.70710677
    %v959 = vmul.f32 %v710, 0.70710677
    %v960 = vmul.f32 %v445, 0.70710677
    %v961 = vmul.f32 %v534, 0.70710677
    %v962 = vmul.f32 %v623, 0.70710677
    %v963 = vmul.f32 %v712, 0.70710677
    %v964 = vmul.f32 %v448, 0.70710677
    %v965 = vmul.f32 %v537, 0.70710677
    %v966 = vmul.f32 %v626, 0.70710677
    %v967 = vmul.f32 %v715, 0.70710677
    %v968 = vmul.f32 %v450, 0.70710677
    %v969 = vmul.f32 %v539, 0.70710677
    %v970 = vmul.f32 %v628, 0.70710677
    %v971 = vmul.f32 %v717, 0.70710677
    %v972 = vmul.f32 %v453, 0.70710677
    %v973 = vmul.f32 %v542, 0.70710677
    %v974 = vmul.f32 %v631, 0.70710677
    %v975 = vmul.f32 %v720, 0.70710677
    %v976 = vmul.f32 %v455, 0.70710677
    %v977 = vmul.f32 %v544, 0.70710677
    %v978 = vmul.f32 %v633, 0.70710677
    %v979 = vmul.f32 %v722, 0.70710677
    %v980 = vand.u32 2147483647, %v852
    %v981 = vand.u32 2147483647, %v853
    %v982 = vand.u32 2147483647, %v854
    %v983 = vand.u32 2147483647, %v855
    %v984 = vand.u32 2147483647, %v856
    %v985 = vand.u32 2147483647, %v857
    %v986 = vand.u32 2147483647, %v858
    %v987 = vand.u32 2147483647, %v859
    %v988 = vand.u32 2147483647, %v860
    %v989 = vand.u32 2147483647, %v861
    %v990 = vand.u32 2147483647, %v862
    %v991 = vand.u32 2147483647, %v863
    %v992 = vand.u32 2147483647, %v864
    %v993 = vand.u32 2147483647, %v865
    %v994 = vand.u32 2147483647, %v866
    %v995 = vand.u32 2147483647, %v867
    %v996 = vand.u32 2147483647, %v868
    %v997 = vand.u32 2147483647, %v869
    %v998 = vand.u32 2147483647, %v870
    %v999 = vand.u32 2147483647, %v871
    %v1000 = vand.u32 2147483647, %v872
    %v1001 = vand.u32 2147483647, %v873
    %v1002 = vand.u32 2147483647, %v874
    %v1003 = vand.u32 2147483647, %v875
    %v1004 = vand.u32 2147483647, %v876
    %v1005 = vand.u32 2147483647, %v877
    %v1006 = vand.u32 2147483647, %v878
    %v1007 = vand.u32 2147483647, %v879
    %v1008 = vand.u32 2147483647, %v880
    %v1009 = vand.u32 2147483647, %v881
    %v1010 = vand.u32 2147483647, %v882
    %v1011 = vand.u32 2147483647, %v883
    %v1012 = vand.u32 2147483647, %v884
    %v1013 = vand.u32 2147483647, %v885
    %v1014 = vand.u32 2147483647, %v886
    %v1015 = vand.u32 2147483647, %v887
    %v1016 = vand.u32 2147483647, %v888
    %v1017 = vand.u32 2147483647, %v889
    %v1018 = vand.u32 2147483647, %v890
    %v1019 = vand.u32 2147483647, %v891
    %v1020 = vand.u32 2147483647, %v892
    %v1021 = vand.u32 2147483647, %v893
    %v1022 = vand.u32 2147483647, %v894
    %v1023 = vand.u32 2147483647, %v895
    %v1024 = vand.u32 2147483647, %v896
    %v1025 = vand.u32 2147483647, %v897
    %v1026 = vand.u32 2147483647, %v898
    %v1027 = vand.u32 2147483647, %v899
    %v1028 = vand.u32 2147483647, %v900
    %v1029 = vand.u32 2147483647, %v901
    %v1030 = vand.u32 2147483647, %v902
    %v1031 = vand.u32 2147483647, %v903
    %v1032 = vand.u32 2147483647, %v904
    %v1033 = vand.u32 2147483647, %v905
    %v1034 = vand.u32 2147483647, %v906
    %v1035 = vand.u32 2147483647, %v907
    %v1036 = vand.u32 2147483647, %v908
    %v1037 = vand.u32 2147483647, %v909
    %v1038 = vand.u32 2147483647, %v910
    %v1039 = vand.u32 2147483647, %v911
    %v1040 = vand.u32 2147483647, %v912
    %v1041 = vand.u32 2147483647, %v913
    %v1042 = vand.u32 2147483647, %v914
    %v1043 = vand.u32 2147483647, %v915
    %v1044 = vand.u32 2147483647, %v916
    %v1045 = vand.u32 2147483647, %v917
    %v1046 = vand.u32 2147483647, %v918
    %v1047 = vand.u32 2147483647, %v919
    %v1048 = vand.u32 2147483647, %v920
    %v1049 = vand.u32 2147483647, %v921
    %v1050 = vand.u32 2147483647, %v922
    %v1051 = vand.u32 2147483647, %v923
    %v1052 = vand.u32 2147483647, %v924
    %v1053 = vand.u32 2147483647, %v925
    %v1054 = vand.u32 2147483647, %v926
    %v1055 = vand.u32 2147483647, %v927
    %v1056 = vand.u32 2147483647, %v928
    %v1057 = vand.u32 2147483647, %v929
    %v1058 = vand.u32 2147483647, %v930
    %v1059 = vand.u32 2147483647, %v931
    %v1060 = vand.u32 2147483647, %v932
    %v1061 = vand.u32 2147483647, %v933
    %v1062 = vand.u32 2147483647, %v934
    %v1063 = vand.u32 2147483647, %v935
    %v1064 = vand.u32 2147483647, %v936
    %v1065 = vand.u32 2147483647, %v937
    %v1066 = vand.u32 2147483647, %v938
    %v1067 = vand.u32 2147483647, %v939
    %v1068 = vand.u32 2147483647, %v940
    %v1069 = vand.u32 2147483647, %v941
    %v1070 = vand.u32 2147483647, %v942
    %v1071 = vand.u32 2147483647, %v943
    %v1072 = vand.u32 2147483647, %v944
    %v1073 = vand.u32 2147483647, %v945
    %v1074 = vand.u32 2147483647, %v946
    %v1075 = vand.u32 2147483647, %v947
    %v1076 = vand.u32 2147483647, %v948
    %v1077 = vand.u32 2147483647, %v949
    %v1078 = vand.u32 2147483647, %v950
    %v1079 = vand.u32 2147483647, %v951
    %v1080 = vand.u32 2147483647, %v952
    %v1081 = vand.u32 2147483647, %v953
    %v1082 = vand.u32 2147483647, %v954
    %v1083 = vand.u32 2147483647, %v955
    %v1084 = vand.u32 2147483647, %v956
    %v1085 = vand.u32 2147483647, %v957
    %v1086 = vand.u32 2147483647, %v958
    %v1087 = vand.u32 2147483647, %v959
    %v1088 = vand.u32 2147483647, %v960
    %v1089 = vand.u32 2147483647, %v961
    %v1090 = vand.u32 2147483647, %v962
    %v1091 = vand.u32 2147483647, %v963
    %v1092 = vand.u32 2147483647, %v964
    %v1093 = vand.u32 2147483647, %v965
    %v1094 = vand.u32 2147483647, %v966
    %v1095 = vand.u32 2147483647, %v967
    %v1096 = vand.u32 2147483647, %v968
    %v1097 = vand.u32 2147483647, %v969
    %v1098 = vand.u32 2147483647, %v970
    %v1099 = vand.u32 2147483647, %v971
    %v1100 = vand.u32 2147483647, %v972
    %v1101 = vand.u32 2147483647, %v973
    %v1102 = vand.u32 2147483647, %v974
    %v1103 = vand.u32 2147483647, %v975
    %v1104 = vand.u32 2147483647, %v976
    %v1105 = vand.u32 2147483647, %v977
    %v1106 = vand.u32 2147483647, %v978
    %v1107 = vand.u32 2147483647, %v979
    %v1108 = vmul.f32 %v980, 0.3275911
    %v1109 = vmul.f32 %v981, 0.3275911
    %v1110 = vmul.f32 %v982, 0.3275911
    %v1111 = vmul.f32 %v983, 0.3275911
    %v1112 = vmul.f32 %v984, 0.3275911
    %v1113 = vmul.f32 %v985, 0.3275911
    %v1114 = vmul.f32 %v986, 0.3275911
    %v1115 = vmul.f32 %v987, 0.3275911
    %v1116 = vmul.f32 %v988, 0.3275911
    %v1117 = vmul.f32 %v989, 0.3275911
    %v1118 = vmul.f32 %v990, 0.3275911
    %v1119 = vmul.f32 %v991, 0.3275911
    %v1120 = vmul.f32 %v992, 0.3275911
    %v1121 = vmul.f32 %v993, 0.3275911
    %v1122 = vmul.f32 %v994, 0.3275911
    %v1123 = vmul.f32 %v995, 0.3275911
    %v1124 = vmul.f32 %v996, 0.3275911
    %v1125 = vmul.f32 %v997, 0.3275911
    %v1126 = vmul.f32 %v998, 0.3275911
    %v1127 = vmul.f32 %v999, 0.3275911
    %v1128 = vmul.f32 %v1000, 0.3275911
    %v1129 = vmul.f32 %v1001, 0.3275911
    %v1130 = vmul.f32 %v1002, 0.3275911
    %v1131 = vmul.f32 %v1003, 0.3275911
    %v1132 = vmul.f32 %v1004, 0.3275911
    %v1133 = vmul.f32 %v1005, 0.3275911
    %v1134 = vmul.f32 %v1006, 0.3275911
    %v1135 = vmul.f32 %v1007, 0.3275911
    %v1136 = vmul.f32 %v1008, 0.3275911
    %v1137 = vmul.f32 %v1009, 0.3275911
    %v1138 = vmul.f32 %v1010, 0.3275911
    %v1139 = vmul.f32 %v1011, 0.3275911
    %v1140 = vmul.f32 %v1012, 0.3275911
    %v1141 = vmul.f32 %v1013, 0.3275911
    %v1142 = vmul.f32 %v1014, 0.3275911
    %v1143 = vmul.f32 %v1015, 0.3275911
    %v1144 = vmul.f32 %v1016, 0.3275911
    %v1145 = vmul.f32 %v1017, 0.3275911
    %v1146 = vmul.f32 %v1018, 0.3275911
    %v1147 = vmul.f32 %v1019, 0.3275911
    %v1148 = vmul.f32 %v1020, 0.3275911
    %v1149 = vmul.f32 %v1021, 0.3275911
    %v1150 = vmul.f32 %v1022, 0.3275911
    %v1151 = vmul.f32 %v1023, 0.3275911
    %v1152 = vmul.f32 %v1024, 0.3275911
    %v1153 = vmul.f32 %v1025, 0.3275911
    %v1154 = vmul.f32 %v1026, 0.3275911
    %v1155 = vmul.f32 %v1027, 0.3275911
    %v1156 = vmul.f32 %v1028, 0.3275911
    %v1157 = vmul.f32 %v1029, 0.3275911
    %v1158 = vmul.f32 %v1030, 0.3275911
    %v1159 = vmul.f32 %v1031, 0.3275911
    %v1160 = vmul.f32 %v1032, 0.3275911
    %v1161 = vmul.f32 %v1033, 0.3275911
    %v1162 = vmul.f32 %v1034, 0.3275911
    %v1163 = vmul.f32 %v1035, 0.3275911
    %v1164 = vmul.f32 %v1036, 0.3275911
    %v1165 = vmul.f32 %v1037, 0.3275911
    %v1166 = vmul.f32 %v1038, 0.3275911
    %v1167 = vmul.f32 %v1039, 0.3275911
    %v1168 = vmul.f32 %v1040, 0.3275911
    %v1169 = vmul.f32 %v1041, 0.3275911
    %v1170 = vmul.f32 %v1042, 0.3275911
    %v1171 = vmul.f32 %v1043, 0.3275911
    %v1172 = vmul.f32 %v1044, 0.3275911
    %v1173 = vmul.f32 %v1045, 0.3275911
    %v1174 = vmul.f32 %v1046, 0.3275911
    %v1175 = vmul.f32 %v1047, 0.3275911
    %v1176 = vmul.f32 %v1048, 0.3275911
    %v1177 = vmul.f32 %v1049, 0.3275911
    %v1178 = vmul.f32 %v1050, 0.3275911
    %v1179 = vmul.f32 %v1051, 0.3275911
    %v1180 = vmul.f32 %v1052, 0.3275911
    %v1181 = vmul.f32 %v1053, 0.3275911
    %v1182 = vmul.f32 %v1054, 0.3275911
    %v1183 = vmul.f32 %v1055, 0.3275911
    %v1184 = vmul.f32 %v1056, 0.3275911
    %v1185 = vmul.f32 %v1057, 0.3275911
    %v1186 = vmul.f32 %v1058, 0.3275911
    %v1187 = vmul.f32 %v1059, 0.3275911
    %v1188 = vmul.f32 %v1060, 0.3275911
    %v1189 = vmul.f32 %v1061, 0.3275911
    %v1190 = vmul.f32 %v1062, 0.3275911
    %v1191 = vmul.f32 %v1063, 0.3275911
    %v1192 = vmul.f32 %v1064, 0.3275911
    %v1193 = vmul.f32 %v1065, 0.3275911
    %v1194 = vmul.f32 %v1066, 0.3275911
    %v1195 = vmul.f32 %v1067, 0.3275911
    %v1196 = vmul.f32 %v1068, 0.3275911
    %v1197 = vmul.f32 %v1069, 0.3275911
    %v1198 = vmul.f32 %v1070, 0.3275911
    %v1199 = vmul.f32 %v1071, 0.3275911
    %v1200 = vmul.f32 %v1072, 0.3275911
    %v1201 = vmul.f32 %v1073, 0.3275911
    %v1202 = vmul.f32 %v1074, 0.3275911
    %v1203 = vmul.f32 %v1075, 0.3275911
    %v1204 = vmul.f32 %v1076, 0.3275911
    %v1205 = vmul.f32 %v1077, 0.3275911
    %v1206 = vmul.f32 %v1078, 0.3275911
    %v1207 = vmul.f32 %v1079, 0.3275911
    %v1208 = vmul.f32 %v1080, 0.3275911
    %v1209 = vmul.f32 %v1081, 0.3275911
    %v1210 = vmul.f32 %v1082, 0.3275911
    %v1211 = vmul.f32 %v1083, 0.3275911
    %v1212 = vmul.f32 %v1084, 0.3275911
    %v1213 = vmul.f32 %v1085, 0.3275911
    %v1214 = vmul.f32 %v1086, 0.3275911
    %v1215 = vmul.f32 %v1087, 0.3275911
    %v1216 = vmul.f32 %v1088, 0.3275911
    %v1217 = vmul.f32 %v1089, 0.3275911
    %v1218 = vmul.f32 %v1090, 0.3275911
    %v1219 = vmul.f32 %v1091, 0.3275911
    %v1220 = vmul.f32 %v1092, 0.3275911
    %v1221 = vmul.f32 %v1093, 0.3275911
    %v1222 = vmul.f32 %v1094, 0.3275911
    %v1223 = vmul.f32 %v1095, 0.3275911
    %v1224 = vmul.f32 %v1096, 0.3275911
    %v1225 = vmul.f32 %v1097, 0.3275911
    %v1226 = vmul.f32 %v1098, 0.3275911
    %v1227 = vmul.f32 %v1099, 0.3275911
    %v1228 = vmul.f32 %v1100, 0.3275911
    %v1229 = vmul.f32 %v1101, 0.3275911
    %v1230 = vmul.f32 %v1102, 0.3275911
    %v1231 = vmul.f32 %v1103, 0.3275911
    %v1232 = vmul.f32 %v1104, 0.3275911
    %v1233 = vmul.f32 %v1105, 0.3275911
    %v1234 = vmul.f32 %v1106, 0.3275911
    %v1235 = vmul.f32 %v1107, 0.3275911
    %v1236 = vadd.f32 %v1108, 1.0
    %v1237 = vadd.f32 %v1109, 1.0
    %v1238 = vadd.f32 %v1110, 1.0
    %v1239 = vadd.f32 %v1111, 1.0
    %v1240 = vadd.f32 %v1112, 1.0
    %v1241 = vadd.f32 %v1113, 1.0
    %v1242 = vadd.f32 %v1114, 1.0
    %v1243 = vadd.f32 %v1115, 1.0
    %v1244 = vadd.f32 %v1116, 1.0
    %v1245 = vadd.f32 %v1117, 1.0
    %v1246 = vadd.f32 %v1118, 1.0
    %v1247 = vadd.f32 %v1119, 1.0
    %v1248 = vadd.f32 %v1120, 1.0
    %v1249 = vadd.f32 %v1121, 1.0
    %v1250 = vadd.f32 %v1122, 1.0
    %v1251 = vadd.f32 %v1123, 1.0
    %v1252 = vadd.f32 %v1124, 1.0
    %v1253 = vadd.f32 %v1125, 1.0
    %v1254 = vadd.f32 %v1126, 1.0
    %v1255 = vadd.f32 %v1127, 1.0
    %v1256 = vadd.f32 %v1128, 1.0
    %v1257 = vadd.f32 %v1129, 1.0
    %v1258 = vadd.f32 %v1130, 1.0
    %v1259 = vadd.f32 %v1131, 1.0
    %v1260 = vadd.f32 %v1132, 1.0
    %v1261 = vadd.f32 %v1133, 1.0
    %v1262 = vadd.f32 %v1134, 1.0
    %v1263 = vadd.f32 %v1135, 1.0
    %v1264 = vadd.f32 %v1136, 1.0
    %v1265 = vadd.f32 %v1137, 1.0
    %v1266 = vadd.f32 %v1138, 1.0
    %v1267 = vadd.f32 %v1139, 1.0
    %v1268 = vadd.f32 %v1140, 1.0
    %v1269 = vadd.f32 %v1141, 1.0
    %v1270 = vadd.f32 %v1142, 1.0
    %v1271 = vadd.f32 %v1143, 1.0
    %v1272 = vadd.f32 %v1144, 1.0
    %v1273 = vadd.f32 %v1145, 1.0
    %v1274 = vadd.f32 %v1146, 1.0
    %v1275 = vadd.f32 %v1147, 1.0
    %v1276 = vadd.f32 %v1148, 1.0
    %v1277 = vadd.f32 %v1149, 1.0
    %v1278 = vadd.f32 %v1150, 1.0
    %v1279 = vadd.f32 %v1151, 1.0
    %v1280 = vadd.f32 %v1152, 1.0
    %v1281 = vadd.f32 %v1153, 1.0
    %v1282 = vadd.f32 %v1154, 1.0
    %v1283 = vadd.f32 %v1155, 1.0
    %v1284 = vadd.f32 %v1156, 1.0
    %v1285 = vadd.f32 %v1157, 1.0
    %v1286 = vadd.f32 %v1158, 1.0
    %v1287 = vadd.f32 %v1159, 1.0
    %v1288 = vadd.f32 %v1160, 1.0
    %v1289 = vadd.f32 %v1161, 1.0
    %v1290 = vadd.f32 %v1162, 1.0
    %v1291 = vadd.f32 %v1163, 1.0
    %v1292 = vadd.f32 %v1164, 1.0
    %v1293 = vadd.f32 %v1165, 1.0
    %v1294 = vadd.f32 %v1166, 1.0
    %v1295 = vadd.f32 %v1167, 1.0
    %v1296 = vadd.f32 %v1168, 1.0
    %v1297 = vadd.f32 %v1169, 1.0
    %v1298 = vadd.f32 %v1170, 1.0
    %v1299 = vadd.f32 %v1171, 1.0
    %v1300 = vadd.f32 %v1172, 1.0
    %v1301 = vadd.f32 %v1173, 1.0
    %v1302 = vadd.f32 %v1174, 1.0
    %v1303 = vadd.f32 %v1175, 1.0
    %v1304 = vadd.f32 %v1176, 1.0
    %v1305 = vadd.f32 %v1177, 1.0
    %v1306 = vadd.f32 %v1178, 1.0
    %v1307 = vadd.f32 %v1179, 1.0
    %v1308 = vadd.f32 %v1180, 1.0
    %v1309 = vadd.f32 %v1181, 1.0
    %v1310 = vadd.f32 %v1182, 1.0
    %v1311 = vadd.f32 %v1183, 1.0
    %v1312 = vadd.f32 %v1184, 1.0
    %v1313 = vadd.f32 %v1185, 1.0
    %v1314 = vadd.f32 %v1186, 1.0
    %v1315 = vadd.f32 %v1187, 1.0
    %v1316 = vadd.f32 %v1188, 1.0
    %v1317 = vadd.f32 %v1189, 1.0
    %v1318 = vadd.f32 %v1190, 1.0
    %v1319 = vadd.f32 %v1191, 1.0
    %v1320 = vadd.f32 %v1192, 1.0
    %v1321 = vadd.f32 %v1193, 1.0
    %v1322 = vadd.f32 %v1194, 1.0
    %v1323 = vadd.f32 %v1195, 1.0
    %v1324 = vadd.f32 %v1196, 1.0
    %v1325 = vadd.f32 %v1197, 1.0
    %v1326 = vadd.f32 %v1198, 1.0
    %v1327 = vadd.f32 %v1199, 1.0
    %v1328 = vadd.f32 %v1200, 1.0
    %v1329 = vadd.f32 %v1201, 1.0
    %v1330 = vadd.f32 %v1202, 1.0
    %v1331 = vadd.f32 %v1203, 1.0
    %v1332 = vadd.f32 %v1204, 1.0
    %v1333 = vadd.f32 %v1205, 1.0
    %v1334 = vadd.f32 %v1206, 1.0
    %v1335 = vadd.f32 %v1207, 1.0
    %v1336 = vadd.f32 %v1208, 1.0
    %v1337 = vadd.f32 %v1209, 1.0
    %v1338 = vadd.f32 %v1210, 1.0
    %v1339 = vadd.f32 %v1211, 1.0
    %v1340 = vadd.f32 %v1212, 1.0
    %v1341 = vadd.f32 %v1213, 1.0
    %v1342 = vadd.f32 %v1214, 1.0
    %v1343 = vadd.f32 %v1215, 1.0
    %v1344 = vadd.f32 %v1216, 1.0
    %v1345 = vadd.f32 %v1217, 1.0
    %v1346 = vadd.f32 %v1218, 1.0
    %v1347 = vadd.f32 %v1219, 1.0
    %v1348 = vadd.f32 %v1220, 1.0
    %v1349 = vadd.f32 %v1221, 1.0
    %v1350 = vadd.f32 %v1222, 1.0
    %v1351 = vadd.f32 %v1223, 1.0
    %v1352 = vadd.f32 %v1224, 1.0
    %v1353 = vadd.f32 %v1225, 1.0
    %v1354 = vadd.f32 %v1226, 1.0
    %v1355 = vadd.f32 %v1227, 1.0
    %v1356 = vadd.f32 %v1228, 1.0
    %v1357 = vadd.f32 %v1229, 1.0
    %v1358 = vadd.f32 %v1230, 1.0
    %v1359 = vadd.f32 %v1231, 1.0
    %v1360 = vadd.f32 %v1232, 1.0
    %v1361 = vadd.f32 %v1233, 1.0
    %v1362 = vadd.f32 %v1234, 1.0
    %v1363 = vadd.f32 %v1235, 1.0
    %v1364 = vrcp.pop %v1236
    %v1365 = vrcp.pop %v1237
    %v1366 = vrcp.pop %v1238
    %v1367 = vrcp.pop %v1239
    %v1368 = vrcp.pop %v1240
    %v1369 = vrcp.pop %v1241
    %v1370 = vrcp.pop %v1242
    %v1371 = vrcp.pop %v1243
    %v1372 = vrcp.pop %v1244
    %v1373 = vrcp.pop %v1245
    %v1374 = vrcp.pop %v1246
    %v1375 = vrcp.pop %v1247
    %v1376 = vrcp.pop %v1248
    %v1377 = vrcp.pop %v1249
    %v1378 = vrcp.pop %v1250
    %v1379 = vrcp.pop %v1251
    %v1380 = vrcp.pop %v1252
    %v1381 = vrcp.pop %v1253
    %v1382 = vrcp.pop %v1254
    %v1383 = vrcp.pop %v1255
    %v1384 = vrcp.pop %v1256
    %v1385 = vrcp.pop %v1257
    %v1386 = vrcp.pop %v1258
    %v1387 = vrcp.pop %v1259
    %v1388 = vrcp.pop %v1260
    %v1389 = vrcp.pop %v1261
    %v1390 = vrcp.pop %v1262
    %v1391 = vrcp.pop %v1263
    %v1392 = vrcp.pop %v1264
    %v1393 = vrcp.pop %v1265
    %v1394 = vrcp.pop %v1266
    %v1395 = vrcp.pop %v1267
    %v1396 = vrcp.pop %v1268
    %v1397 = vrcp.pop %v1269
    %v1398 = vrcp.pop %v1270
    %v1399 = vrcp.pop %v1271
    %v1400 = vrcp.pop %v1272
    %v1401 = vrcp.pop %v1273
    %v1402 = vrcp.pop %v1274
    %v1403 = vrcp.pop %v1275
    %v1404 = vrcp.pop %v1276
    %v1405 = vrcp.pop %v1277
    %v1406 = vrcp.pop %v1278
    %v1407 = vrcp.pop %v1279
    %v1408 = vrcp.pop %v1280
    %v1409 = vrcp.pop %v1281
    %v1410 = vrcp.pop %v1282
    %v1411 = vrcp.pop %v1283
    %v1412 = vrcp.pop %v1284
    %v1413 = vrcp.pop %v1285
    %v1414 = vrcp.pop %v1286
    %v1415 = vrcp.pop %v1287
    %v1416 = vrcp.pop %v1288
    %v1417 = vrcp.pop %v1289
    %v1418 = vrcp.pop %v1290
    %v1419 = vrcp.pop %v1291
    %v1420 = vrcp.pop %v1292
    %v1421 = vrcp.pop %v1293
    %v1422 = vrcp.pop %v1294
    %v1423 = vrcp.pop %v1295
    %v1424 = vrcp.pop %v1296
    %v1425 = vrcp.pop %v1297
    %v1426 = vrcp.pop %v1298
    %v1427 = vrcp.pop %v1299
    %v1428 = vrcp.pop %v1300
    %v1429 = vrcp.pop %v1301
    %v1430 = vrcp.pop %v1302
    %v1431 = vrcp.pop %v1303
    %v1432 = vrcp.pop %v1304
    %v1433 = vrcp.pop %v1305
    %v1434 = vrcp.pop %v1306
    %v1435 = vrcp.pop %v1307
    %v1436 = vrcp.pop %v1308
    %v1437 = vrcp.pop %v1309
    %v1438 = vrcp.pop %v1310
    %v1439 = vrcp.pop %v1311
    %v1440 = vrcp.pop %v1312
    %v1441 = vrcp.pop %v1313
    %v1442 = vrcp.pop %v1314
    %v1443 = vrcp.pop %v1315
    %v1444 = vrcp.pop %v1316
    %v1445 = vrcp.pop %v1317
    %v1446 = vrcp.pop %v1318
    %v1447 = vrcp.pop %v1319
    %v1448 = vrcp.pop %v1320
    %v1449 = vrcp.pop %v1321
    %v1450 = vrcp.pop %v1322
    %v1451 = vrcp.pop %v1323
    %v1452 = vrcp.pop %v1324
    %v1453 = vrcp.pop %v1325
    %v1454 = vrcp.pop %v1326
    %v1455 = vrcp.pop %v1327
    %v1456 = vrcp.pop %v1328
    %v1457 = vrcp.pop %v1329
    %v1458 = vrcp.pop %v1330
    %v1459 = vrcp.pop %v1331
    %v1460 = vrcp.pop %v1332
    %v1461 = vrcp.pop %v1333
    %v1462 = vrcp.pop %v1334
    %v1463 = vrcp.pop %v1335
    %v1464 = vrcp.pop %v1336
    %v1465 = vrcp.pop %v1337
    %v1466 = vrcp.pop %v1338
    %v1467 = vrcp.pop %v1339
    %v1468 = vrcp.pop %v1340
    %v1469 = vrcp.pop %v1341
    %v1470 = vrcp.pop %v1342
    %v1471 = vrcp.pop %v1343
    %v1472 = vrcp.pop %v1344
    %v1473 = vrcp.pop %v1345
    %v1474 = vrcp.pop %v1346
    %v1475 = vrcp.pop %v1347
    %v1476 = vrcp.pop %v1348
    %v1477 = vrcp.pop %v1349
    %v1478 = vrcp.pop %v1350
    %v1479 = vrcp.pop %v1351
    %v1480 = vrcp.pop %v1352
    %v1481 = vrcp.pop %v1353
    %v1482 = vrcp.pop %v1354
    %v1483 = vrcp.pop %v1355
    %v1484 = vrcp.pop %v1356
    %v1485 = vrcp.pop %v1357
    %v1486 = vrcp.pop %v1358
    %v1487 = vrcp.pop %v1359
    %v1488 = vrcp.pop %v1360
    %v1489 = vrcp.pop %v1361
    %v1490 = vrcp.pop %v1362
    %v1491 = vrcp.pop %v1363
    %v1492 = vmul.f32 %v1236, %v1364
    %v1493 = vmul.f32 %v1237, %v1365
    %v1494 = vmul.f32 %v1238, %v1366
    %v1495 = vmul.f32 %v1239, %v1367
    %v1496 = vmul.f32 %v1240, %v1368
    %v1497 = vmul.f32 %v1241, %v1369
    %v1498 = vmul.f32 %v1242, %v1370
    %v1499 = vmul.f32 %v1243, %v1371
    %v1500 = vmul.f32 %v1244, %v1372
    %v1501 = vmul.f32 %v1245, %v1373
    %v1502 = vmul.f32 %v1246, %v1374
    %v1503 = vmul.f32 %v1247, %v1375
    %v1504 = vmul.f32 %v1248, %v1376
    %v1505 = vmul.f32 %v1249, %v1377
    %v1506 = vmul.f32 %v1250, %v1378
    %v1507 = vmul.f32 %v1251, %v1379
    %v1508 = vmul.f32 %v1252, %v1380
    %v1509 = vmul.f32 %v1253, %v1381
    %v1510 = vmul.f32 %v1254, %v1382
    %v1511 = vmul.f32 %v1255, %v1383
    %v1512 = vmul.f32 %v1256, %v1384
    %v1513 = vmul.f32 %v1257, %v1385
    %v1514 = vmul.f32 %v1258, %v1386
    %v1515 = vmul.f32 %v1259, %v1387
    %v1516 = vmul.f32 %v1260, %v1388
    %v1517 = vmul.f32 %v1261, %v1389
    %v1518 = vmul.f32 %v1262, %v1390
    %v1519 = vmul.f32 %v1263, %v1391
    %v1520 = vmul.f32 %v1264, %v1392
    %v1521 = vmul.f32 %v1265, %v1393
    %v1522 = vmul.f32 %v1266, %v1394
    %v1523 = vmul.f32 %v1267, %v1395
    %v1524 = vmul.f32 %v1268, %v1396
    %v1525 = vmul.f32 %v1269, %v1397
    %v1526 = vmul.f32 %v1270, %v1398
    %v1527 = vmul.f32 %v1271, %v1399
    %v1528 = vmul.f32 %v1272, %v1400
    %v1529 = vmul.f32 %v1273, %v1401
    %v1530 = vmul.f32 %v1274, %v1402
    %v1531 = vmul.f32 %v1275, %v1403
    %v1532 = vmul.f32 %v1276, %v1404
    %v1533 = vmul.f32 %v1277, %v1405
    %v1534 = vmul.f32 %v1278, %v1406
    %v1535 = vmul.f32 %v1279, %v1407
    %v1536 = vmul.f32 %v1280, %v1408
    %v1537 = vmul.f32 %v1281, %v1409
    %v1538 = vmul.f32 %v1282, %v1410
    %v1539 = vmul.f32 %v1283, %v1411
    %v1540 = vmul.f32 %v1284, %v1412
    %v1541 = vmul.f32 %v1285, %v1413
    %v1542 = vmul.f32 %v1286, %v1414
    %v1543 = vmul.f32 %v1287, %v1415
    %v1544 = vmul.f32 %v1288, %v1416
    %v1545 = vmul.f32 %v1289, %v1417
    %v1546 = vmul.f32 %v1290, %v1418
    %v1547 = vmul.f32 %v1291, %v1419
    %v1548 = vmul.f32 %v1292, %v1420
    %v1549 = vmul.f32 %v1293, %v1421
    %v1550 = vmul.f32 %v1294, %v1422
    %v1551 = vmul.f32 %v1295, %v1423
    %v1552 = vmul.f32 %v1296, %v1424
    %v1553 = vmul.f32 %v1297, %v1425
    %v1554 = vmul.f32 %v1298, %v1426
    %v1555 = vmul.f32 %v1299, %v1427
    %v1556 = vmul.f32 %v1300, %v1428
    %v1557 = vmul.f32 %v1301, %v1429
    %v1558 = vmul.f32 %v1302, %v1430
    %v1559 = vmul.f32 %v1303, %v1431
    %v1560 = vmul.f32 %v1304, %v1432
    %v1561 = vmul.f32 %v1305, %v1433
    %v1562 = vmul.f32 %v1306, %v1434
    %v1563 = vmul.f32 %v1307, %v1435
    %v1564 = vmul.f32 %v1308, %v1436
    %v1565 = vmul.f32 %v1309, %v1437
    %v1566 = vmul.f32 %v1310, %v1438
    %v1567 = vmul.f32 %v1311, %v1439
    %v1568 = vmul.f32 %v1312, %v1440
    %v1569 = vmul.f32 %v1313, %v1441
    %v1570 = vmul.f32 %v1314, %v1442
    %v1571 = vmul.f32 %v1315, %v1443
    %v1572 = vmul.f32 %v1316, %v1444
    %v1573 = vmul.f32 %v1317, %v1445
    %v1574 = vmul.f32 %v1318, %v1446
    %v1575 = vmul.f32 %v1319, %v1447
    %v1576 = vmul.f32 %v1320, %v1448
    %v1577 = vmul.f32 %v1321, %v1449
    %v1578 = vmul.f32 %v1322, %v1450
    %v1579 = vmul.f32 %v1323, %v1451
    %v1580 = vmul.f32 %v1324, %v1452
    %v1581 = vmul.f32 %v1325, %v1453
    %v1582 = vmul.f32 %v1326, %v1454
    %v1583 = vmul.f32 %v1327, %v1455
    %v1584 = vmul.f32 %v1328, %v1456
    %v1585 = vmul.f32 %v1329, %v1457
    %v1586 = vmul.f32 %v1330, %v1458
    %v1587 = vmul.f32 %v1331, %v1459
    %v1588 = vmul.f32 %v1332, %v1460
    %v1589 = vmul.f32 %v1333, %v1461
    %v1590 = vmul.f32 %v1334, %v1462
    %v1591 = vmul.f32 %v1335, %v1463
    %v1592 = vmul.f32 %v1336, %v1464
    %v1593 = vmul.f32 %v1337, %v1465
    %v1594 = vmul.f32 %v1338, %v1466
    %v1595 = vmul.f32 %v1339, %v1467
    %v1596 = vmul.f32 %v1340, %v1468
    %v1597 = vmul.f32 %v1341, %v1469
    %v1598 = vmul.f32 %v1342, %v1470
    %v1599 = vmul.f32 %v1343, %v1471
    %v1600 = vmul.f32 %v1344, %v1472
    %v1601 = vmul.f32 %v1345, %v1473
    %v1602 = vmul.f32 %v1346, %v1474
    %v1603 = vmul.f32 %v1347, %v1475
    %v1604 = vmul.f32 %v1348, %v1476
    %v1605 = vmul.f32 %v1349, %v1477
    %v1606 = vmul.f32 %v1350, %v1478
    %v1607 = vmul.f32 %v1351, %v1479
    %v1608 = vmul.f32 %v1352, %v1480
    %v1609 = vmul.f32 %v1353, %v1481
    %v1610 = vmul.f32 %v1354, %v1482
    %v1611 = vmul.f32 %v1355, %v1483
    %v1612 = vmul.f32 %v1356, %v1484
    %v1613 = vmul.f32 %v1357, %v1485
    %v1614 = vmul.f32 %v1358, %v1486
    %v1615 = vmul.f32 %v1359, %v1487
    %v1616 = vmul.f32 %v1360, %v1488
    %v1617 = vmul.f32 %v1361, %v1489
    %v1618 = vmul.f32 %v1362, %v1490
    %v1619 = vmul.f32 %v1363, %v1491
    %v1620 = vsub.f32 2.0, %v1492
    %v1621 = vsub.f32 2.0, %v1493
    %v1622 = vsub.f32 2.0, %v1494
    %v1623 = vsub.f32 2.0, %v1495
    %v1624 = vsub.f32 2.0, %v1496
    %v1625 = vsub.f32 2.0, %v1497
    %v1626 = vsub.f32 2.0, %v1498
    %v1627 = vsub.f32 2.0, %v1499
    %v1628 = vsub.f32 2.0, %v1500
    %v1629 = vsub.f32 2.0, %v1501
    %v1630 = vsub.f32 2.0, %v1502
    %v1631 = vsub.f32 2.0, %v1503
    %v1632 = vsub.f32 2.0, %v1504
    %v1633 = vsub.f32 2.0, %v1505
    %v1634 = vsub.f32 2.0, %v1506
    %v1635 = vsub.f32 2.0, %v1507
    %v1636 = vsub.f32 2.0, %v1508
    %v1637 = vsub.f32 2.0, %v1509
    %v1638 = vsub.f32 2.0, %v1510
    %v1639 = vsub.f32 2.0, %v1511
    %v1640 = vsub.f32 2.0, %v1512
    %v1641 = vsub.f32 2.0, %v1513
    %v1642 = vsub.f32 2.0, %v1514
    %v1643 = vsub.f32 2.0, %v1515
    %v1644 = vsub.f32 2.0, %v1516
    %v1645 = vsub.f32 2.0, %v1517
    %v1646 = vsub.f32 2.0, %v1518
    %v1647 = vsub.f32 2.0, %v1519
    %v1648 = vsub.f32 2.0, %v1520
    %v1649 = vsub.f32 2.0, %v1521
    %v1650 = vsub.f32 2.0, %v1522
    %v1651 = vsub.f32 2.0, %v1523
    %v1652 = vsub.f32 2.0, %v1524
    %v1653 = vsub.f32 2.0, %v1525
    %v1654 = vsub.f32 2.0, %v1526
    %v1655 = vsub.f32 2.0, %v1527
    %v1656 = vsub.f32 2.0, %v1528
    %v1657 = vsub.f32 2.0, %v1529
    %v1658 = vsub.f32 2.0, %v1530
    %v1659 = vsub.f32 2.0, %v1531
    %v1660 = vsub.f32 2.0, %v1532
    %v1661 = vsub.f32 2.0, %v1533
    %v1662 = vsub.f32 2.0, %v1534
    %v1663 = vsub.f32 2.0, %v1535
    %v1664 = vsub.f32 2.0, %v1536
    %v1665 = vsub.f32 2.0, %v1537
    %v1666 = vsub.f32 2.0, %v1538
    %v1667 = vsub.f32 2.0, %v1539
    %v1668 = vsub.f32 2.0, %v1540
    %v1669 = vsub.f32 2.0, %v1541
    %v1670 = vsub.f32 2.0, %v1542
    %v1671 = vsub.f32 2.0, %v1543
    %v1672 = vsub.f32 2.0, %v1544
    %v1673 = vsub.f32 2.0, %v1545
    %v1674 = vsub.f32 2.0, %v1546
    %v1675 = vsub.f32 2.0, %v1547
    %v1676 = vsub.f32 2.0, %v1548
    %v1677 = vsub.f32 2.0, %v1549
    %v1678 = vsub.f32 2.0, %v1550
    %v1679 = vsub.f32 2.0, %v1551
    %v1680 = vsub.f32 2.0, %v1552
    %v1681 = vsub.f32 2.0, %v1553
    %v1682 = vsub.f32 2.0, %v1554
    %v1683 = vsub.f32 2.0, %v1555
    %v1684 = vsub.f32 2.0, %v1556
    %v1685 = vsub.f32 2.0, %v1557
    %v1686 = vsub.f32 2.0, %v1558
    %v1687 = vsub.f32 2.0, %v1559
    %v1688 = vsub.f32 2.0, %v1560
    %v1689 = vsub.f32 2.0, %v1561
    %v1690 = vsub.f32 2.0, %v1562
    %v1691 = vsub.f32 2.0, %v1563
    %v1692 = vsub.f32 2.0, %v1564
    %v1693 = vsub.f32 2.0, %v1565
    %v1694 = vsub.f32 2.0, %v1566
    %v1695 = vsub.f32 2.0, %v1567
    %v1696 = vsub.f32 2.0, %v1568
    %v1697 = vsub.f32 2.0, %v1569
    %v1698 = vsub.f32 2.0, %v1570
    %v1699 = vsub.f32 2.0, %v1571
    %v1700 = vsub.f32 2.0, %v1572
    %v1701 = vsub.f32 2.0, %v1573
    %v1702 = vsub.f32 2.0, %v1574
    %v1703 = vsub.f32 2.0, %v1575
    %v1704 = vsub.f32 2.0, %v1576
    %v1705 = vsub.f32 2.0, %v1577
    %v1706 = vsub.f32 2.0, %v1578
    %v1707 = vsub.f32 2.0, %v1579
    %v1708 = vsub.f32 2.0, %v1580
    %v1709 = vsub.f32 2.0, %v1581
    %v1710 = vsub.f32 2.0, %v1582
    %v1711 = vsub.f32 2.0, %v1583
    %v1712 = vsub.f32 2.0, %v1584
    %v1713 = vsub.f32 2.0, %v1585
    %v1714 = vsub.f32 2.0, %v1586
    %v1715 = vsub.f32 2.0, %v1587
    %v1716 = vsub.f32 2.0, %v1588
    %v1717 = vsub.f32 2.0, %v1589
    %v1718 = vsub.f32 2.0, %v1590
    %v1719 = vsub.f32 2.0, %v1591
    %v1720 = vsub.f32 2.0, %v1592
    %v1721 = vsub.f32 2.0, %v1593
    %v1722 = vsub.f32 2.0, %v1594
    %v1723 = vsub.f32 2.0, %v1595
    %v1724 = vsub.f32 2.0, %v1596
    %v1725 = vsub.f32 2.0, %v1597
    %v1726 = vsub.f32 2.0, %v1598
    %v1727 = vsub.f32 2.0, %v1599
    %v1728 = vsub.f32 2.0, %v1600
    %v1729 = vsub.f32 2.0, %v1601
    %v1730 = vsub.f32 2.0, %v1602
    %v1731 = vsub.f32 2.0, %v1603
    %v1732 = vsub.f32 2.0, %v1604
    %v1733 = vsub.f32 2.0, %v1605
    %v1734 = vsub.f32 2.0, %v1606
    %v1735 = vsub.f32 2.0, %v1607
    %v1736 = vsub.f32 2.0, %v1608
    %v1737 = vsub.f32 2.0, %v1609
    %v1738 = vsub.f32 2.0, %v1610
    %v1739 = vsub.f32 2.0, %v1611
    %v1740 = vsub.f32 2.0, %v1612
    %v1741 = vsub.f32 2.0, %v1613
    %v1742 = vsub.f32 2.0, %v1614
    %v1743 = vsub.f32 2.0, %v1615
    %v1744 = vsub.f32 2.0, %v1616
    %v1745 = vsub.f32 2.0, %v1617
    %v1746 = vsub.f32 2.0, %v1618
    %v1747 = vsub.f32 2.0, %v1619
    %v1748 = vmul.f32 %v1364, %v1620
    %v1749 = vmul.f32 %v1365, %v1621
    %v1750 = vmul.f32 %v1366, %v1622
    %v1751 = vmul.f32 %v1367, %v1623
    %v1752 = vmul.f32 %v1368, %v1624
    %v1753 = vmul.f32 %v1369, %v1625
    %v1754 = vmul.f32 %v1370, %v1626
    %v1755 = vmul.f32 %v1371, %v1627
    %v1756 = vmul.f32 %v1372, %v1628
    %v1757 = vmul.f32 %v1373, %v1629
    %v1758 = vmul.f32 %v1374, %v1630
    %v1759 = vmul.f32 %v1375, %v1631
    %v1760 = vmul.f32 %v1376, %v1632
    %v1761 = vmul.f32 %v1377, %v1633
    %v1762 = vmul.f32 %v1378, %v1634
    %v1763 = vmul.f32 %v1379, %v1635
    %v1764 = vmul.f32 %v1380, %v1636
    %v1765 = vmul.f32 %v1381, %v1637
    %v1766 = vmul.f32 %v1382, %v1638
    %v1767 = vmul.f32 %v1383, %v1639
    %v1768 = vmul.f32 %v1384, %v1640
    %v1769 = vmul.f32 %v1385, %v1641
    %v1770 = vmul.f32 %v1386, %v1642
    %v1771 = vmul.f32 %v1387, %v1643
    %v1772 = vmul.f32 %v1388, %v1644
    %v1773 = vmul.f32 %v1389, %v1645
    %v1774 = vmul.f32 %v1390, %v1646
    %v1775 = vmul.f32 %v1391, %v1647
    %v1776 = vmul.f32 %v1392, %v1648
    %v1777 = vmul.f32 %v1393, %v1649
    %v1778 = vmul.f32 %v1394, %v1650
    %v1779 = vmul.f32 %v1395, %v1651
    %v1780 = vmul.f32 %v1396, %v1652
    %v1781 = vmul.f32 %v1397, %v1653
    %v1782 = vmul.f32 %v1398, %v1654
    %v1783 = vmul.f32 %v1399, %v1655
    %v1784 = vmul.f32 %v1400, %v1656
    %v1785 = vmul.f32 %v1401, %v1657
    %v1786 = vmul.f32 %v1402, %v1658
    %v1787 = vmul.f32 %v1403, %v1659
    %v1788 = vmul.f32 %v1404, %v1660
    %v1789 = vmul.f32 %v1405, %v1661
    %v1790 = vmul.f32 %v1406, %v1662
    %v1791 = vmul.f32 %v1407, %v1663
    %v1792 = vmul.f32 %v1408, %v1664
    %v1793 = vmul.f32 %v1409, %v1665
    %v1794 = vmul.f32 %v1410, %v1666
    %v1795 = vmul.f32 %v1411, %v1667
    %v1796 = vmul.f32 %v1412, %v1668
    %v1797 = vmul.f32 %v1413, %v1669
    %v1798 = vmul.f32 %v1414, %v1670
    %v1799 = vmul.f32 %v1415, %v1671
    %v1800 = vmul.f32 %v1416, %v1672
    %v1801 = vmul.f32 %v1417, %v1673
    %v1802 = vmul.f32 %v1418, %v1674
    %v1803 = vmul.f32 %v1419, %v1675
    %v1804 = vmul.f32 %v1420, %v1676
    %v1805 = vmul.f32 %v1421, %v1677
    %v1806 = vmul.f32 %v1422, %v1678
    %v1807 = vmul.f32 %v1423, %v1679
    %v1808 = vmul.f32 %v1424, %v1680
    %v1809 = vmul.f32 %v1425, %v1681
    %v1810 = vmul.f32 %v1426, %v1682
    %v1811 = vmul.f32 %v1427, %v1683
    %v1812 = vmul.f32 %v1428, %v1684
    %v1813 = vmul.f32 %v1429, %v1685
    %v1814 = vmul.f32 %v1430, %v1686
    %v1815 = vmul.f32 %v1431, %v1687
    %v1816 = vmul.f32 %v1432, %v1688
    %v1817 = vmul.f32 %v1433, %v1689
    %v1818 = vmul.f32 %v1434, %v1690
    %v1819 = vmul.f32 %v1435, %v1691
    %v1820 = vmul.f32 %v1436, %v1692
    %v1821 = vmul.f32 %v1437, %v1693
    %v1822 = vmul.f32 %v1438, %v1694
    %v1823 = vmul.f32 %v1439, %v1695
    %v1824 = vmul.f32 %v1440, %v1696
    %v1825 = vmul.f32 %v1441, %v1697
    %v1826 = vmul.f32 %v1442, %v1698
    %v1827 = vmul.f32 %v1443, %v1699
    %v1828 = vmul.f32 %v1444, %v1700
    %v1829 = vmul.f32 %v1445, %v1701
    %v1830 = vmul.f32 %v1446, %v1702
    %v1831 = vmul.f32 %v1447, %v1703
    %v1832 = vmul.f32 %v1448, %v1704
    %v1833 = vmul.f32 %v1449, %v1705
    %v1834 = vmul.f32 %v1450, %v1706
    %v1835 = vmul.f32 %v1451, %v1707
    %v1836 = vmul.f32 %v1452, %v1708
    %v1837 = vmul.f32 %v1453, %v1709
    %v1838 = vmul.f32 %v1454, %v1710
    %v1839 = vmul.f32 %v1455, %v1711
    %v1840 = vmul.f32 %v1456, %v1712
    %v1841 = vmul.f32 %v1457, %v1713
    %v1842 = vmul.f32 %v1458, %v1714
    %v1843 = vmul.f32 %v1459, %v1715
    %v1844 = vmul.f32 %v1460, %v1716
    %v1845 = vmul.f32 %v1461, %v1717
    %v1846 = vmul.f32 %v1462, %v1718
    %v1847 = vmul.f32 %v1463, %v1719
    %v1848 = vmul.f32 %v1464, %v1720
    %v1849 = vmul.f32 %v1465, %v1721
    %v1850 = vmul.f32 %v1466, %v1722
    %v1851 = vmul.f32 %v1467, %v1723
    %v1852 = vmul.f32 %v1468, %v1724
    %v1853 = vmul.f32 %v1469, %v1725
    %v1854 = vmul.f32 %v1470, %v1726
    %v1855 = vmul.f32 %v1471, %v1727
    %v1856 = vmul.f32 %v1472, %v1728
    %v1857 = vmul.f32 %v1473, %v1729
    %v1858 = vmul.f32 %v1474, %v1730
    %v1859 = vmul.f32 %v1475, %v1731
    %v1860 = vmul.f32 %v1476, %v1732
    %v1861 = vmul.f32 %v1477, %v1733
    %v1862 = vmul.f32 %v1478, %v1734
    %v1863 = vmul.f32 %v1479, %v1735
    %v1864 = vmul.f32 %v1480, %v1736
    %v1865 = vmul.f32 %v1481, %v1737
    %v1866 = vmul.f32 %v1482, %v1738
    %v1867 = vmul.f32 %v1483, %v1739
    %v1868 = vmul.f32 %v1484, %v1740
    %v1869 = vmul.f32 %v1485, %v1741
    %v1870 = vmul.f32 %v1486, %v1742
    %v1871 = vmul.f32 %v1487, %v1743
    %v1872 = vmul.f32 %v1488, %v1744
    %v1873 = vmul.f32 %v1489, %v1745
    %v1874 = vmul.f32 %v1490, %v1746
    %v1875 = vmul.f32 %v1491, %v1747
    %v1876 = vmul.f32 %v1748, 1.0614054
    %v1877 = vmul.f32 %v1749, 1.0614054
    %v1878 = vmul.f32 %v1750, 1.0614054
    %v1879 = vmul.f32 %v1751, 1.0614054
    %v1880 = vmul.f32 %v1752, 1.0614054
    %v1881 = vmul.f32 %v1753, 1.0614054
    %v1882 = vmul.f32 %v1754, 1.0614054
    %v1883 = vmul.f32 %v1755, 1.0614054
    %v1884 = vmul.f32 %v1756, 1.0614054
    %v1885 = vmul.f32 %v1757, 1.0614054
    %v1886 = vmul.f32 %v1758, 1.0614054
    %v1887 = vmul.f32 %v1759, 1.0614054
    %v1888 = vmul.f32 %v1760, 1.0614054
    %v1889 = vmul.f32 %v1761, 1.0614054
    %v1890 = vmul.f32 %v1762, 1.0614054
    %v1891 = vmul.f32 %v1763, 1.0614054
    %v1892 = vmul.f32 %v1764, 1.0614054
    %v1893 = vmul.f32 %v1765, 1.0614054
    %v1894 = vmul.f32 %v1766, 1.0614054
    %v1895 = vmul.f32 %v1767, 1.0614054
    %v1896 = vmul.f32 %v1768, 1.0614054
    %v1897 = vmul.f32 %v1769, 1.0614054
    %v1898 = vmul.f32 %v1770, 1.0614054
    %v1899 = vmul.f32 %v1771, 1.0614054
    %v1900 = vmul.f32 %v1772, 1.0614054
    %v1901 = vmul.f32 %v1773, 1.0614054
    %v1902 = vmul.f32 %v1774, 1.0614054
    %v1903 = vmul.f32 %v1775, 1.0614054
    %v1904 = vmul.f32 %v1776, 1.0614054
    %v1905 = vmul.f32 %v1777, 1.0614054
    %v1906 = vmul.f32 %v1778, 1.0614054
    %v1907 = vmul.f32 %v1779, 1.0614054
    %v1908 = vmul.f32 %v1780, 1.0614054
    %v1909 = vmul.f32 %v1781, 1.0614054
    %v1910 = vmul.f32 %v1782, 1.0614054
    %v1911 = vmul.f32 %v1783, 1.0614054
    %v1912 = vmul.f32 %v1784, 1.0614054
    %v1913 = vmul.f32 %v1785, 1.0614054
    %v1914 = vmul.f32 %v1786, 1.0614054
    %v1915 = vmul.f32 %v1787, 1.0614054
    %v1916 = vmul.f32 %v1788, 1.0614054
    %v1917 = vmul.f32 %v1789, 1.0614054
    %v1918 = vmul.f32 %v1790, 1.0614054
    %v1919 = vmul.f32 %v1791, 1.0614054
    %v1920 = vmul.f32 %v1792, 1.0614054
    %v1921 = vmul.f32 %v1793, 1.0614054
    %v1922 = vmul.f32 %v1794, 1.0614054
    %v1923 = vmul.f32 %v1795, 1.0614054
    %v1924 = vmul.f32 %v1796, 1.0614054
    %v1925 = vmul.f32 %v1797, 1.0614054
    %v1926 = vmul.f32 %v1798, 1.0614054
    %v1927 = vmul.f32 %v1799, 1.0614054
    %v1928 = vmul.f32 %v1800, 1.0614054
    %v1929 = vmul.f32 %v1801, 1.0614054
    %v1930 = vmul.f32 %v1802, 1.0614054
    %v1931 = vmul.f32 %v1803, 1.0614054
    %v1932 = vmul.f32 %v1804, 1.0614054
    %v1933 = vmul.f32 %v1805, 1.0614054
    %v1934 = vmul.f32 %v1806, 1.0614054
    %v1935 = vmul.f32 %v1807, 1.0614054
    %v1936 = vmul.f32 %v1808, 1.0614054
    %v1937 = vmul.f32 %v1809, 1.0614054
    %v1938 = vmul.f32 %v1810, 1.0614054
    %v1939 = vmul.f32 %v1811, 1.0614054
    %v1940 = vmul.f32 %v1812, 1.0614054
    %v1941 = vmul.f32 %v1813, 1.0614054
    %v1942 = vmul.f32 %v1814, 1.0614054
    %v1943 = vmul.f32 %v1815, 1.0614054
    %v1944 = vmul.f32 %v1816, 1.0614054
    %v1945 = vmul.f32 %v1817, 1.0614054
    %v1946 = vmul.f32 %v1818, 1.0614054
    %v1947 = vmul.f32 %v1819, 1.0614054
    %v1948 = vmul.f32 %v1820, 1.0614054
    %v1949 = vmul.f32 %v1821, 1.0614054
    %v1950 = vmul.f32 %v1822, 1.0614054
    %v1951 = vmul.f32 %v1823, 1.0614054
    %v1952 = vmul.f32 %v1824, 1.0614054
    %v1953 = vmul.f32 %v1825, 1.0614054
    %v1954 = vmul.f32 %v1826, 1.0614054
    %v1955 = vmul.f32 %v1827, 1.0614054
    %v1956 = vmul.f32 %v1828, 1.0614054
    %v1957 = vmul.f32 %v1829, 1.0614054
    %v1958 = vmul.f32 %v1830, 1.0614054
    %v1959 = vmul.f32 %v1831, 1.0614054
    %v1960 = vmul.f32 %v1832, 1.0614054
    %v1961 = vmul.f32 %v1833, 1.0614054
    %v1962 = vmul.f32 %v1834, 1.0614054
    %v1963 = vmul.f32 %v1835, 1.0614054
    %v1964 = vmul.f32 %v1836, 1.0614054
    %v1965 = vmul.f32 %v1837, 1.0614054
    %v1966 = vmul.f32 %v1838, 1.0614054
    %v1967 = vmul.f32 %v1839, 1.0614054
    %v1968 = vmul.f32 %v1840, 1.0614054
    %v1969 = vmul.f32 %v1841, 1.0614054
    %v1970 = vmul.f32 %v1842, 1.0614054
    %v1971 = vmul.f32 %v1843, 1.0614054
    %v1972 = vmul.f32 %v1844, 1.0614054
    %v1973 = vmul.f32 %v1845, 1.0614054
    %v1974 = vmul.f32 %v1846, 1.0614054
    %v1975 = vmul.f32 %v1847, 1.0614054
    %v1976 = vmul.f32 %v1848, 1.0614054
    %v1977 = vmul.f32 %v1849, 1.0614054
    %v1978 = vmul.f32 %v1850, 1.0614054
    %v1979 = vmul.f32 %v1851, 1.0614054
    %v1980 = vmul.f32 %v1852, 1.0614054
    %v1981 = vmul.f32 %v1853, 1.0614054
    %v1982 = vmul.f32 %v1854, 1.0614054
    %v1983 = vmul.f32 %v1855, 1.0614054
    %v1984 = vmul.f32 %v1856, 1.0614054
    %v1985 = vmul.f32 %v1857, 1.0614054
    %v1986 = vmul.f32 %v1858, 1.0614054
    %v1987 = vmul.f32 %v1859, 1.0614054
    %v1988 = vmul.f32 %v1860, 1.0614054
    %v1989 = vmul.f32 %v1861, 1.0614054
    %v1990 = vmul.f32 %v1862, 1.0614054
    %v1991 = vmul.f32 %v1863, 1.0614054
    %v1992 = vmul.f32 %v1864, 1.0614054
    %v1993 = vmul.f32 %v1865, 1.0614054
    %v1994 = vmul.f32 %v1866, 1.0614054
    %v1995 = vmul.f32 %v1867, 1.0614054
    %v1996 = vmul.f32 %v1868, 1.0614054
    %v1997 = vmul.f32 %v1869, 1.0614054
    %v1998 = vmul.f32 %v1870, 1.0614054
    %v1999 = vmul.f32 %v1871, 1.0614054
    %v2000 = vmul.f32 %v1872, 1.0614054
    %v2001 = vmul.f32 %v1873, 1.0614054
    %v2002 = vmul.f32 %v1874, 1.0614054
    %v2003 = vmul.f32 %v1875, 1.0614054
    %v2004 = vadd.f32 %v1876, -1.4531521
    %v2005 = vadd.f32 %v1877, -1.4531521
    %v2006 = vadd.f32 %v1878, -1.4531521
    %v2007 = vadd.f32 %v1879, -1.4531521
    %v2008 = vadd.f32 %v1880, -1.4531521
    %v2009 = vadd.f32 %v1881, -1.4531521
    %v2010 = vadd.f32 %v1882, -1.4531521
    %v2011 = vadd.f32 %v1883, -1.4531521
    %v2012 = vadd.f32 %v1884, -1.4531521
    %v2013 = vadd.f32 %v1885, -1.4531521
    %v2014 = vadd.f32 %v1886, -1.4531521
    %v2015 = vadd.f32 %v1887, -1.4531521
    %v2016 = vadd.f32 %v1888, -1.4531521
    %v2017 = vadd.f32 %v1889, -1.4531521
    %v2018 = vadd.f32 %v1890, -1.4531521
    %v2019 = vadd.f32 %v1891, -1.4531521
    %v2020 = vadd.f32 %v1892, -1.4531521
    %v2021 = vadd.f32 %v1893, -1.4531521
    %v2022 = vadd.f32 %v1894, -1.4531521
    %v2023 = vadd.f32 %v1895, -1.4531521
    %v2024 = vadd.f32 %v1896, -1.4531521
    %v2025 = vadd.f32 %v1897, -1.4531521
    %v2026 = vadd.f32 %v1898, -1.4531521
    %v2027 = vadd.f32 %v1899, -1.4531521
    %v2028 = vadd.f32 %v1900, -1.4531521
    %v2029 = vadd.f32 %v1901, -1.4531521
    %v2030 = vadd.f32 %v1902, -1.4531521
    %v2031 = vadd.f32 %v1903, -1.4531521
    %v2032 = vadd.f32 %v1904, -1.4531521
    %v2033 = vadd.f32 %v1905, -1.4531521
    %v2034 = vadd.f32 %v1906, -1.4531521
    %v2035 = vadd.f32 %v1907, -1.4531521
    %v2036 = vadd.f32 %v1908, -1.4531521
    %v2037 = vadd.f32 %v1909, -1.4531521
    %v2038 = vadd.f32 %v1910, -1.4531521
    %v2039 = vadd.f32 %v1911, -1.4531521
    %v2040 = vadd.f32 %v1912, -1.4531521
    %v2041 = vadd.f32 %v1913, -1.4531521
    %v2042 = vadd.f32 %v1914, -1.4531521
    %v2043 = vadd.f32 %v1915, -1.4531521
    %v2044 = vadd.f32 %v1916, -1.4531521
    %v2045 = vadd.f32 %v1917, -1.4531521
    %v2046 = vadd.f32 %v1918, -1.4531521
    %v2047 = vadd.f32 %v1919, -1.4531521
    %v2048 = vadd.f32 %v1920, -1.4531521
    %v2049 = vadd.f32 %v1921, -1.4531521
    %v2050 = vadd.f32 %v1922, -1.4531521
    %v2051 = vadd.f32 %v1923, -1.4531521
    %v2052 = vadd.f32 %v1924, -1.4531521
    %v2053 = vadd.f32 %v1925, -1.4531521
    %v2054 = vadd.f32 %v1926, -1.4531521
    %v2055 = vadd.f32 %v1927, -1.4531521
    %v2056 = vadd.f32 %v1928, -1.4531521
    %v2057 = vadd.f32 %v1929, -1.4531521
    %v2058 = vadd.f32 %v1930, -1.4531521
    %v2059 = vadd.f32 %v1931, -1.4531521
    %v2060 = vadd.f32 %v1932, -1.4531521
    %v2061 = vadd.f32 %v1933, -1.4531521
    %v2062 = vadd.f32 %v1934, -1.4531521
    %v2063 = vadd.f32 %v1935, -1.4531521
    %v2064 = vadd.f32 %v1936, -1.4531521
    %v2065 = vadd.f32 %v1937, -1.4531521
    %v2066 = vadd.f32 %v1938, -1.4531521
    %v2067 = vadd.f32 %v1939, -1.4531521
    %v2068 = vadd.f32 %v1940, -1.4531521
    %v2069 = vadd.f32 %v1941, -1.4531521
    %v2070 = vadd.f32 %v1942, -1.4531521
    %v2071 = vadd.f32 %v1943, -1.4531521
    %v2072 = vadd.f32 %v1944, -1.4531521
    %v2073 = vadd.f32 %v1945, -1.4531521
    %v2074 = vadd.f32 %v1946, -1.4531521
    %v2075 = vadd.f32 %v1947, -1.4531521
    %v2076 = vadd.f32 %v1948, -1.4531521
    %v2077 = vadd.f32 %v1949, -1.4531521
    %v2078 = vadd.f32 %v1950, -1.4531521
    %v2079 = vadd.f32 %v1951, -1.4531521
    %v2080 = vadd.f32 %v1952, -1.4531521
    %v2081 = vadd.f32 %v1953, -1.4531521
    %v2082 = vadd.f32 %v1954, -1.4531521
    %v2083 = vadd.f32 %v1955, -1.4531521
    %v2084 = vadd.f32 %v1956, -1.4531521
    %v2085 = vadd.f32 %v1957, -1.4531521
    %v2086 = vadd.f32 %v1958, -1.4531521
    %v2087 = vadd.f32 %v1959, -1.4531521
    %v2088 = vadd.f32 %v1960, -1.4531521
    %v2089 = vadd.f32 %v1961, -1.4531521
    %v2090 = vadd.f32 %v1962, -1.4531521
    %v2091 = vadd.f32 %v1963, -1.4531521
    %v2092 = vadd.f32 %v1964, -1.4531521
    %v2093 = vadd.f32 %v1965, -1.4531521
    %v2094 = vadd.f32 %v1966, -1.4531521
    %v2095 = vadd.f32 %v1967, -1.4531521
    %v2096 = vadd.f32 %v1968, -1.4531521
    %v2097 = vadd.f32 %v1969, -1.4531521
    %v2098 = vadd.f32 %v1970, -1.4531521
    %v2099 = vadd.f32 %v1971, -1.4531521
    %v2100 = vadd.f32 %v1972, -1.4531521
    %v2101 = vadd.f32 %v1973, -1.4531521
    %v2102 = vadd.f32 %v1974, -1.4531521
    %v2103 = vadd.f32 %v1975, -1.4531521
    %v2104 = vadd.f32 %v1976, -1.4531521
    %v2105 = vadd.f32 %v1977, -1.4531521
    %v2106 = vadd.f32 %v1978, -1.4531521
    %v2107 = vadd.f32 %v1979, -1.4531521
    %v2108 = vadd.f32 %v1980, -1.4531521
    %v2109 = vadd.f32 %v1981, -1.4531521
    %v2110 = vadd.f32 %v1982, -1.4531521
    %v2111 = vadd.f32 %v1983, -1.4531521
    %v2112 = vadd.f32 %v1984, -1.4531521
    %v2113 = vadd.f32 %v1985, -1.4531521
    %v2114 = vadd.f32 %v1986, -1.4531521
    %v2115 = vadd.f32 %v1987, -1.4531521
    %v2116 = vadd.f32 %v1988, -1.4531521
    %v2117 = vadd.f32 %v1989, -1.4531521
    %v2118 = vadd.f32 %v1990, -1.4531521
    %v2119 = vadd.f32 %v1991, -1.4531521
    %v2120 = vadd.f32 %v1992, -1.4531521
    %v2121 = vadd.f32 %v1993, -1.4531521
    %v2122 = vadd.f32 %v1994, -1.4531521
    %v2123 = vadd.f32 %v1995, -1.4531521
    %v2124 = vadd.f32 %v1996, -1.4531521
    %v2125 = vadd.f32 %v1997, -1.4531521
    %v2126 = vadd.f32 %v1998, -1.4531521
    %v2127 = vadd.f32 %v1999, -1.4531521
    %v2128 = vadd.f32 %v2000, -1.4531521
    %v2129 = vadd.f32 %v2001, -1.4531521
    %v2130 = vadd.f32 %v2002, -1.4531521
    %v2131 = vadd.f32 %v2003, -1.4531521
    %v2132 = vmul.f32 %v2004, %v1748
    %v2133 = vmul.f32 %v2005, %v1749
    %v2134 = vmul.f32 %v2006, %v1750
    %v2135 = vmul.f32 %v2007, %v1751
    %v2136 = vmul.f32 %v2008, %v1752
    %v2137 = vmul.f32 %v2009, %v1753
    %v2138 = vmul.f32 %v2010, %v1754
    %v2139 = vmul.f32 %v2011, %v1755
    %v2140 = vmul.f32 %v2012, %v1756
    %v2141 = vmul.f32 %v2013, %v1757
    %v2142 = vmul.f32 %v2014, %v1758
    %v2143 = vmul.f32 %v2015, %v1759
    %v2144 = vmul.f32 %v2016, %v1760
    %v2145 = vmul.f32 %v2017, %v1761
    %v2146 = vmul.f32 %v2018, %v1762
    %v2147 = vmul.f32 %v2019, %v1763
    %v2148 = vmul.f32 %v2020, %v1764
    %v2149 = vmul.f32 %v2021, %v1765
    %v2150 = vmul.f32 %v2022, %v1766
    %v2151 = vmul.f32 %v2023, %v1767
    %v2152 = vmul.f32 %v2024, %v1768
    %v2153 = vmul.f32 %v2025, %v1769
    %v2154 = vmul.f32 %v2026, %v1770
    %v2155 = vmul.f32 %v2027, %v1771
    %v2156 = vmul.f32 %v2028, %v1772
    %v2157 = vmul.f32 %v2029, %v1773
    %v2158 = vmul.f32 %v2030, %v1774
    %v2159 = vmul.f32 %v2031, %v1775
    %v2160 = vmul.f32 %v2032, %v1776
    %v2161 = vmul.f32 %v2033, %v1777
    %v2162 = vmul.f32 %v2034, %v1778
    %v2163 = vmul.f32 %v2035, %v1779
    %v2164 = vmul.f32 %v2036, %v1780
    %v2165 = vmul.f32 %v2037, %v1781
    %v2166 = vmul.f32 %v2038, %v1782
    %v2167 = vmul.f32 %v2039, %v1783
    %v2168 = vmul.f32 %v2040, %v1784
    %v2169 = vmul.f32 %v2041, %v1785
    %v2170 = vmul.f32 %v2042, %v1786
    %v2171 = vmul.f32 %v2043, %v1787
    %v2172 = vmul.f32 %v2044, %v1788
    %v2173 = vmul.f32 %v2045, %v1789
    %v2174 = vmul.f32 %v2046, %v1790
    %v2175 = vmul.f32 %v2047, %v1791
    %v2176 = vmul.f32 %v2048, %v1792
    %v2177 = vmul.f32 %v2049, %v1793
    %v2178 = vmul.f32 %v2050, %v1794
    %v2179 = vmul.f32 %v2051, %v1795
    %v2180 = vmul.f32 %v2052, %v1796
    %v2181 = vmul.f32 %v2053, %v1797
    %v2182 = vmul.f32 %v2054, %v1798
    %v2183 = vmul.f32 %v2055, %v1799
    %v2184 = vmul.f32 %v2056, %v1800
    %v2185 = vmul.f32 %v2057, %v1801
    %v2186 = vmul.f32 %v2058, %v1802
    %v2187 = vmul.f32 %v2059, %v1803
    %v2188 = vmul.f32 %v2060, %v1804
    %v2189 = vmul.f32 %v2061, %v1805
    %v2190 = vmul.f32 %v2062, %v1806
    %v2191 = vmul.f32 %v2063, %v1807
    %v2192 = vmul.f32 %v2064, %v1808
    %v2193 = vmul.f32 %v2065, %v1809
    %v2194 = vmul.f32 %v2066, %v1810
    %v2195 = vmul.f32 %v2067, %v1811
    %v2196 = vmul.f32 %v2068, %v1812
    %v2197 = vmul.f32 %v2069, %v1813
    %v2198 = vmul.f32 %v2070, %v1814
    %v2199 = vmul.f32 %v2071, %v1815
    %v2200 = vmul.f32 %v2072, %v1816
    %v2201 = vmul.f32 %v2073, %v1817
    %v2202 = vmul.f32 %v2074, %v1818
    %v2203 = vmul.f32 %v2075, %v1819
    %v2204 = vmul.f32 %v2076, %v1820
    %v2205 = vmul.f32 %v2077, %v1821
    %v2206 = vmul.f32 %v2078, %v1822
    %v2207 = vmul.f32 %v2079, %v1823
    %v2208 = vmul.f32 %v2080, %v1824
    %v2209 = vmul.f32 %v2081, %v1825
    %v2210 = vmul.f32 %v2082, %v1826
    %v2211 = vmul.f32 %v2083, %v1827
    %v2212 = vmul.f32 %v2084, %v1828
    %v2213 = vmul.f32 %v2085, %v1829
    %v2214 = vmul.f32 %v2086, %v1830
    %v2215 = vmul.f32 %v2087, %v1831
    %v2216 = vmul.f32 %v2088, %v1832
    %v2217 = vmul.f32 %v2089, %v1833
    %v2218 = vmul.f32 %v2090, %v1834
    %v2219 = vmul.f32 %v2091, %v1835
    %v2220 = vmul.f32 %v2092, %v1836
    %v2221 = vmul.f32 %v2093, %v1837
    %v2222 = vmul.f32 %v2094, %v1838
    %v2223 = vmul.f32 %v2095, %v1839
    %v2224 = vmul.f32 %v2096, %v1840
    %v2225 = vmul.f32 %v2097, %v1841
    %v2226 = vmul.f32 %v2098, %v1842
    %v2227 = vmul.f32 %v2099, %v1843
    %v2228 = vmul.f32 %v2100, %v1844
    %v2229 = vmul.f32 %v2101, %v1845
    %v2230 = vmul.f32 %v2102, %v1846
    %v2231 = vmul.f32 %v2103, %v1847
    %v2232 = vmul.f32 %v2104, %v1848
    %v2233 = vmul.f32 %v2105, %v1849
    %v2234 = vmul.f32 %v2106, %v1850
    %v2235 = vmul.f32 %v2107, %v1851
    %v2236 = vmul.f32 %v2108, %v1852
    %v2237 = vmul.f32 %v2109, %v1853
    %v2238 = vmul.f32 %v2110, %v1854
    %v2239 = vmul.f32 %v2111, %v1855
    %v2240 = vmul.f32 %v2112, %v1856
    %v2241 = vmul.f32 %v2113, %v1857
    %v2242 = vmul.f32 %v2114, %v1858
    %v2243 = vmul.f32 %v2115, %v1859
    %v2244 = vmul.f32 %v2116, %v1860
    %v2245 = vmul.f32 %v2117, %v1861
    %v2246 = vmul.f32 %v2118, %v1862
    %v2247 = vmul.f32 %v2119, %v1863
    %v2248 = vmul.f32 %v2120, %v1864
    %v2249 = vmul.f32 %v2121, %v1865
    %v2250 = vmul.f32 %v2122, %v1866
    %v2251 = vmul.f32 %v2123, %v1867
    %v2252 = vmul.f32 %v2124, %v1868
    %v2253 = vmul.f32 %v2125, %v1869
    %v2254 = vmul.f32 %v2126, %v1870
    %v2255 = vmul.f32 %v2127, %v1871
    %v2256 = vmul.f32 %v2128, %v1872
    %v2257 = vmul.f32 %v2129, %v1873
    %v2258 = vmul.f32 %v2130, %v1874
    %v2259 = vmul.f32 %v2131, %v1875
    %v2260 = vadd.f32 %v2132, 1.4214138
    %v2261 = vadd.f32 %v2133, 1.4214138
    %v2262 = vadd.f32 %v2134, 1.4214138
    %v2263 = vadd.f32 %v2135, 1.4214138
    %v2264 = vadd.f32 %v2136, 1.4214138
    %v2265 = vadd.f32 %v2137, 1.4214138
    %v2266 = vadd.f32 %v2138, 1.4214138
    %v2267 = vadd.f32 %v2139, 1.4214138
    %v2268 = vadd.f32 %v2140, 1.4214138
    %v2269 = vadd.f32 %v2141, 1.4214138
    %v2270 = vadd.f32 %v2142, 1.4214138
    %v2271 = vadd.f32 %v2143, 1.4214138
    %v2272 = vadd.f32 %v2144, 1.4214138
    %v2273 = vadd.f32 %v2145, 1.4214138
    %v2274 = vadd.f32 %v2146, 1.4214138
    %v2275 = vadd.f32 %v2147, 1.4214138
    %v2276 = vadd.f32 %v2148, 1.4214138
    %v2277 = vadd.f32 %v2149, 1.4214138
    %v2278 = vadd.f32 %v2150, 1.4214138
    %v2279 = vadd.f32 %v2151, 1.4214138
    %v2280 = vadd.f32 %v2152, 1.4214138
    %v2281 = vadd.f32 %v2153, 1.4214138
    %v2282 = vadd.f32 %v2154, 1.4214138
    %v2283 = vadd.f32 %v2155, 1.4214138
    %v2284 = vadd.f32 %v2156, 1.4214138
    %v2285 = vadd.f32 %v2157, 1.4214138
    %v2286 = vadd.f32 %v2158, 1.4214138
    %v2287 = vadd.f32 %v2159, 1.4214138
    %v2288 = vadd.f32 %v2160, 1.4214138
    %v2289 = vadd.f32 %v2161, 1.4214138
    %v2290 = vadd.f32 %v2162, 1.4214138
    %v2291 = vadd.f32 %v2163, 1.4214138
    %v2292 = vadd.f32 %v2164, 1.4214138
    %v2293 = vadd.f32 %v2165, 1.4214138
    %v2294 = vadd.f32 %v2166, 1.4214138
    %v2295 = vadd.f32 %v2167, 1.4214138
    %v2296 = vadd.f32 %v2168, 1.4214138
    %v2297 = vadd.f32 %v2169, 1.4214138
    %v2298 = vadd.f32 %v2170, 1.4214138
    %v2299 = vadd.f32 %v2171, 1.4214138
    %v2300 = vadd.f32 %v2172, 1.4214138
    %v2301 = vadd.f32 %v2173, 1.4214138
    %v2302 = vadd.f32 %v2174, 1.4214138
    %v2303 = vadd.f32 %v2175, 1.4214138
    %v2304 = vadd.f32 %v2176, 1.4214138
    %v2305 = vadd.f32 %v2177, 1.4214138
    %v2306 = vadd.f32 %v2178, 1.4214138
    %v2307 = vadd.f32 %v2179, 1.4214138
    %v2308 = vadd.f32 %v2180, 1.4214138
    %v2309 = vadd.f32 %v2181, 1.4214138
    %v2310 = vadd.f32 %v2182, 1.4214138
    %v2311 = vadd.f32 %v2183, 1.4214138
    %v2312 = vadd.f32 %v2184, 1.4214138
    %v2313 = vadd.f32 %v2185, 1.4214138
    %v2314 = vadd.f32 %v2186, 1.4214138
    %v2315 = vadd.f32 %v2187, 1.4214138
    %v2316 = vadd.f32 %v2188, 1.4214138
    %v2317 = vadd.f32 %v2189, 1.4214138
    %v2318 = vadd.f32 %v2190, 1.4214138
    %v2319 = vadd.f32 %v2191, 1.4214138
    %v2320 = vadd.f32 %v2192, 1.4214138
    %v2321 = vadd.f32 %v2193, 1.4214138
    %v2322 = vadd.f32 %v2194, 1.4214138
    %v2323 = vadd.f32 %v2195, 1.4214138
    %v2324 = vadd.f32 %v2196, 1.4214138
    %v2325 = vadd.f32 %v2197, 1.4214138
    %v2326 = vadd.f32 %v2198, 1.4214138
    %v2327 = vadd.f32 %v2199, 1.4214138
    %v2328 = vadd.f32 %v2200, 1.4214138
    %v2329 = vadd.f32 %v2201, 1.4214138
    %v2330 = vadd.f32 %v2202, 1.4214138
    %v2331 = vadd.f32 %v2203, 1.4214138
    %v2332 = vadd.f32 %v2204, 1.4214138
    %v2333 = vadd.f32 %v2205, 1.4214138
    %v2334 = vadd.f32 %v2206, 1.4214138
    %v2335 = vadd.f32 %v2207, 1.4214138
    %v2336 = vadd.f32 %v2208, 1.4214138
    %v2337 = vadd.f32 %v2209, 1.4214138
    %v2338 = vadd.f32 %v2210, 1.4214138
    %v2339 = vadd.f32 %v2211, 1.4214138
    %v2340 = vadd.f32 %v2212, 1.4214138
    %v2341 = vadd.f32 %v2213, 1.4214138
    %v2342 = vadd.f32 %v2214, 1.4214138
    %v2343 = vadd.f32 %v2215, 1.4214138
    %v2344 = vadd.f32 %v2216, 1.4214138
    %v2345 = vadd.f32 %v2217, 1.4214138
    %v2346 = vadd.f32 %v2218, 1.4214138
    %v2347 = vadd.f32 %v2219, 1.4214138
    %v2348 = vadd.f32 %v2220, 1.4214138
    %v2349 = vadd.f32 %v2221, 1.4214138
    %v2350 = vadd.f32 %v2222, 1.4214138
    %v2351 = vadd.f32 %v2223, 1.4214138
    %v2352 = vadd.f32 %v2224, 1.4214138
    %v2353 = vadd.f32 %v2225, 1.4214138
    %v2354 = vadd.f32 %v2226, 1.4214138
    %v2355 = vadd.f32 %v2227, 1.4214138
    %v2356 = vadd.f32 %v2228, 1.4214138
    %v2357 = vadd.f32 %v2229, 1.4214138
    %v2358 = vadd.f32 %v2230, 1.4214138
    %v2359 = vadd.f32 %v2231, 1.4214138
    %v2360 = vadd.f32 %v2232, 1.4214138
    %v2361 = vadd.f32 %v2233, 1.4214138
    %v2362 = vadd.f32 %v2234, 1.4214138
    %v2363 = vadd.f32 %v2235, 1.4214138
    %v2364 = vadd.f32 %v2236, 1.4214138
    %v2365 = vadd.f32 %v2237, 1.4214138
    %v2366 = vadd.f32 %v2238, 1.4214138
    %v2367 = vadd.f32 %v2239, 1.4214138
    %v2368 = vadd.f32 %v2240, 1.4214138
    %v2369 = vadd.f32 %v2241, 1.4214138
    %v2370 = vadd.f32 %v2242, 1.4214138
    %v2371 = vadd.f32 %v2243, 1.4214138
    %v2372 = vadd.f32 %v2244, 1.4214138
    %v2373 = vadd.f32 %v2245, 1.4214138
    %v2374 = vadd.f32 %v2246, 1.4214138
    %v2375 = vadd.f32 %v2247, 1.4214138
    %v2376 = vadd.f32 %v2248, 1.4214138
    %v2377 = vadd.f32 %v2249, 1.4214138
    %v2378 = vadd.f32 %v2250, 1.4214138
    %v2379 = vadd.f32 %v2251, 1.4214138
    %v2380 = vadd.f32 %v2252, 1.4214138
    %v2381 = vadd.f32 %v2253, 1.4214138
    %v2382 = vadd.f32 %v2254, 1.4214138
    %v2383 = vadd.f32 %v2255, 1.4214138
    %v2384 = vadd.f32 %v2256, 1.4214138
    %v2385 = vadd.f32 %v2257, 1.4214138
    %v2386 = vadd.f32 %v2258, 1.4214138
    %v2387 = vadd.f32 %v2259, 1.4214138
    %v2388 = vmul.f32 %v2260, %v1748
    %v2389 = vmul.f32 %v2261, %v1749
    %v2390 = vmul.f32 %v2262, %v1750
    %v2391 = vmul.f32 %v2263, %v1751
    %v2392 = vmul.f32 %v2264, %v1752
    %v2393 = vmul.f32 %v2265, %v1753
    %v2394 = vmul.f32 %v2266, %v1754
    %v2395 = vmul.f32 %v2267, %v1755
    %v2396 = vmul.f32 %v2268, %v1756
    %v2397 = vmul.f32 %v2269, %v1757
    %v2398 = vmul.f32 %v2270, %v1758
    %v2399 = vmul.f32 %v2271, %v1759
    %v2400 = vmul.f32 %v2272, %v1760
    %v2401 = vmul.f32 %v2273, %v1761
    %v2402 = vmul.f32 %v2274, %v1762
    %v2403 = vmul.f32 %v2275, %v1763
    %v2404 = vmul.f32 %v2276, %v1764
    %v2405 = vmul.f32 %v2277, %v1765
    %v2406 = vmul.f32 %v2278, %v1766
    %v2407 = vmul.f32 %v2279, %v1767
    %v2408 = vmul.f32 %v2280, %v1768
    %v2409 = vmul.f32 %v2281, %v1769
    %v2410 = vmul.f32 %v2282, %v1770
    %v2411 = vmul.f32 %v2283, %v1771
    %v2412 = vmul.f32 %v2284, %v1772
    %v2413 = vmul.f32 %v2285, %v1773
    %v2414 = vmul.f32 %v2286, %v1774
    %v2415 = vmul.f32 %v2287, %v1775
    %v2416 = vmul.f32 %v2288, %v1776
    %v2417 = vmul.f32 %v2289, %v1777
    %v2418 = vmul.f32 %v2290, %v1778
    %v2419 = vmul.f32 %v2291, %v1779
    %v2420 = vmul.f32 %v2292, %v1780
    %v2421 = vmul.f32 %v2293, %v1781
    %v2422 = vmul.f32 %v2294, %v1782
    %v2423 = vmul.f32 %v2295, %v1783
    %v2424 = vmul.f32 %v2296, %v1784
    %v2425 = vmul.f32 %v2297, %v1785
    %v2426 = vmul.f32 %v2298, %v1786
    %v2427 = vmul.f32 %v2299, %v1787
    %v2428 = vmul.f32 %v2300, %v1788
    %v2429 = vmul.f32 %v2301, %v1789
    %v2430 = vmul.f32 %v2302, %v1790
    %v2431 = vmul.f32 %v2303, %v1791
    %v2432 = vmul.f32 %v2304, %v1792
    %v2433 = vmul.f32 %v2305, %v1793
    %v2434 = vmul.f32 %v2306, %v1794
    %v2435 = vmul.f32 %v2307, %v1795
    %v2436 = vmul.f32 %v2308, %v1796
    %v2437 = vmul.f32 %v2309, %v1797
    %v2438 = vmul.f32 %v2310, %v1798
    %v2439 = vmul.f32 %v2311, %v1799
    %v2440 = vmul.f32 %v2312, %v1800
    %v2441 = vmul.f32 %v2313, %v1801
    %v2442 = vmul.f32 %v2314, %v1802
    %v2443 = vmul.f32 %v2315, %v1803
    %v2444 = vmul.f32 %v2316, %v1804
    %v2445 = vmul.f32 %v2317, %v1805
    %v2446 = vmul.f32 %v2318, %v1806
    %v2447 = vmul.f32 %v2319, %v1807
    %v2448 = vmul.f32 %v2320, %v1808
    %v2449 = vmul.f32 %v2321, %v1809
    %v2450 = vmul.f32 %v2322, %v1810
    %v2451 = vmul.f32 %v2323, %v1811
    %v2452 = vmul.f32 %v2324, %v1812
    %v2453 = vmul.f32 %v2325, %v1813
    %v2454 = vmul.f32 %v2326, %v1814
    %v2455 = vmul.f32 %v2327, %v1815
    %v2456 = vmul.f32 %v2328, %v1816
    %v2457 = vmul.f32 %v2329, %v1817
    %v2458 = vmul.f32 %v2330, %v1818
    %v2459 = vmul.f32 %v2331, %v1819
    %v2460 = vmul.f32 %v2332, %v1820
    %v2461 = vmul.f32 %v2333, %v1821
    %v2462 = vmul.f32 %v2334, %v1822
    %v2463 = vmul.f32 %v2335, %v1823
    %v2464 = vmul.f32 %v2336, %v1824
    %v2465 = vmul.f32 %v2337, %v1825
    %v2466 = vmul.f32 %v2338, %v1826
    %v2467 = vmul.f32 %v2339, %v1827
    %v2468 = vmul.f32 %v2340, %v1828
    %v2469 = vmul.f32 %v2341, %v1829
    %v2470 = vmul.f32 %v2342, %v1830
    %v2471 = vmul.f32 %v2343, %v1831
    %v2472 = vmul.f32 %v2344, %v1832
    %v2473 = vmul.f32 %v2345, %v1833
    %v2474 = vmul.f32 %v2346, %v1834
    %v2475 = vmul.f32 %v2347, %v1835
    %v2476 = vmul.f32 %v2348, %v1836
    %v2477 = vmul.f32 %v2349, %v1837
    %v2478 = vmul.f32 %v2350, %v1838
    %v2479 = vmul.f32 %v2351, %v1839
    %v2480 = vmul.f32 %v2352, %v1840
    %v2481 = vmul.f32 %v2353, %v1841
    %v2482 = vmul.f32 %v2354, %v1842
    %v2483 = vmul.f32 %v2355, %v1843
    %v2484 = vmul.f32 %v2356, %v1844
    %v2485 = vmul.f32 %v2357, %v1845
    %v2486 = vmul.f32 %v2358, %v1846
    %v2487 = vmul.f32 %v2359, %v1847
    %v2488 = vmul.f32 %v2360, %v1848
    %v2489 = vmul.f32 %v2361, %v1849
    %v2490 = vmul.f32 %v2362, %v1850
    %v2491 = vmul.f32 %v2363, %v1851
    %v2492 = vmul.f32 %v2364, %v1852
    %v2493 = vmul.f32 %v2365, %v1853
    %v2494 = vmul.f32 %v2366, %v1854
    %v2495 = vmul.f32 %v2367, %v1855
    %v2496 = vmul.f32 %v2368, %v1856
    %v2497 = vmul.f32 %v2369, %v1857
    %v2498 = vmul.f32 %v2370, %v1858
    %v2499 = vmul.f32 %v2371, %v1859
    %v2500 = vmul.f32 %v2372, %v1860
    %v2501 = vmul.f32 %v2373, %v1861
    %v2502 = vmul.f32 %v2374, %v1862
    %v2503 = vmul.f32 %v2375, %v1863
    %v2504 = vmul.f32 %v2376, %v1864
    %v2505 = vmul.f32 %v2377, %v1865
    %v2506 = vmul.f32 %v2378, %v1866
    %v2507 = vmul.f32 %v2379, %v1867
    %v2508 = vmul.f32 %v2380, %v1868
    %v2509 = vmul.f32 %v2381, %v1869
    %v2510 = vmul.f32 %v2382, %v1870
    %v2511 = vmul.f32 %v2383, %v1871
    %v2512 = vmul.f32 %v2384, %v1872
    %v2513 = vmul.f32 %v2385, %v1873
    %v2514 = vmul.f32 %v2386, %v1874
    %v2515 = vmul.f32 %v2387, %v1875
    %v2516 = vadd.f32 %v2388, -0.28449672
    %v2517 = vadd.f32 %v2389, -0.28449672
    %v2518 = vadd.f32 %v2390, -0.28449672
    %v2519 = vadd.f32 %v2391, -0.28449672
    %v2520 = vadd.f32 %v2392, -0.28449672
    %v2521 = vadd.f32 %v2393, -0.28449672
    %v2522 = vadd.f32 %v2394, -0.28449672
    %v2523 = vadd.f32 %v2395, -0.28449672
    %v2524 = vadd.f32 %v2396, -0.28449672
    %v2525 = vadd.f32 %v2397, -0.28449672
    %v2526 = vadd.f32 %v2398, -0.28449672
    %v2527 = vadd.f32 %v2399, -0.28449672
    %v2528 = vadd.f32 %v2400, -0.28449672
    %v2529 = vadd.f32 %v2401, -0.28449672
    %v2530 = vadd.f32 %v2402, -0.28449672
    %v2531 = vadd.f32 %v2403, -0.28449672
    %v2532 = vadd.f32 %v2404, -0.28449672
    %v2533 = vadd.f32 %v2405, -0.28449672
    %v2534 = vadd.f32 %v2406, -0.28449672
    %v2535 = vadd.f32 %v2407, -0.28449672
    %v2536 = vadd.f32 %v2408, -0.28449672
    %v2537 = vadd.f32 %v2409, -0.28449672
    %v2538 = vadd.f32 %v2410, -0.28449672
    %v2539 = vadd.f32 %v2411, -0.28449672
    %v2540 = vadd.f32 %v2412, -0.28449672
    %v2541 = vadd.f32 %v2413, -0.28449672
    %v2542 = vadd.f32 %v2414, -0.28449672
    %v2543 = vadd.f32 %v2415, -0.28449672
    %v2544 = vadd.f32 %v2416, -0.28449672
    %v2545 = vadd.f32 %v2417, -0.28449672
    %v2546 = vadd.f32 %v2418, -0.28449672
    %v2547 = vadd.f32 %v2419, -0.28449672
    %v2548 = vadd.f32 %v2420, -0.28449672
    %v2549 = vadd.f32 %v2421, -0.28449672
    %v2550 = vadd.f32 %v2422, -0.28449672
    %v2551 = vadd.f32 %v2423, -0.28449672
    %v2552 = vadd.f32 %v2424, -0.28449672
    %v2553 = vadd.f32 %v2425, -0.28449672
    %v2554 = vadd.f32 %v2426, -0.28449672
    %v2555 = vadd.f32 %v2427, -0.28449672
    %v2556 = vadd.f32 %v2428, -0.28449672
    %v2557 = vadd.f32 %v2429, -0.28449672
    %v2558 = vadd.f32 %v2430, -0.28449672
    %v2559 = vadd.f32 %v2431, -0.28449672
    %v2560 = vadd.f32 %v2432, -0.28449672
    %v2561 = vadd.f32 %v2433, -0.28449672
    %v2562 = vadd.f32 %v2434, -0.28449672
    %v2563 = vadd.f32 %v2435, -0.28449672
    %v2564 = vadd.f32 %v2436, -0.28449672
    %v2565 = vadd.f32 %v2437, -0.28449672
    %v2566 = vadd.f32 %v2438, -0.28449672
    %v2567 = vadd.f32 %v2439, -0.28449672
    %v2568 = vadd.f32 %v2440, -0.28449672
    %v2569 = vadd.f32 %v2441, -0.28449672
    %v2570 = vadd.f32 %v2442, -0.28449672
    %v2571 = vadd.f32 %v2443, -0.28449672
    %v2572 = vadd.f32 %v2444, -0.28449672
    %v2573 = vadd.f32 %v2445, -0.28449672
    %v2574 = vadd.f32 %v2446, -0.28449672
    %v2575 = vadd.f32 %v2447, -0.28449672
    %v2576 = vadd.f32 %v2448, -0.28449672
    %v2577 = vadd.f32 %v2449, -0.28449672
    %v2578 = vadd.f32 %v2450, -0.28449672
    %v2579 = vadd.f32 %v2451, -0.28449672
    %v2580 = vadd.f32 %v2452, -0.28449672
    %v2581 = vadd.f32 %v2453, -0.28449672
    %v2582 = vadd.f32 %v2454, -0.28449672
    %v2583 = vadd.f32 %v2455, -0.28449672
    %v2584 = vadd.f32 %v2456, -0.28449672
    %v2585 = vadd.f32 %v2457, -0.28449672
    %v2586 = vadd.f32 %v2458, -0.28449672
    %v2587 = vadd.f32 %v2459, -0.28449672
    %v2588 = vadd.f32 %v2460, -0.28449672
    %v2589 = vadd.f32 %v2461, -0.28449672
    %v2590 = vadd.f32 %v2462, -0.28449672
    %v2591 = vadd.f32 %v2463, -0.28449672
    %v2592 = vadd.f32 %v2464, -0.28449672
    %v2593 = vadd.f32 %v2465, -0.28449672
    %v2594 = vadd.f32 %v2466, -0.28449672
    %v2595 = vadd.f32 %v2467, -0.28449672
    %v2596 = vadd.f32 %v2468, -0.28449672
    %v2597 = vadd.f32 %v2469, -0.28449672
    %v2598 = vadd.f32 %v2470, -0.28449672
    %v2599 = vadd.f32 %v2471, -0.28449672
    %v2600 = vadd.f32 %v2472, -0.28449672
    %v2601 = vadd.f32 %v2473, -0.28449672
    %v2602 = vadd.f32 %v2474, -0.28449672
    %v2603 = vadd.f32 %v2475, -0.28449672
    %v2604 = vadd.f32 %v2476, -0.28449672
    %v2605 = vadd.f32 %v2477, -0.28449672
    %v2606 = vadd.f32 %v2478, -0.28449672
    %v2607 = vadd.f32 %v2479, -0.28449672
    %v2608 = vadd.f32 %v2480, -0.28449672
    %v2609 = vadd.f32 %v2481, -0.28449672
    %v2610 = vadd.f32 %v2482, -0.28449672
    %v2611 = vadd.f32 %v2483, -0.28449672
    %v2612 = vadd.f32 %v2484, -0.28449672
    %v2613 = vadd.f32 %v2485, -0.28449672
    %v2614 = vadd.f32 %v2486, -0.28449672
    %v2615 = vadd.f32 %v2487, -0.28449672
    %v2616 = vadd.f32 %v2488, -0.28449672
    %v2617 = vadd.f32 %v2489, -0.28449672
    %v2618 = vadd.f32 %v2490, -0.28449672
    %v2619 = vadd.f32 %v2491, -0.28449672
    %v2620 = vadd.f32 %v2492, -0.28449672
    %v2621 = vadd.f32 %v2493, -0.28449672
    %v2622 = vadd.f32 %v2494, -0.28449672
    %v2623 = vadd.f32 %v2495, -0.28449672
    %v2624 = vadd.f32 %v2496, -0.28449672
    %v2625 = vadd.f32 %v2497, -0.28449672
    %v2626 = vadd.f32 %v2498, -0.28449672
    %v2627 = vadd.f32 %v2499, -0.28449672
    %v2628 = vadd.f32 %v2500, -0.28449672
    %v2629 = vadd.f32 %v2501, -0.28449672
    %v2630 = vadd.f32 %v2502, -0.28449672
    %v2631 = vadd.f32 %v2503, -0.28449672
    %v2632 = vadd.f32 %v2504, -0.28449672
    %v2633 = vadd.f32 %v2505, -0.28449672
    %v2634 = vadd.f32 %v2506, -0.28449672
    %v2635 = vadd.f32 %v2507, -0.28449672
    %v2636 = vadd.f32 %v2508, -0.28449672
    %v2637 = vadd.f32 %v2509, -0.28449672
    %v2638 = vadd.f32 %v2510, -0.28449672
    %v2639 = vadd.f32 %v2511, -0.28449672
    %v2640 = vadd.f32 %v2512, -0.28449672
    %v2641 = vadd.f32 %v2513, -0.28449672
    %v2642 = vadd.f32 %v2514, -0.28449672
    %v2643 = vadd.f32 %v2515, -0.28449672
    %v2644 = vmul.f32 %v2516, %v1748
    %v2645 = vmul.f32 %v2517, %v1749
    %v2646 = vmul.f32 %v2518, %v1750
    %v2647 = vmul.f32 %v2519, %v1751
    %v2648 = vmul.f32 %v2520, %v1752
    %v2649 = vmul.f32 %v2521, %v1753
    %v2650 = vmul.f32 %v2522, %v1754
    %v2651 = vmul.f32 %v2523, %v1755
    %v2652 = vmul.f32 %v2524, %v1756
    %v2653 = vmul.f32 %v2525, %v1757
    %v2654 = vmul.f32 %v2526, %v1758
    %v2655 = vmul.f32 %v2527, %v1759
    %v2656 = vmul.f32 %v2528, %v1760
    %v2657 = vmul.f32 %v2529, %v1761
    %v2658 = vmul.f32 %v2530, %v1762
    %v2659 = vmul.f32 %v2531, %v1763
    %v2660 = vmul.f32 %v2532, %v1764
    %v2661 = vmul.f32 %v2533, %v1765
    %v2662 = vmul.f32 %v2534, %v1766
    %v2663 = vmul.f32 %v2535, %v1767
    %v2664 = vmul.f32 %v2536, %v1768
    %v2665 = vmul.f32 %v2537, %v1769
    %v2666 = vmul.f32 %v2538, %v1770
    %v2667 = vmul.f32 %v2539, %v1771
    %v2668 = vmul.f32 %v2540, %v1772
    %v2669 = vmul.f32 %v2541, %v1773
    %v2670 = vmul.f32 %v2542, %v1774
    %v2671 = vmul.f32 %v2543, %v1775
    %v2672 = vmul.f32 %v2544, %v1776
    %v2673 = vmul.f32 %v2545, %v1777
    %v2674 = vmul.f32 %v2546, %v1778
    %v2675 = vmul.f32 %v2547, %v1779
    %v2676 = vmul.f32 %v2548, %v1780
    %v2677 = vmul.f32 %v2549, %v1781
    %v2678 = vmul.f32 %v2550, %v1782
    %v2679 = vmul.f32 %v2551, %v1783
    %v2680 = vmul.f32 %v2552, %v1784
    %v2681 = vmul.f32 %v2553, %v1785
    %v2682 = vmul.f32 %v2554, %v1786
    %v2683 = vmul.f32 %v2555, %v1787
    %v2684 = vmul.f32 %v2556, %v1788
    %v2685 = vmul.f32 %v2557, %v1789
    %v2686 = vmul.f32 %v2558, %v1790
    %v2687 = vmul.f32 %v2559, %v1791
    %v2688 = vmul.f32 %v2560, %v1792
    %v2689 = vmul.f32 %v2561, %v1793
    %v2690 = vmul.f32 %v2562, %v1794
    %v2691 = vmul.f32 %v2563, %v1795
    %v2692 = vmul.f32 %v2564, %v1796
    %v2693 = vmul.f32 %v2565, %v1797
    %v2694 = vmul.f32 %v2566, %v1798
    %v2695 = vmul.f32 %v2567, %v1799
    %v2696 = vmul.f32 %v2568, %v1800
    %v2697 = vmul.f32 %v2569, %v1801
    %v2698 = vmul.f32 %v2570, %v1802
    %v2699 = vmul.f32 %v2571, %v1803
    %v2700 = vmul.f32 %v2572, %v1804
    %v2701 = vmul.f32 %v2573, %v1805
    %v2702 = vmul.f32 %v2574, %v1806
    %v2703 = vmul.f32 %v2575, %v1807
    %v2704 = vmul.f32 %v2576, %v1808
    %v2705 = vmul.f32 %v2577, %v1809
    %v2706 = vmul.f32 %v2578, %v1810
    %v2707 = vmul.f32 %v2579, %v1811
    %v2708 = vmul.f32 %v2580, %v1812
    %v2709 = vmul.f32 %v2581, %v1813
    %v2710 = vmul.f32 %v2582, %v1814
    %v2711 = vmul.f32 %v2583, %v1815
    %v2712 = vmul.f32 %v2584, %v1816
    %v2713 = vmul.f32 %v2585, %v1817
    %v2714 = vmul.f32 %v2586, %v1818
    %v2715 = vmul.f32 %v2587, %v1819
    %v2716 = vmul.f32 %v2588, %v1820
    %v2717 = vmul.f32 %v2589, %v1821
    %v2718 = vmul.f32 %v2590, %v1822
    %v2719 = vmul.f32 %v2591, %v1823
    %v2720 = vmul.f32 %v2592, %v1824
    %v2721 = vmul.f32 %v2593, %v1825
    %v2722 = vmul.f32 %v2594, %v1826
    %v2723 = vmul.f32 %v2595, %v1827
    %v2724 = vmul.f32 %v2596, %v1828
    %v2725 = vmul.f32 %v2597, %v1829
    %v2726 = vmul.f32 %v2598, %v1830
    %v2727 = vmul.f32 %v2599, %v1831
    %v2728 = vmul.f32 %v2600, %v1832
    %v2729 = vmul.f32 %v2601, %v1833
    %v2730 = vmul.f32 %v2602, %v1834
    %v2731 = vmul.f32 %v2603, %v1835
    %v2732 = vmul.f32 %v2604, %v1836
    %v2733 = vmul.f32 %v2605, %v1837
    %v2734 = vmul.f32 %v2606, %v1838
    %v2735 = vmul.f32 %v2607, %v1839
    %v2736 = vmul.f32 %v2608, %v1840
    %v2737 = vmul.f32 %v2609, %v1841
    %v2738 = vmul.f32 %v2610, %v1842
    %v2739 = vmul.f32 %v2611, %v1843
    %v2740 = vmul.f32 %v2612, %v1844
    %v2741 = vmul.f32 %v2613, %v1845
    %v2742 = vmul.f32 %v2614, %v1846
    %v2743 = vmul.f32 %v2615, %v1847
    %v2744 = vmul.f32 %v2616, %v1848
    %v2745 = vmul.f32 %v2617, %v1849
    %v2746 = vmul.f32 %v2618, %v1850
    %v2747 = vmul.f32 %v2619, %v1851
    %v2748 = vmul.f32 %v2620, %v1852
    %v2749 = vmul.f32 %v2621, %v1853
    %v2750 = vmul.f32 %v2622, %v1854
    %v2751 = vmul.f32 %v2623, %v1855
    %v2752 = vmul.f32 %v2624, %v1856
    %v2753 = vmul.f32 %v2625, %v1857
    %v2754 = vmul.f32 %v2626, %v1858
    %v2755 = vmul.f32 %v2627, %v1859
    %v2756 = vmul.f32 %v2628, %v1860
    %v2757 = vmul.f32 %v2629, %v1861
    %v2758 = vmul.f32 %v2630, %v1862
    %v2759 = vmul.f32 %v2631, %v1863
    %v2760 = vmul.f32 %v2632, %v1864
    %v2761 = vmul.f32 %v2633, %v1865
    %v2762 = vmul.f32 %v2634, %v1866
    %v2763 = vmul.f32 %v2635, %v1867
    %v2764 = vmul.f32 %v2636, %v1868
    %v2765 = vmul.f32 %v2637, %v1869
    %v2766 = vmul.f32 %v2638, %v1870
    %v2767 = vmul.f32 %v2639, %v1871
    %v2768 = vmul.f32 %v2640, %v1872
    %v2769 = vmul.f32 %v2641, %v1873
    %v2770 = vmul.f32 %v2642, %v1874
    %v2771 = vmul.f32 %v2643, %v1875
    %v2772 = vadd.f32 %v2644, 0.2548296
    %v2773 = vadd.f32 %v2645, 0.2548296
    %v2774 = vadd.f32 %v2646, 0.2548296
    %v2775 = vadd.f32 %v2647, 0.2548296
    %v2776 = vadd.f32 %v2648, 0.2548296
    %v2777 = vadd.f32 %v2649, 0.2548296
    %v2778 = vadd.f32 %v2650, 0.2548296
    %v2779 = vadd.f32 %v2651, 0.2548296
    %v2780 = vadd.f32 %v2652, 0.2548296
    %v2781 = vadd.f32 %v2653, 0.2548296
    %v2782 = vadd.f32 %v2654, 0.2548296
    %v2783 = vadd.f32 %v2655, 0.2548296
    %v2784 = vadd.f32 %v2656, 0.2548296
    %v2785 = vadd.f32 %v2657, 0.2548296
    %v2786 = vadd.f32 %v2658, 0.2548296
    %v2787 = vadd.f32 %v2659, 0.2548296
    %v2788 = vadd.f32 %v2660, 0.2548296
    %v2789 = vadd.f32 %v2661, 0.2548296
    %v2790 = vadd.f32 %v2662, 0.2548296
    %v2791 = vadd.f32 %v2663, 0.2548296
    %v2792 = vadd.f32 %v2664, 0.2548296
    %v2793 = vadd.f32 %v2665, 0.2548296
    %v2794 = vadd.f32 %v2666, 0.2548296
    %v2795 = vadd.f32 %v2667, 0.2548296
    %v2796 = vadd.f32 %v2668, 0.2548296
    %v2797 = vadd.f32 %v2669, 0.2548296
    %v2798 = vadd.f32 %v2670, 0.2548296
    %v2799 = vadd.f32 %v2671, 0.2548296
    %v2800 = vadd.f32 %v2672, 0.2548296
    %v2801 = vadd.f32 %v2673, 0.2548296
    %v2802 = vadd.f32 %v2674, 0.2548296
    %v2803 = vadd.f32 %v2675, 0.2548296
    %v2804 = vadd.f32 %v2676, 0.2548296
    %v2805 = vadd.f32 %v2677, 0.2548296
    %v2806 = vadd.f32 %v2678, 0.2548296
    %v2807 = vadd.f32 %v2679, 0.2548296
    %v2808 = vadd.f32 %v2680, 0.2548296
    %v2809 = vadd.f32 %v2681, 0.2548296
    %v2810 = vadd.f32 %v2682, 0.2548296
    %v2811 = vadd.f32 %v2683, 0.2548296
    %v2812 = vadd.f32 %v2684, 0.2548296
    %v2813 = vadd.f32 %v2685, 0.2548296
    %v2814 = vadd.f32 %v2686, 0.2548296
    %v2815 = vadd.f32 %v2687, 0.2548296
    %v2816 = vadd.f32 %v2688, 0.2548296
    %v2817 = vadd.f32 %v2689, 0.2548296
    %v2818 = vadd.f32 %v2690, 0.2548296
    %v2819 = vadd.f32 %v2691, 0.2548296
    %v2820 = vadd.f32 %v2692, 0.2548296
    %v2821 = vadd.f32 %v2693, 0.2548296
    %v2822 = vadd.f32 %v2694, 0.2548296
    %v2823 = vadd.f32 %v2695, 0.2548296
    %v2824 = vadd.f32 %v2696, 0.2548296
    %v2825 = vadd.f32 %v2697, 0.2548296
    %v2826 = vadd.f32 %v2698, 0.2548296
    %v2827 = vadd.f32 %v2699, 0.2548296
    %v2828 = vadd.f32 %v2700, 0.2548296
    %v2829 = vadd.f32 %v2701, 0.2548296
    %v2830 = vadd.f32 %v2702, 0.2548296
    %v2831 = vadd.f32 %v2703, 0.2548296
    %v2832 = vadd.f32 %v2704, 0.2548296
    %v2833 = vadd.f32 %v2705, 0.2548296
    %v2834 = vadd.f32 %v2706, 0.2548296
    %v2835 = vadd.f32 %v2707, 0.2548296
    %v2836 = vadd.f32 %v2708, 0.2548296
    %v2837 = vadd.f32 %v2709, 0.2548296
    %v2838 = vadd.f32 %v2710, 0.2548296
    %v2839 = vadd.f32 %v2711, 0.2548296
    %v2840 = vadd.f32 %v2712, 0.2548296
    %v2841 = vadd.f32 %v2713, 0.2548296
    %v2842 = vadd.f32 %v2714, 0.2548296
    %v2843 = vadd.f32 %v2715, 0.2548296
    %v2844 = vadd.f32 %v2716, 0.2548296
    %v2845 = vadd.f32 %v2717, 0.2548296
    %v2846 = vadd.f32 %v2718, 0.2548296
    %v2847 = vadd.f32 %v2719, 0.2548296
    %v2848 = vadd.f32 %v2720, 0.2548296
    %v2849 = vadd.f32 %v2721, 0.2548296
    %v2850 = vadd.f32 %v2722, 0.2548296
    %v2851 = vadd.f32 %v2723, 0.2548296
    %v2852 = vadd.f32 %v2724, 0.2548296
    %v2853 = vadd.f32 %v2725, 0.2548296
    %v2854 = vadd.f32 %v2726, 0.2548296
    %v2855 = vadd.f32 %v2727, 0.2548296
    %v2856 = vadd.f32 %v2728, 0.2548296
    %v2857 = vadd.f32 %v2729, 0.2548296
    %v2858 = vadd.f32 %v2730, 0.2548296
    %v2859 = vadd.f32 %v2731, 0.2548296
    %v2860 = vadd.f32 %v2732, 0.2548296
    %v2861 = vadd.f32 %v2733, 0.2548296
    %v2862 = vadd.f32 %v2734, 0.2548296
    %v2863 = vadd.f32 %v2735, 0.2548296
    %v2864 = vadd.f32 %v2736, 0.2548296
    %v2865 = vadd.f32 %v2737, 0.2548296
    %v2866 = vadd.f32 %v2738, 0.2548296
    %v2867 = vadd.f32 %v2739, 0.2548296
    %v2868 = vadd.f32 %v2740, 0.2548296
    %v2869 = vadd.f32 %v2741, 0.2548296
    %v2870 = vadd.f32 %v2742, 0.2548296
    %v2871 = vadd.f32 %v2743, 0.2548296
    %v2872 = vadd.f32 %v2744, 0.2548296
    %v2873 = vadd.f32 %v2745, 0.2548296
    %v2874 = vadd.f32 %v2746, 0.2548296
    %v2875 = vadd.f32 %v2747, 0.2548296
    %v2876 = vadd.f32 %v2748, 0.2548296
    %v2877 = vadd.f32 %v2749, 0.2548296
    %v2878 = vadd.f32 %v2750, 0.2548296
    %v2879 = vadd.f32 %v2751, 0.2548296
    %v2880 = vadd.f32 %v2752, 0.2548296
    %v2881 = vadd.f32 %v2753, 0.2548296
    %v2882 = vadd.f32 %v2754, 0.2548296
    %v2883 = vadd.f32 %v2755, 0.2548296
    %v2884 = vadd.f32 %v2756, 0.2548296
    %v2885 = vadd.f32 %v2757, 0.2548296
    %v2886 = vadd.f32 %v2758, 0.2548296
    %v2887 = vadd.f32 %v2759, 0.2548296
    %v2888 = vadd.f32 %v2760, 0.2548296
    %v2889 = vadd.f32 %v2761, 0.2548296
    %v2890 = vadd.f32 %v2762, 0.2548296
    %v2891 = vadd.f32 %v2763, 0.2548296
    %v2892 = vadd.f32 %v2764, 0.2548296
    %v2893 = vadd.f32 %v2765, 0.2548296
    %v2894 = vadd.f32 %v2766, 0.2548296
    %v2895 = vadd.f32 %v2767, 0.2548296
    %v2896 = vadd.f32 %v2768, 0.2548296
    %v2897 = vadd.f32 %v2769, 0.2548296
    %v2898 = vadd.f32 %v2770, 0.2548296
    %v2899 = vadd.f32 %v2771, 0.2548296
    %v2900 = vmul.f32 %v2772, %v1748
    %v2901 = vmul.f32 %v2773, %v1749
    %v2902 = vmul.f32 %v2774, %v1750
    %v2903 = vmul.f32 %v2775, %v1751
    %v2904 = vmul.f32 %v2776, %v1752
    %v2905 = vmul.f32 %v2777, %v1753
    %v2906 = vmul.f32 %v2778, %v1754
    %v2907 = vmul.f32 %v2779, %v1755
    %v2908 = vmul.f32 %v2780, %v1756
    %v2909 = vmul.f32 %v2781, %v1757
    %v2910 = vmul.f32 %v2782, %v1758
    %v2911 = vmul.f32 %v2783, %v1759
    %v2912 = vmul.f32 %v2784, %v1760
    %v2913 = vmul.f32 %v2785, %v1761
    %v2914 = vmul.f32 %v2786, %v1762
    %v2915 = vmul.f32 %v2787, %v1763
    %v2916 = vmul.f32 %v2788, %v1764
    %v2917 = vmul.f32 %v2789, %v1765
    %v2918 = vmul.f32 %v2790, %v1766
    %v2919 = vmul.f32 %v2791, %v1767
    %v2920 = vmul.f32 %v2792, %v1768
    %v2921 = vmul.f32 %v2793, %v1769
    %v2922 = vmul.f32 %v2794, %v1770
    %v2923 = vmul.f32 %v2795, %v1771
    %v2924 = vmul.f32 %v2796, %v1772
    %v2925 = vmul.f32 %v2797, %v1773
    %v2926 = vmul.f32 %v2798, %v1774
    %v2927 = vmul.f32 %v2799, %v1775
    %v2928 = vmul.f32 %v2800, %v1776
    %v2929 = vmul.f32 %v2801, %v1777
    %v2930 = vmul.f32 %v2802, %v1778
    %v2931 = vmul.f32 %v2803, %v1779
    %v2932 = vmul.f32 %v2804, %v1780
    %v2933 = vmul.f32 %v2805, %v1781
    %v2934 = vmul.f32 %v2806, %v1782
    %v2935 = vmul.f32 %v2807, %v1783
    %v2936 = vmul.f32 %v2808, %v1784
    %v2937 = vmul.f32 %v2809, %v1785
    %v2938 = vmul.f32 %v2810, %v1786
    %v2939 = vmul.f32 %v2811, %v1787
    %v2940 = vmul.f32 %v2812, %v1788
    %v2941 = vmul.f32 %v2813, %v1789
    %v2942 = vmul.f32 %v2814, %v1790
    %v2943 = vmul.f32 %v2815, %v1791
    %v2944 = vmul.f32 %v2816, %v1792
    %v2945 = vmul.f32 %v2817, %v1793
    %v2946 = vmul.f32 %v2818, %v1794
    %v2947 = vmul.f32 %v2819, %v1795
    %v2948 = vmul.f32 %v2820, %v1796
    %v2949 = vmul.f32 %v2821, %v1797
    %v2950 = vmul.f32 %v2822, %v1798
    %v2951 = vmul.f32 %v2823, %v1799
    %v2952 = vmul.f32 %v2824, %v1800
    %v2953 = vmul.f32 %v2825, %v1801
    %v2954 = vmul.f32 %v2826, %v1802
    %v2955 = vmul.f32 %v2827, %v1803
    %v2956 = vmul.f32 %v2828, %v1804
    %v2957 = vmul.f32 %v2829, %v1805
    %v2958 = vmul.f32 %v2830, %v1806
    %v2959 = vmul.f32 %v2831, %v1807
    %v2960 = vmul.f32 %v2832, %v1808
    %v2961 = vmul.f32 %v2833, %v1809
    %v2962 = vmul.f32 %v2834, %v1810
    %v2963 = vmul.f32 %v2835, %v1811
    %v2964 = vmul.f32 %v2836, %v1812
    %v2965 = vmul.f32 %v2837, %v1813
    %v2966 = vmul.f32 %v2838, %v1814
    %v2967 = vmul.f32 %v2839, %v1815
    %v2968 = vmul.f32 %v2840, %v1816
    %v2969 = vmul.f32 %v2841, %v1817
    %v2970 = vmul.f32 %v2842, %v1818
    %v2971 = vmul.f32 %v2843, %v1819
    %v2972 = vmul.f32 %v2844, %v1820
    %v2973 = vmul.f32 %v2845, %v1821
    %v2974 = vmul.f32 %v2846, %v1822
    %v2975 = vmul.f32 %v2847, %v1823
    %v2976 = vmul.f32 %v2848, %v1824
    %v2977 = vmul.f32 %v2849, %v1825
    %v2978 = vmul.f32 %v2850, %v1826
    %v2979 = vmul.f32 %v2851, %v1827
    %v2980 = vmul.f32 %v2852, %v1828
    %v2981 = vmul.f32 %v2853, %v1829
    %v2982 = vmul.f32 %v2854, %v1830
    %v2983 = vmul.f32 %v2855, %v1831
    %v2984 = vmul.f32 %v2856, %v1832
    %v2985 = vmul.f32 %v2857, %v1833
    %v2986 = vmul.f32 %v2858, %v1834
    %v2987 = vmul.f32 %v2859, %v1835
    %v2988 = vmul.f32 %v2860, %v1836
    %v2989 = vmul.f32 %v2861, %v1837
    %v2990 = vmul.f32 %v2862, %v1838
    %v2991 = vmul.f32 %v2863, %v1839
    %v2992 = vmul.f32 %v2864, %v1840
    %v2993 = vmul.f32 %v2865, %v1841
    %v2994 = vmul.f32 %v2866, %v1842
    %v2995 = vmul.f32 %v2867, %v1843
    %v2996 = vmul.f32 %v2868, %v1844
    %v2997 = vmul.f32 %v2869, %v1845
    %v2998 = vmul.f32 %v2870, %v1846
    %v2999 = vmul.f32 %v2871, %v1847
    %v3000 = vmul.f32 %v2872, %v1848
    %v3001 = vmul.f32 %v2873, %v1849
    %v3002 = vmul.f32 %v2874, %v1850
    %v3003 = vmul.f32 %v2875, %v1851
    %v3004 = vmul.f32 %v2876, %v1852
    %v3005 = vmul.f32 %v2877, %v1853
    %v3006 = vmul.f32 %v2878, %v1854
    %v3007 = vmul.f32 %v2879, %v1855
    %v3008 = vmul.f32 %v2880, %v1856
    %v3009 = vmul.f32 %v2881, %v1857
    %v3010 = vmul.f32 %v2882, %v1858
    %v3011 = vmul.f32 %v2883, %v1859
    %v3012 = vmul.f32 %v2884, %v1860
    %v3013 = vmul.f32 %v2885, %v1861
    %v3014 = vmul.f32 %v2886, %v1862
    %v3015 = vmul.f32 %v2887, %v1863
    %v3016 = vmul.f32 %v2888, %v1864
    %v3017 = vmul.f32 %v2889, %v1865
    %v3018 = vmul.f32 %v2890, %v1866
    %v3019 = vmul.f32 %v2891, %v1867
    %v3020 = vmul.f32 %v2892, %v1868
    %v3021 = vmul.f32 %v2893, %v1869
    %v3022 = vmul.f32 %v2894, %v1870
    %v3023 = vmul.f32 %v2895, %v1871
    %v3024 = vmul.f32 %v2896, %v1872
    %v3025 = vmul.f32 %v2897, %v1873
    %v3026 = vmul.f32 %v2898, %v1874
    %v3027 = vmul.f32 %v2899, %v1875
    %v3028 = vsub.f32 0.0, %v980
    %v3029 = vsub.f32 0.0, %v981
    %v3030 = vsub.f32 0.0, %v982
    %v3031 = vsub.f32 0.0, %v983
    %v3032 = vsub.f32 0.0, %v984
    %v3033 = vsub.f32 0.0, %v985
    %v3034 = vsub.f32 0.0, %v986
    %v3035 = vsub.f32 0.0, %v987
    %v3036 = vsub.f32 0.0, %v988
    %v3037 = vsub.f32 0.0, %v989
    %v3038 = vsub.f32 0.0, %v990
    %v3039 = vsub.f32 0.0, %v991
    %v3040 = vsub.f32 0.0, %v992
    %v3041 = vsub.f32 0.0, %v993
    %v3042 = vsub.f32 0.0, %v994
    %v3043 = vsub.f32 0.0, %v995
    %v3044 = vsub.f32 0.0, %v996
    %v3045 = vsub.f32 0.0, %v997
    %v3046 = vsub.f32 0.0, %v998
    %v3047 = vsub.f32 0.0, %v999
    %v3048 = vsub.f32 0.0, %v1000
    %v3049 = vsub.f32 0.0, %v1001
    %v3050 = vsub.f32 0.0, %v1002
    %v3051 = vsub.f32 0.0, %v1003
    %v3052 = vsub.f32 0.0, %v1004
    %v3053 = vsub.f32 0.0, %v1005
    %v3054 = vsub.f32 0.0, %v1006
    %v3055 = vsub.f32 0.0, %v1007
    %v3056 = vsub.f32 0.0, %v1008
    %v3057 = vsub.f32 0.0, %v1009
    %v3058 = vsub.f32 0.0, %v1010
    %v3059 = vsub.f32 0.0, %v1011
    %v3060 = vsub.f32 0.0, %v1012
    %v3061 = vsub.f32 0.0, %v1013
    %v3062 = vsub.f32 0.0, %v1014
    %v3063 = vsub.f32 0.0, %v1015
    %v3064 = vsub.f32 0.0, %v1016
    %v3065 = vsub.f32 0.0, %v1017
    %v3066 = vsub.f32 0.0, %v1018
    %v3067 = vsub.f32 0.0, %v1019
    %v3068 = vsub.f32 0.0, %v1020
    %v3069 = vsub.f32 0.0, %v1021
    %v3070 = vsub.f32 0.0, %v1022
    %v3071 = vsub.f32 0.0, %v1023
    %v3072 = vsub.f32 0.0, %v1024
    %v3073 = vsub.f32 0.0, %v1025
    %v3074 = vsub.f32 0.0, %v1026
    %v3075 = vsub.f32 0.0, %v1027
    %v3076 = vsub.f32 0.0, %v1028
    %v3077 = vsub.f32 0.0, %v1029
    %v3078 = vsub.f32 0.0, %v1030
    %v3079 = vsub.f32 0.0, %v1031
    %v3080 = vsub.f32 0.0, %v1032
    %v3081 = vsub.f32 0.0, %v1033
    %v3082 = vsub.f32 0.0, %v1034
    %v3083 = vsub.f32 0.0, %v1035
    %v3084 = vsub.f32 0.0, %v1036
    %v3085 = vsub.f32 0.0, %v1037
    %v3086 = vsub.f32 0.0, %v1038
    %v3087 = vsub.f32 0.0, %v1039
    %v3088 = vsub.f32 0.0, %v1040
    %v3089 = vsub.f32 0.0, %v1041
    %v3090 = vsub.f32 0.0, %v1042
    %v3091 = vsub.f32 0.0, %v1043
    %v3092 = vsub.f32 0.0, %v1044
    %v3093 = vsub.f32 0.0, %v1045
    %v3094 = vsub.f32 0.0, %v1046
    %v3095 = vsub.f32 0.0, %v1047
    %v3096 = vsub.f32 0.0, %v1048
    %v3097 = vsub.f32 0.0, %v1049
    %v3098 = vsub.f32 0.0, %v1050
    %v3099 = vsub.f32 0.0, %v1051
    %v3100 = vsub.f32 0.0, %v1052
    %v3101 = vsub.f32 0.0, %v1053
    %v3102 = vsub.f32 0.0, %v1054
    %v3103 = vsub.f32 0.0, %v1055
    %v3104 = vsub.f32 0.0, %v1056
    %v3105 = vsub.f32 0.0, %v1057
    %v3106 = vsub.f32 0.0, %v1058
    %v3107 = vsub.f32 0.0, %v1059
    %v3108 = vsub.f32 0.0, %v1060
    %v3109 = vsub.f32 0.0, %v1061
    %v3110 = vsub.f32 0.0, %v1062
    %v3111 = vsub.f32 0.0, %v1063
    %v3112 = vsub.f32 0.0, %v1064
    %v3113 = vsub.f32 0.0, %v1065
    %v3114 = vsub.f32 0.0, %v1066
    %v3115 = vsub.f32 0.0, %v1067
    %v3116 = vsub.f32 0.0, %v1068
    %v3117 = vsub.f32 0.0, %v1069
    %v3118 = vsub.f32 0.0, %v1070
    %v3119 = vsub.f32 0.0, %v1071
    %v3120 = vsub.f32 0.0, %v1072
    %v3121 = vsub.f32 0.0, %v1073
    %v3122 = vsub.f32 0.0, %v1074
    %v3123 = vsub.f32 0.0, %v1075
    %v3124 = vsub.f32 0.0, %v1076
    %v3125 = vsub.f32 0.0, %v1077
    %v3126 = vsub.f32 0.0, %v1078
    %v3127 = vsub.f32 0.0, %v1079
    %v3128 = vsub.f32 0.0, %v1080
    %v3129 = vsub.f32 0.0, %v1081
    %v3130 = vsub.f32 0.0, %v1082
    %v3131 = vsub.f32 0.0, %v1083
    %v3132 = vsub.f32 0.0, %v1084
    %v3133 = vsub.f32 0.0, %v1085
    %v3134 = vsub.f32 0.0, %v1086
    %v3135 = vsub.f32 0.0, %v1087
    %v3136 = vsub.f32 0.0, %v1088
    %v3137 = vsub.f32 0.0, %v1089
    %v3138 = vsub.f32 0.0, %v1090
    %v3139 = vsub.f32 0.0, %v1091
    %v3140 = vsub.f32 0.0, %v1092
    %v3141 = vsub.f32 0.0, %v1093
    %v3142 = vsub.f32 0.0, %v1094
    %v3143 = vsub.f32 0.0, %v1095
    %v3144 = vsub.f32 0.0, %v1096
    %v3145 = vsub.f32 0.0, %v1097
    %v3146 = vsub.f32 0.0, %v1098
    %v3147 = vsub.f32 0.0, %v1099
    %v3148 = vsub.f32 0.0, %v1100
    %v3149 = vsub.f32 0.0, %v1101
    %v3150 = vsub.f32 0.0, %v1102
    %v3151 = vsub.f32 0.0, %v1103
    %v3152 = vsub.f32 0.0, %v1104
    %v3153 = vsub.f32 0.0, %v1105
    %v3154 = vsub.f32 0.0, %v1106
    %v3155 = vsub.f32 0.0, %v1107
    %v3156 = vmul.f32 %v3028, %v980
    %v3157 = vmul.f32 %v3029, %v981
    %v3158 = vmul.f32 %v3030, %v982
    %v3159 = vmul.f32 %v3031, %v983
    %v3160 = vmul.f32 %v3032, %v984
    %v3161 = vmul.f32 %v3033, %v985
    %v3162 = vmul.f32 %v3034, %v986
    %v3163 = vmul.f32 %v3035, %v987
    %v3164 = vmul.f32 %v3036, %v988
    %v3165 = vmul.f32 %v3037, %v989
    %v3166 = vmul.f32 %v3038, %v990
    %v3167 = vmul.f32 %v3039, %v991
    %v3168 = vmul.f32 %v3040, %v992
    %v3169 = vmul.f32 %v3041, %v993
    %v3170 = vmul.f32 %v3042, %v994
    %v3171 = vmul.f32 %v3043, %v995
    %v3172 = vmul.f32 %v3044, %v996
    %v3173 = vmul.f32 %v3045, %v997
    %v3174 = vmul.f32 %v3046, %v998
    %v3175 = vmul.f32 %v3047, %v999
    %v3176 = vmul.f32 %v3048, %v1000
    %v3177 = vmul.f32 %v3049, %v1001
    %v3178 = vmul.f32 %v3050, %v1002
    %v3179 = vmul.f32 %v3051, %v1003
    %v3180 = vmul.f32 %v3052, %v1004
    %v3181 = vmul.f32 %v3053, %v1005
    %v3182 = vmul.f32 %v3054, %v1006
    %v3183 = vmul.f32 %v3055, %v1007
    %v3184 = vmul.f32 %v3056, %v1008
    %v3185 = vmul.f32 %v3057, %v1009
    %v3186 = vmul.f32 %v3058, %v1010
    %v3187 = vmul.f32 %v3059, %v1011
    %v3188 = vmul.f32 %v3060, %v1012
    %v3189 = vmul.f32 %v3061, %v1013
    %v3190 = vmul.f32 %v3062, %v1014
    %v3191 = vmul.f32 %v3063, %v1015
    %v3192 = vmul.f32 %v3064, %v1016
    %v3193 = vmul.f32 %v3065, %v1017
    %v3194 = vmul.f32 %v3066, %v1018
    %v3195 = vmul.f32 %v3067, %v1019
    %v3196 = vmul.f32 %v3068, %v1020
    %v3197 = vmul.f32 %v3069, %v1021
    %v3198 = vmul.f32 %v3070, %v1022
    %v3199 = vmul.f32 %v3071, %v1023
    %v3200 = vmul.f32 %v3072, %v1024
    %v3201 = vmul.f32 %v3073, %v1025
    %v3202 = vmul.f32 %v3074, %v1026
    %v3203 = vmul.f32 %v3075, %v1027
    %v3204 = vmul.f32 %v3076, %v1028
    %v3205 = vmul.f32 %v3077, %v1029
    %v3206 = vmul.f32 %v3078, %v1030
    %v3207 = vmul.f32 %v3079, %v1031
    %v3208 = vmul.f32 %v3080, %v1032
    %v3209 = vmul.f32 %v3081, %v1033
    %v3210 = vmul.f32 %v3082, %v1034
    %v3211 = vmul.f32 %v3083, %v1035
    %v3212 = vmul.f32 %v3084, %v1036
    %v3213 = vmul.f32 %v3085, %v1037
    %v3214 = vmul.f32 %v3086, %v1038
    %v3215 = vmul.f32 %v3087, %v1039
    %v3216 = vmul.f32 %v3088, %v1040
    %v3217 = vmul.f32 %v3089, %v1041
    %v3218 = vmul.f32 %v3090, %v1042
    %v3219 = vmul.f32 %v3091, %v1043
    %v3220 = vmul.f32 %v3092, %v1044
    %v3221 = vmul.f32 %v3093, %v1045
    %v3222 = vmul.f32 %v3094, %v1046
    %v3223 = vmul.f32 %v3095, %v1047
    %v3224 = vmul.f32 %v3096, %v1048
    %v3225 = vmul.f32 %v3097, %v1049
    %v3226 = vmul.f32 %v3098, %v1050
    %v3227 = vmul.f32 %v3099, %v1051
    %v3228 = vmul.f32 %v3100, %v1052
    %v3229 = vmul.f32 %v3101, %v1053
    %v3230 = vmul.f32 %v3102, %v1054
    %v3231 = vmul.f32 %v3103, %v1055
    %v3232 = vmul.f32 %v3104, %v1056
    %v3233 = vmul.f32 %v3105, %v1057
    %v3234 = vmul.f32 %v3106, %v1058
    %v3235 = vmul.f32 %v3107, %v1059
    %v3236 = vmul.f32 %v3108, %v1060
    %v3237 = vmul.f32 %v3109, %v1061
    %v3238 = vmul.f32 %v3110, %v1062
    %v3239 = vmul.f32 %v3111, %v1063
    %v3240 = vmul.f32 %v3112, %v1064
    %v3241 = vmul.f32 %v3113, %v1065
    %v3242 = vmul.f32 %v3114, %v1066
    %v3243 = vmul.f32 %v3115, %v1067
    %v3244 = vmul.f32 %v3116, %v1068
    %v3245 = vmul.f32 %v3117, %v1069
    %v3246 = vmul.f32 %v3118, %v1070
    %v3247 = vmul.f32 %v3119, %v1071
    %v3248 = vmul.f32 %v3120, %v1072
    %v3249 = vmul.f32 %v3121, %v1073
    %v3250 = vmul.f32 %v3122, %v1074
    %v3251 = vmul.f32 %v3123, %v1075
    %v3252 = vmul.f32 %v3124, %v1076
    %v3253 = vmul.f32 %v3125, %v1077
    %v3254 = vmul.f32 %v3126, %v1078
    %v3255 = vmul.f32 %v3127, %v1079
    %v3256 = vmul.f32 %v3128, %v1080
    %v3257 = vmul.f32 %v3129, %v1081
    %v3258 = vmul.f32 %v3130, %v1082
    %v3259 = vmul.f32 %v3131, %v1083
    %v3260 = vmul.f32 %v3132, %v1084
    %v3261 = vmul.f32 %v3133, %v1085
    %v3262 = vmul.f32 %v3134, %v1086
    %v3263 = vmul.f32 %v3135, %v1087
    %v3264 = vmul.f32 %v3136, %v1088
    %v3265 = vmul.f32 %v3137, %v1089
    %v3266 = vmul.f32 %v3138, %v1090
    %v3267 = vmul.f32 %v3139, %v1091
    %v3268 = vmul.f32 %v3140, %v1092
    %v3269 = vmul.f32 %v3141, %v1093
    %v3270 = vmul.f32 %v3142, %v1094
    %v3271 = vmul.f32 %v3143, %v1095
    %v3272 = vmul.f32 %v3144, %v1096
    %v3273 = vmul.f32 %v3145, %v1097
    %v3274 = vmul.f32 %v3146, %v1098
    %v3275 = vmul.f32 %v3147, %v1099
    %v3276 = vmul.f32 %v3148, %v1100
    %v3277 = vmul.f32 %v3149, %v1101
    %v3278 = vmul.f32 %v3150, %v1102
    %v3279 = vmul.f32 %v3151, %v1103
    %v3280 = vmul.f32 %v3152, %v1104
    %v3281 = vmul.f32 %v3153, %v1105
    %v3282 = vmul.f32 %v3154, %v1106
    %v3283 = vmul.f32 %v3155, %v1107
    %v3284 = vmul.f32 %v3156, 1.442695
    %v3285 = vpow.pop %v3284
    %v3286 = vmul.f32 %v3157, 1.442695
    %v3287 = vpow.pop %v3286
    %v3288 = vmul.f32 %v3158, 1.442695
    %v3289 = vpow.pop %v3288
    %v3290 = vmul.f32 %v3159, 1.442695
    %v3291 = vpow.pop %v3290
    %v3292 = vmul.f32 %v3160, 1.442695
    %v3293 = vpow.pop %v3292
    %v3294 = vmul.f32 %v3161, 1.442695
    %v3295 = vpow.pop %v3294
    %v3296 = vmul.f32 %v3162, 1.442695
    %v3297 = vpow.pop %v3296
    %v3298 = vmul.f32 %v3163, 1.442695
    %v3299 = vpow.pop %v3298
    %v3300 = vmul.f32 %v3164, 1.442695
    %v3301 = vpow.pop %v3300
    %v3302 = vmul.f32 %v3165, 1.442695
    %v3303 = vpow.pop %v3302
    %v3304 = vmul.f32 %v3166, 1.442695
    %v3305 = vpow.pop %v3304
    %v3306 = vmul.f32 %v3167, 1.442695
    %v3307 = vpow.pop %v3306
    %v3308 = vmul.f32 %v3168, 1.442695
    %v3309 = vpow.pop %v3308
    %v3310 = vmul.f32 %v3169, 1.442695
    %v3311 = vpow.pop %v3310
    %v3312 = vmul.f32 %v3170, 1.442695
    %v3313 = vpow.pop %v3312
    %v3314 = vmul.f32 %v3171, 1.442695
    %v3315 = vpow.pop %v3314
    %v3316 = vmul.f32 %v3172, 1.442695
    %v3317 = vpow.pop %v3316
    %v3318 = vmul.f32 %v3173, 1.442695
    %v3319 = vpow.pop %v3318
    %v3320 = vmul.f32 %v3174, 1.442695
    %v3321 = vpow.pop %v3320
    %v3322 = vmul.f32 %v3175, 1.442695
    %v3323 = vpow.pop %v3322
    %v3324 = vmul.f32 %v3176, 1.442695
    %v3325 = vpow.pop %v3324
    %v3326 = vmul.f32 %v3177, 1.442695
    %v3327 = vpow.pop %v3326
    %v3328 = vmul.f32 %v3178, 1.442695
    %v3329 = vpow.pop %v3328
    %v3330 = vmul.f32 %v3179, 1.442695
    %v3331 = vpow.pop %v3330
    %v3332 = vmul.f32 %v3180, 1.442695
    %v3333 = vpow.pop %v3332
    %v3334 = vmul.f32 %v3181, 1.442695
    %v3335 = vpow.pop %v3334
    %v3336 = vmul.f32 %v3182, 1.442695
    %v3337 = vpow.pop %v3336
    %v3338 = vmul.f32 %v3183, 1.442695
    %v3339 = vpow.pop %v3338
    %v3340 = vmul.f32 %v3184, 1.442695
    %v3341 = vpow.pop %v3340
    %v3342 = vmul.f32 %v3185, 1.442695
    %v3343 = vpow.pop %v3342
    %v3344 = vmul.f32 %v3186, 1.442695
    %v3345 = vpow.pop %v3344
    %v3346 = vmul.f32 %v3187, 1.442695
    %v3347 = vpow.pop %v3346
    %v3348 = vmul.f32 %v3188, 1.442695
    %v3349 = vpow.pop %v3348
    %v3350 = vmul.f32 %v3189, 1.442695
    %v3351 = vpow.pop %v3350
    %v3352 = vmul.f32 %v3190, 1.442695
    %v3353 = vpow.pop %v3352
    %v3354 = vmul.f32 %v3191, 1.442695
    %v3355 = vpow.pop %v3354
    %v3356 = vmul.f32 %v3192, 1.442695
    %v3357 = vpow.pop %v3356
    %v3358 = vmul.f32 %v3193, 1.442695
    %v3359 = vpow.pop %v3358
    %v3360 = vmul.f32 %v3194, 1.442695
    %v3361 = vpow.pop %v3360
    %v3362 = vmul.f32 %v3195, 1.442695
    %v3363 = vpow.pop %v3362
    %v3364 = vmul.f32 %v3196, 1.442695
    %v3365 = vpow.pop %v3364
    %v3366 = vmul.f32 %v3197, 1.442695
    %v3367 = vpow.pop %v3366
    %v3368 = vmul.f32 %v3198, 1.442695
    %v3369 = vpow.pop %v3368
    %v3370 = vmul.f32 %v3199, 1.442695
    %v3371 = vpow.pop %v3370
    %v3372 = vmul.f32 %v3200, 1.442695
    %v3373 = vpow.pop %v3372
    %v3374 = vmul.f32 %v3201, 1.442695
    %v3375 = vpow.pop %v3374
    %v3376 = vmul.f32 %v3202, 1.442695
    %v3377 = vpow.pop %v3376
    %v3378 = vmul.f32 %v3203, 1.442695
    %v3379 = vpow.pop %v3378
    %v3380 = vmul.f32 %v3204, 1.442695
    %v3381 = vpow.pop %v3380
    %v3382 = vmul.f32 %v3205, 1.442695
    %v3383 = vpow.pop %v3382
    %v3384 = vmul.f32 %v3206, 1.442695
    %v3385 = vpow.pop %v3384
    %v3386 = vmul.f32 %v3207, 1.442695
    %v3387 = vpow.pop %v3386
    %v3388 = vmul.f32 %v3208, 1.442695
    %v3389 = vpow.pop %v3388
    %v3390 = vmul.f32 %v3209, 1.442695
    %v3391 = vpow.pop %v3390
    %v3392 = vmul.f32 %v3210, 1.442695
    %v3393 = vpow.pop %v3392
    %v3394 = vmul.f32 %v3211, 1.442695
    %v3395 = vpow.pop %v3394
    %v3396 = vmul.f32 %v3212, 1.442695
    %v3397 = vpow.pop %v3396
    %v3398 = vmul.f32 %v3213, 1.442695
    %v3399 = vpow.pop %v3398
    %v3400 = vmul.f32 %v3214, 1.442695
    %v3401 = vpow.pop %v3400
    %v3402 = vmul.f32 %v3215, 1.442695
    %v3403 = vpow.pop %v3402
    %v3404 = vmul.f32 %v3216, 1.442695
    %v3405 = vpow.pop %v3404
    %v3406 = vmul.f32 %v3217, 1.442695
    %v3407 = vpow.pop %v3406
    %v3408 = vmul.f32 %v3218, 1.442695
    %v3409 = vpow.pop %v3408
    %v3410 = vmul.f32 %v3219, 1.442695
    %v3411 = vpow.pop %v3410
    %v3412 = vmul.f32 %v3220, 1.442695
    %v3413 = vpow.pop %v3412
    %v3414 = vmul.f32 %v3221, 1.442695
    %v3415 = vpow.pop %v3414
    %v3416 = vmul.f32 %v3222, 1.442695
    %v3417 = vpow.pop %v3416
    %v3418 = vmul.f32 %v3223, 1.442695
    %v3419 = vpow.pop %v3418
    %v3420 = vmul.f32 %v3224, 1.442695
    %v3421 = vpow.pop %v3420
    %v3422 = vmul.f32 %v3225, 1.442695
    %v3423 = vpow.pop %v3422
    %v3424 = vmul.f32 %v3226, 1.442695
    %v3425 = vpow.pop %v3424
    %v3426 = vmul.f32 %v3227, 1.442695
    %v3427 = vpow.pop %v3426
    %v3428 = vmul.f32 %v3228, 1.442695
    %v3429 = vpow.pop %v3428
    %v3430 = vmul.f32 %v3229, 1.442695
    %v3431 = vpow.pop %v3430
    %v3432 = vmul.f32 %v3230, 1.442695
    %v3433 = vpow.pop %v3432
    %v3434 = vmul.f32 %v3231, 1.442695
    %v3435 = vpow.pop %v3434
    %v3436 = vmul.f32 %v3232, 1.442695
    %v3437 = vpow.pop %v3436
    %v3438 = vmul.f32 %v3233, 1.442695
    %v3439 = vpow.pop %v3438
    %v3440 = vmul.f32 %v3234, 1.442695
    %v3441 = vpow.pop %v3440
    %v3442 = vmul.f32 %v3235, 1.442695
    %v3443 = vpow.pop %v3442
    %v3444 = vmul.f32 %v3236, 1.442695
    %v3445 = vpow.pop %v3444
    %v3446 = vmul.f32 %v3237, 1.442695
    %v3447 = vpow.pop %v3446
    %v3448 = vmul.f32 %v3238, 1.442695
    %v3449 = vpow.pop %v3448
    %v3450 = vmul.f32 %v3239, 1.442695
    %v3451 = vpow.pop %v3450
    %v3452 = vmul.f32 %v3240, 1.442695
    %v3453 = vpow.pop %v3452
    %v3454 = vmul.f32 %v3241, 1.442695
    %v3455 = vpow.pop %v3454
    %v3456 = vmul.f32 %v3242, 1.442695
    %v3457 = vpow.pop %v3456
    %v3458 = vmul.f32 %v3243, 1.442695
    %v3459 = vpow.pop %v3458
    %v3460 = vmul.f32 %v3244, 1.442695
    %v3461 = vpow.pop %v3460
    %v3462 = vmul.f32 %v3245, 1.442695
    %v3463 = vpow.pop %v3462
    %v3464 = vmul.f32 %v3246, 1.442695
    %v3465 = vpow.pop %v3464
    %v3466 = vmul.f32 %v3247, 1.442695
    %v3467 = vpow.pop %v3466
    %v3468 = vmul.f32 %v3248, 1.442695
    %v3469 = vpow.pop %v3468
    %v3470 = vmul.f32 %v3249, 1.442695
    %v3471 = vpow.pop %v3470
    %v3472 = vmul.f32 %v3250, 1.442695
    %v3473 = vpow.pop %v3472
    %v3474 = vmul.f32 %v3251, 1.442695
    %v3475 = vpow.pop %v3474
    %v3476 = vmul.f32 %v3252, 1.442695
    %v3477 = vpow.pop %v3476
    %v3478 = vmul.f32 %v3253, 1.442695
    %v3479 = vpow.pop %v3478
    %v3480 = vmul.f32 %v3254, 1.442695
    %v3481 = vpow.pop %v3480
    %v3482 = vmul.f32 %v3255, 1.442695
    %v3483 = vpow.pop %v3482
    %v3484 = vmul.f32 %v3256, 1.442695
    %v3485 = vpow.pop %v3484
    %v3486 = vmul.f32 %v3257, 1.442695
    %v3487 = vpow.pop %v3486
    %v3488 = vmul.f32 %v3258, 1.442695
    %v3489 = vpow.pop %v3488
    %v3490 = vmul.f32 %v3259, 1.442695
    %v3491 = vpow.pop %v3490
    %v3492 = vmul.f32 %v3260, 1.442695
    %v3493 = vpow.pop %v3492
    %v3494 = vmul.f32 %v3261, 1.442695
    %v3495 = vpow.pop %v3494
    %v3496 = vmul.f32 %v3262, 1.442695
    %v3497 = vpow.pop %v3496
    %v3498 = vmul.f32 %v3263, 1.442695
    %v3499 = vpow.pop %v3498
    %v3500 = vmul.f32 %v3264, 1.442695
    %v3501 = vpow.pop %v3500
    %v3502 = vmul.f32 %v3265, 1.442695
    %v3503 = vpow.pop %v3502
    %v3504 = vmul.f32 %v3266, 1.442695
    %v3505 = vpow.pop %v3504
    %v3506 = vmul.f32 %v3267, 1.442695
    %v3507 = vpow.pop %v3506
    %v3508 = vmul.f32 %v3268, 1.442695
    %v3509 = vpow.pop %v3508
    %v3510 = vmul.f32 %v3269, 1.442695
    %v3511 = vpow.pop %v3510
    %v3512 = vmul.f32 %v3270, 1.442695
    %v3513 = vpow.pop %v3512
    %v3514 = vmul.f32 %v3271, 1.442695
    %v3515 = vpow.pop %v3514
    %v3516 = vmul.f32 %v3272, 1.442695
    %v3517 = vpow.pop %v3516
    %v3518 = vmul.f32 %v3273, 1.442695
    %v3519 = vpow.pop %v3518
    %v3520 = vmul.f32 %v3274, 1.442695
    %v3521 = vpow.pop %v3520
    %v3522 = vmul.f32 %v3275, 1.442695
    %v3523 = vpow.pop %v3522
    %v3524 = vmul.f32 %v3276, 1.442695
    %v3525 = vpow.pop %v3524
    %v3526 = vmul.f32 %v3277, 1.442695
    %v3527 = vpow.pop %v3526
    %v3528 = vmul.f32 %v3278, 1.442695
    %v3529 = vpow.pop %v3528
    %v3530 = vmul.f32 %v3279, 1.442695
    %v3531 = vpow.pop %v3530
    %v3532 = vmul.f32 %v3280, 1.442695
    %v3533 = vpow.pop %v3532
    %v3534 = vmul.f32 %v3281, 1.442695
    %v3535 = vpow.pop %v3534
    %v3536 = vmul.f32 %v3282, 1.442695
    %v3537 = vpow.pop %v3536
    %v3538 = vmul.f32 %v3283, 1.442695
    %v3539 = vpow.pop %v3538
    %v3540 = vmul.f32 %v2900, %v3285
    %v3541 = vmul.f32 %v2901, %v3287
    %v3542 = vmul.f32 %v2902, %v3289
    %v3543 = vmul.f32 %v2903, %v3291
    %v3544 = vmul.f32 %v2904, %v3293
    %v3545 = vmul.f32 %v2905, %v3295
    %v3546 = vmul.f32 %v2906, %v3297
    %v3547 = vmul.f32 %v2907, %v3299
    %v3548 = vmul.f32 %v2908, %v3301
    %v3549 = vmul.f32 %v2909, %v3303
    %v3550 = vmul.f32 %v2910, %v3305
    %v3551 = vmul.f32 %v2911, %v3307
    %v3552 = vmul.f32 %v2912, %v3309
    %v3553 = vmul.f32 %v2913, %v3311
    %v3554 = vmul.f32 %v2914, %v3313
    %v3555 = vmul.f32 %v2915, %v3315
    %v3556 = vmul.f32 %v2916, %v3317
    %v3557 = vmul.f32 %v2917, %v3319
    %v3558 = vmul.f32 %v2918, %v3321
    %v3559 = vmul.f32 %v2919, %v3323
    %v3560 = vmul.f32 %v2920, %v3325
    %v3561 = vmul.f32 %v2921, %v3327
    %v3562 = vmul.f32 %v2922, %v3329
    %v3563 = vmul.f32 %v2923, %v3331
    %v3564 = vmul.f32 %v2924, %v3333
    %v3565 = vmul.f32 %v2925, %v3335
    %v3566 = vmul.f32 %v2926, %v3337
    %v3567 = vmul.f32 %v2927, %v3339
    %v3568 = vmul.f32 %v2928, %v3341
    %v3569 = vmul.f32 %v2929, %v3343
    %v3570 = vmul.f32 %v2930, %v3345
    %v3571 = vmul.f32 %v2931, %v3347
    %v3572 = vmul.f32 %v2932, %v3349
    %v3573 = vmul.f32 %v2933, %v3351
    %v3574 = vmul.f32 %v2934, %v3353
    %v3575 = vmul.f32 %v2935, %v3355
    %v3576 = vmul.f32 %v2936, %v3357
    %v3577 = vmul.f32 %v2937, %v3359
    %v3578 = vmul.f32 %v2938, %v3361
    %v3579 = vmul.f32 %v2939, %v3363
    %v3580 = vmul.f32 %v2940, %v3365
    %v3581 = vmul.f32 %v2941, %v3367
    %v3582 = vmul.f32 %v2942, %v3369
    %v3583 = vmul.f32 %v2943, %v3371
    %v3584 = vmul.f32 %v2944, %v3373
    %v3585 = vmul.f32 %v2945, %v3375
    %v3586 = vmul.f32 %v2946, %v3377
    %v3587 = vmul.f32 %v2947, %v3379
    %v3588 = vmul.f32 %v2948, %v3381
    %v3589 = vmul.f32 %v2949, %v3383
    %v3590 = vmul.f32 %v2950, %v3385
    %v3591 = vmul.f32 %v2951, %v3387
    %v3592 = vmul.f32 %v2952, %v3389
    %v3593 = vmul.f32 %v2953, %v3391
    %v3594 = vmul.f32 %v2954, %v3393
    %v3595 = vmul.f32 %v2955, %v3395
    %v3596 = vmul.f32 %v2956, %v3397
    %v3597 = vmul.f32 %v2957, %v3399
    %v3598 = vmul.f32 %v2958, %v3401
    %v3599 = vmul.f32 %v2959, %v3403
    %v3600 = vmul.f32 %v2960, %v3405
    %v3601 = vmul.f32 %v2961, %v3407
    %v3602 = vmul.f32 %v2962, %v3409
    %v3603 = vmul.f32 %v2963, %v3411
    %v3604 = vmul.f32 %v2964, %v3413
    %v3605 = vmul.f32 %v2965, %v3415
    %v3606 = vmul.f32 %v2966, %v3417
    %v3607 = vmul.f32 %v2967, %v3419
    %v3608 = vmul.f32 %v2968, %v3421
    %v3609 = vmul.f32 %v2969, %v3423
    %v3610 = vmul.f32 %v2970, %v3425
    %v3611 = vmul.f32 %v2971, %v3427
    %v3612 = vmul.f32 %v2972, %v3429
    %v3613 = vmul.f32 %v2973, %v3431
    %v3614 = vmul.f32 %v2974, %v3433
    %v3615 = vmul.f32 %v2975, %v3435
    %v3616 = vmul.f32 %v2976, %v3437
    %v3617 = vmul.f32 %v2977, %v3439
    %v3618 = vmul.f32 %v2978, %v3441
    %v3619 = vmul.f32 %v2979, %v3443
    %v3620 = vmul.f32 %v2980, %v3445
    %v3621 = vmul.f32 %v2981, %v3447
    %v3622 = vmul.f32 %v2982, %v3449
    %v3623 = vmul.f32 %v2983, %v3451
    %v3624 = vmul.f32 %v2984, %v3453
    %v3625 = vmul.f32 %v2985, %v3455
    %v3626 = vmul.f32 %v2986, %v3457
    %v3627 = vmul.f32 %v2987, %v3459
    %v3628 = vmul.f32 %v2988, %v3461
    %v3629 = vmul.f32 %v2989, %v3463
    %v3630 = vmul.f32 %v2990, %v3465
    %v3631 = vmul.f32 %v2991, %v3467
    %v3632 = vmul.f32 %v2992, %v3469
    %v3633 = vmul.f32 %v2993, %v3471
    %v3634 = vmul.f32 %v2994, %v3473
    %v3635 = vmul.f32 %v2995, %v3475
    %v3636 = vmul.f32 %v2996, %v3477
    %v3637 = vmul.f32 %v2997, %v3479
    %v3638 = vmul.f32 %v2998, %v3481
    %v3639 = vmul.f32 %v2999, %v3483
    %v3640 = vmul.f32 %v3000, %v3485
    %v3641 = vmul.f32 %v3001, %v3487
    %v3642 = vmul.f32 %v3002, %v3489
    %v3643 = vmul.f32 %v3003, %v3491
    %v3644 = vmul.f32 %v3004, %v3493
    %v3645 = vmul.f32 %v3005, %v3495
    %v3646 = vmul.f32 %v3006, %v3497
    %v3647 = vmul.f32 %v3007, %v3499
    %v3648 = vmul.f32 %v3008, %v3501
    %v3649 = vmul.f32 %v3009, %v3503
    %v3650 = vmul.f32 %v3010, %v3505
    %v3651 = vmul.f32 %v3011, %v3507
    %v3652 = vmul.f32 %v3012, %v3509
    %v3653 = vmul.f32 %v3013, %v3511
    %v3654 = vmul.f32 %v3014, %v3513
    %v3655 = vmul.f32 %v3015, %v3515
    %v3656 = vmul.f32 %v3016, %v3517
    %v3657 = vmul.f32 %v3017, %v3519
    %v3658 = vmul.f32 %v3018, %v3521
    %v3659 = vmul.f32 %v3019, %v3523
    %v3660 = vmul.f32 %v3020, %v3525
    %v3661 = vmul.f32 %v3021, %v3527
    %v3662 = vmul.f32 %v3022, %v3529
    %v3663 = vmul.f32 %v3023, %v3531
    %v3664 = vmul.f32 %v3024, %v3533
    %v3665 = vmul.f32 %v3025, %v3535
    %v3666 = vmul.f32 %v3026, %v3537
    %v3667 = vmul.f32 %v3027, %v3539
    %v3668 = vsub.f32 1.0, %v3540
    %v3669 = vsub.f32 1.0, %v3541
    %v3670 = vsub.f32 1.0, %v3542
    %v3671 = vsub.f32 1.0, %v3543
    %v3672 = vsub.f32 1.0, %v3544
    %v3673 = vsub.f32 1.0, %v3545
    %v3674 = vsub.f32 1.0, %v3546
    %v3675 = vsub.f32 1.0, %v3547
    %v3676 = vsub.f32 1.0, %v3548
    %v3677 = vsub.f32 1.0, %v3549
    %v3678 = vsub.f32 1.0, %v3550
    %v3679 = vsub.f32 1.0, %v3551
    %v3680 = vsub.f32 1.0, %v3552
    %v3681 = vsub.f32 1.0, %v3553
    %v3682 = vsub.f32 1.0, %v3554
    %v3683 = vsub.f32 1.0, %v3555
    %v3684 = vsub.f32 1.0, %v3556
    %v3685 = vsub.f32 1.0, %v3557
    %v3686 = vsub.f32 1.0, %v3558
    %v3687 = vsub.f32 1.0, %v3559
    %v3688 = vsub.f32 1.0, %v3560
    %v3689 = vsub.f32 1.0, %v3561
    %v3690 = vsub.f32 1.0, %v3562
    %v3691 = vsub.f32 1.0, %v3563
    %v3692 = vsub.f32 1.0, %v3564
    %v3693 = vsub.f32 1.0, %v3565
    %v3694 = vsub.f32 1.0, %v3566
    %v3695 = vsub.f32 1.0, %v3567
    %v3696 = vsub.f32 1.0, %v3568
    %v3697 = vsub.f32 1.0, %v3569
    %v3698 = vsub.f32 1.0, %v3570
    %v3699 = vsub.f32 1.0, %v3571
    %v3700 = vsub.f32 1.0, %v3572
    %v3701 = vsub.f32 1.0, %v3573
    %v3702 = vsub.f32 1.0, %v3574
    %v3703 = vsub.f32 1.0, %v3575
    %v3704 = vsub.f32 1.0, %v3576
    %v3705 = vsub.f32 1.0, %v3577
    %v3706 = vsub.f32 1.0, %v3578
    %v3707 = vsub.f32 1.0, %v3579
    %v3708 = vsub.f32 1.0, %v3580
    %v3709 = vsub.f32 1.0, %v3581
    %v3710 = vsub.f32 1.0, %v3582
    %v3711 = vsub.f32 1.0, %v3583
    %v3712 = vsub.f32 1.0, %v3584
    %v3713 = vsub.f32 1.0, %v3585
    %v3714 = vsub.f32 1.0, %v3586
    %v3715 = vsub.f32 1.0, %v3587
    %v3716 = vsub.f32 1.0, %v3588
    %v3717 = vsub.f32 1.0, %v3589
    %v3718 = vsub.f32 1.0, %v3590
    %v3719 = vsub.f32 1.0, %v3591
    %v3720 = vsub.f32 1.0, %v3592
    %v3721 = vsub.f32 1.0, %v3593
    %v3722 = vsub.f32 1.0, %v3594
    %v3723 = vsub.f32 1.0, %v3595
    %v3724 = vsub.f32 1.0, %v3596
    %v3725 = vsub.f32 1.0, %v3597
    %v3726 = vsub.f32 1.0, %v3598
    %v3727 = vsub.f32 1.0, %v3599
    %v3728 = vsub.f32 1.0, %v3600
    %v3729 = vsub.f32 1.0, %v3601
    %v3730 = vsub.f32 1.0, %v3602
    %v3731 = vsub.f32 1.0, %v3603
    %v3732 = vsub.f32 1.0, %v3604
    %v3733 = vsub.f32 1.0, %v3605
    %v3734 = vsub.f32 1.0, %v3606
    %v3735 = vsub.f32 1.0, %v3607
    %v3736 = vsub.f32 1.0, %v3608
    %v3737 = vsub.f32 1.0, %v3609
    %v3738 = vsub.f32 1.0, %v3610
    %v3739 = vsub.f32 1.0, %v3611
    %v3740 = vsub.f32 1.0, %v3612
    %v3741 = vsub.f32 1.0, %v3613
    %v3742 = vsub.f32 1.0, %v3614
    %v3743 = vsub.f32 1.0, %v3615
    %v3744 = vsub.f32 1.0, %v3616
    %v3745 = vsub.f32 1.0, %v3617
    %v3746 = vsub.f32 1.0, %v3618
    %v3747 = vsub.f32 1.0, %v3619
    %v3748 = vsub.f32 1.0, %v3620
    %v3749 = vsub.f32 1.0, %v3621
    %v3750 = vsub.f32 1.0, %v3622
    %v3751 = vsub.f32 1.0, %v3623
    %v3752 = vsub.f32 1.0, %v3624
    %v3753 = vsub.f32 1.0, %v3625
    %v3754 = vsub.f32 1.0, %v3626
    %v3755 = vsub.f32 1.0, %v3627
    %v3756 = vsub.f32 1.0, %v3628
    %v3757 = vsub.f32 1.0, %v3629
    %v3758 = vsub.f32 1.0, %v3630
    %v3759 = vsub.f32 1.0, %v3631
    %v3760 = vsub.f32 1.0, %v3632
    %v3761 = vsub.f32 1.0, %v3633
    %v3762 = vsub.f32 1.0, %v3634
    %v3763 = vsub.f32 1.0, %v3635
    %v3764 = vsub.f32 1.0, %v3636
    %v3765 = vsub.f32 1.0, %v3637
    %v3766 = vsub.f32 1.0, %v3638
    %v3767 = vsub.f32 1.0, %v3639
    %v3768 = vsub.f32 1.0, %v3640
    %v3769 = vsub.f32 1.0, %v3641
    %v3770 = vsub.f32 1.0, %v3642
    %v3771 = vsub.f32 1.0, %v3643
    %v3772 = vsub.f32 1.0, %v3644
    %v3773 = vsub.f32 1.0, %v3645
    %v3774 = vsub.f32 1.0, %v3646
    %v3775 = vsub.f32 1.0, %v3647
    %v3776 = vsub.f32 1.0, %v3648
    %v3777 = vsub.f32 1.0, %v3649
    %v3778 = vsub.f32 1.0, %v3650
    %v3779 = vsub.f32 1.0, %v3651
    %v3780 = vsub.f32 1.0, %v3652
    %v3781 = vsub.f32 1.0, %v3653
    %v3782 = vsub.f32 1.0, %v3654
    %v3783 = vsub.f32 1.0, %v3655
    %v3784 = vsub.f32 1.0, %v3656
    %v3785 = vsub.f32 1.0, %v3657
    %v3786 = vsub.f32 1.0, %v3658
    %v3787 = vsub.f32 1.0, %v3659
    %v3788 = vsub.f32 1.0, %v3660
    %v3789 = vsub.f32 1.0, %v3661
    %v3790 = vsub.f32 1.0, %v3662
    %v3791 = vsub.f32 1.0, %v3663
    %v3792 = vsub.f32 1.0, %v3664
    %v3793 = vsub.f32 1.0, %v3665
    %v3794 = vsub.f32 1.0, %v3666
    %v3795 = vsub.f32 1.0, %v3667
    %vm3796 = vcmp.lt.f32.partialorder %v852, 0.0
    %vm3797 = vcmp.lt.f32.partialorder %v853, 0.0
    %vm3798 = vcmp.lt.f32.partialorder %v854, 0.0
    %vm3799 = vcmp.lt.f32.partialorder %v855, 0.0
    %vm3800 = vcmp.lt.f32.partialorder %v856, 0.0
    %vm3801 = vcmp.lt.f32.partialorder %v857, 0.0
    %vm3802 = vcmp.lt.f32.partialorder %v858, 0.0
    %vm3803 = vcmp.lt.f32.partialorder %v859, 0.0
    %vm3804 = vcmp.lt.f32.partialorder %v860, 0.0
    %vm3805 = vcmp.lt.f32.partialorder %v861, 0.0
    %vm3806 = vcmp.lt.f32.partialorder %v862, 0.0
    %vm3807 = vcmp.lt.f32.partialorder %v863, 0.0
    %vm3808 = vcmp.lt.f32.partialorder %v864, 0.0
    %vm3809 = vcmp.lt.f32.partialorder %v865, 0.0
    %vm3810 = vcmp.lt.f32.partialorder %v866, 0.0
    %vm3811 = vcmp.lt.f32.partialorder %v867, 0.0
    %vm3812 = vcmp.lt.f32.partialorder %v868, 0.0
    %vm3813 = vcmp.lt.f32.partialorder %v869, 0.0
    %vm3814 = vcmp.lt.f32.partialorder %v870, 0.0
    %vm3815 = vcmp.lt.f32.partialorder %v871, 0.0
    %vm3816 = vcmp.lt.f32.partialorder %v872, 0.0
    %vm3817 = vcmp.lt.f32.partialorder %v873, 0.0
    %vm3818 = vcmp.lt.f32.partialorder %v874, 0.0
    %vm3819 = vcmp.lt.f32.partialorder %v875, 0.0
    %vm3820 = vcmp.lt.f32.partialorder %v876, 0.0
    %vm3821 = vcmp.lt.f32.partialorder %v877, 0.0
    %vm3822 = vcmp.lt.f32.partialorder %v878, 0.0
    %vm3823 = vcmp.lt.f32.partialorder %v879, 0.0
    %vm3824 = vcmp.lt.f32.partialorder %v880, 0.0
    %vm3825 = vcmp.lt.f32.partialorder %v881, 0.0
    %vm3826 = vcmp.lt.f32.partialorder %v882, 0.0
    %vm3827 = vcmp.lt.f32.partialorder %v883, 0.0
    %vm3828 = vcmp.lt.f32.partialorder %v884, 0.0
    %vm3829 = vcmp.lt.f32.partialorder %v885, 0.0
    %vm3830 = vcmp.lt.f32.partialorder %v886, 0.0
    %vm3831 = vcmp.lt.f32.partialorder %v887, 0.0
    %vm3832 = vcmp.lt.f32.partialorder %v888, 0.0
    %vm3833 = vcmp.lt.f32.partialorder %v889, 0.0
    %vm3834 = vcmp.lt.f32.partialorder %v890, 0.0
    %vm3835 = vcmp.lt.f32.partialorder %v891, 0.0
    %vm3836 = vcmp.lt.f32.partialorder %v892, 0.0
    %vm3837 = vcmp.lt.f32.partialorder %v893, 0.0
    %vm3838 = vcmp.lt.f32.partialorder %v894, 0.0
    %vm3839 = vcmp.lt.f32.partialorder %v895, 0.0
    %vm3840 = vcmp.lt.f32.partialorder %v896, 0.0
    %vm3841 = vcmp.lt.f32.partialorder %v897, 0.0
    %vm3842 = vcmp.lt.f32.partialorder %v898, 0.0
    %vm3843 = vcmp.lt.f32.partialorder %v899, 0.0
    %vm3844 = vcmp.lt.f32.partialorder %v900, 0.0
    %vm3845 = vcmp.lt.f32.partialorder %v901, 0.0
    %vm3846 = vcmp.lt.f32.partialorder %v902, 0.0
    %vm3847 = vcmp.lt.f32.partialorder %v903, 0.0
    %vm3848 = vcmp.lt.f32.partialorder %v904, 0.0
    %vm3849 = vcmp.lt.f32.partialorder %v905, 0.0
    %vm3850 = vcmp.lt.f32.partialorder %v906, 0.0
    %vm3851 = vcmp.lt.f32.partialorder %v907, 0.0
    %vm3852 = vcmp.lt.f32.partialorder %v908, 0.0
    %vm3853 = vcmp.lt.f32.partialorder %v909, 0.0
    %vm3854 = vcmp.lt.f32.partialorder %v910, 0.0
    %vm3855 = vcmp.lt.f32.partialorder %v911, 0.0
    %vm3856 = vcmp.lt.f32.partialorder %v912, 0.0
    %vm3857 = vcmp.lt.f32.partialorder %v913, 0.0
    %vm3858 = vcmp.lt.f32.partialorder %v914, 0.0
    %vm3859 = vcmp.lt.f32.partialorder %v915, 0.0
    %vm3860 = vcmp.lt.f32.partialorder %v916, 0.0
    %vm3861 = vcmp.lt.f32.partialorder %v917, 0.0
    %vm3862 = vcmp.lt.f32.partialorder %v918, 0.0
    %vm3863 = vcmp.lt.f32.partialorder %v919, 0.0
    %vm3864 = vcmp.lt.f32.partialorder %v920, 0.0
    %vm3865 = vcmp.lt.f32.partialorder %v921, 0.0
    %vm3866 = vcmp.lt.f32.partialorder %v922, 0.0
    %vm3867 = vcmp.lt.f32.partialorder %v923, 0.0
    %vm3868 = vcmp.lt.f32.partialorder %v924, 0.0
    %vm3869 = vcmp.lt.f32.partialorder %v925, 0.0
    %vm3870 = vcmp.lt.f32.partialorder %v926, 0.0
    %vm3871 = vcmp.lt.f32.partialorder %v927, 0.0
    %vm3872 = vcmp.lt.f32.partialorder %v928, 0.0
    %vm3873 = vcmp.lt.f32.partialorder %v929, 0.0
    %vm3874 = vcmp.lt.f32.partialorder %v930, 0.0
    %vm3875 = vcmp.lt.f32.partialorder %v931, 0.0
    %vm3876 = vcmp.lt.f32.partialorder %v932, 0.0
    %vm3877 = vcmp.lt.f32.partialorder %v933, 0.0
    %vm3878 = vcmp.lt.f32.partialorder %v934, 0.0
    %vm3879 = vcmp.lt.f32.partialorder %v935, 0.0
    %vm3880 = vcmp.lt.f32.partialorder %v936, 0.0
    %vm3881 = vcmp.lt.f32.partialorder %v937, 0.0
    %vm3882 = vcmp.lt.f32.partialorder %v938, 0.0
    %vm3883 = vcmp.lt.f32.partialorder %v939, 0.0
    %vm3884 = vcmp.lt.f32.partialorder %v940, 0.0
    %vm3885 = vcmp.lt.f32.partialorder %v941, 0.0
    %vm3886 = vcmp.lt.f32.partialorder %v942, 0.0
    %vm3887 = vcmp.lt.f32.partialorder %v943, 0.0
    %vm3888 = vcmp.lt.f32.partialorder %v944, 0.0
    %vm3889 = vcmp.lt.f32.partialorder %v945, 0.0
    %vm3890 = vcmp.lt.f32.partialorder %v946, 0.0
    %vm3891 = vcmp.lt.f32.partialorder %v947, 0.0
    %vm3892 = vcmp.lt.f32.partialorder %v948, 0.0
    %vm3893 = vcmp.lt.f32.partialorder %v949, 0.0
    %vm3894 = vcmp.lt.f32.partialorder %v950, 0.0
    %vm3895 = vcmp.lt.f32.partialorder %v951, 0.0
    %vm3896 = vcmp.lt.f32.partialorder %v952, 0.0
    %vm3897 = vcmp.lt.f32.partialorder %v953, 0.0
    %vm3898 = vcmp.lt.f32.partialorder %v954, 0.0
    %vm3899 = vcmp.lt.f32.partialorder %v955, 0.0
    %vm3900 = vcmp.lt.f32.partialorder %v956, 0.0
    %vm3901 = vcmp.lt.f32.partialorder %v957, 0.0
    %vm3902 = vcmp.lt.f32.partialorder %v958, 0.0
    %vm3903 = vcmp.lt.f32.partialorder %v959, 0.0
    %vm3904 = vcmp.lt.f32.partialorder %v960, 0.0
    %vm3905 = vcmp.lt.f32.partialorder %v961, 0.0
    %vm3906 = vcmp.lt.f32.partialorder %v962, 0.0
    %vm3907 = vcmp.lt.f32.partialorder %v963, 0.0
    %vm3908 = vcmp.lt.f32.partialorder %v964, 0.0
    %vm3909 = vcmp.lt.f32.partialorder %v965, 0.0
    %vm3910 = vcmp.lt.f32.partialorder %v966, 0.0
    %vm3911 = vcmp.lt.f32.partialorder %v967, 0.0
    %vm3912 = vcmp.lt.f32.partialorder %v968, 0.0
    %vm3913 = vcmp.lt.f32.partialorder %v969, 0.0
    %vm3914 = vcmp.lt.f32.partialorder %v970, 0.0
    %vm3915 = vcmp.lt.f32.partialorder %v971, 0.0
    %vm3916 = vcmp.lt.f32.partialorder %v972, 0.0
    %vm3917 = vcmp.lt.f32.partialorder %v973, 0.0
    %vm3918 = vcmp.lt.f32.partialorder %v974, 0.0
    %vm3919 = vcmp.lt.f32.partialorder %v975, 0.0
    %vm3920 = vcmp.lt.f32.partialorder %v976, 0.0
    %vm3921 = vcmp.lt.f32.partialorder %v977, 0.0
    %vm3922 = vcmp.lt.f32.partialorder %v978, 0.0
    %vm3923 = vcmp.lt.f32.partialorder %v979, 0.0
    %v3924 = vsub.f32 0.0, %v3668
    %v3925 = vsub.f32 0.0, %v3669
    %v3926 = vsub.f32 0.0, %v3670
    %v3927 = vsub.f32 0.0, %v3671
    %v3928 = vsub.f32 0.0, %v3672
    %v3929 = vsub.f32 0.0, %v3673
    %v3930 = vsub.f32 0.0, %v3674
    %v3931 = vsub.f32 0.0, %v3675
    %v3932 = vsub.f32 0.0, %v3676
    %v3933 = vsub.f32 0.0, %v3677
    %v3934 = vsub.f32 0.0, %v3678
    %v3935 = vsub.f32 0.0, %v3679
    %v3936 = vsub.f32 0.0, %v3680
    %v3937 = vsub.f32 0.0, %v3681
    %v3938 = vsub.f32 0.0, %v3682
    %v3939 = vsub.f32 0.0, %v3683
    %v3940 = vsub.f32 0.0, %v3684
    %v3941 = vsub.f32 0.0, %v3685
    %v3942 = vsub.f32 0.0, %v3686
    %v3943 = vsub.f32 0.0, %v3687
    %v3944 = vsub.f32 0.0, %v3688
    %v3945 = vsub.f32 0.0, %v3689
    %v3946 = vsub.f32 0.0, %v3690
    %v3947 = vsub.f32 0.0, %v3691
    %v3948 = vsub.f32 0.0, %v3692
    %v3949 = vsub.f32 0.0, %v3693
    %v3950 = vsub.f32 0.0, %v3694
    %v3951 = vsub.f32 0.0, %v3695
    %v3952 = vsub.f32 0.0, %v3696
    %v3953 = vsub.f32 0.0, %v3697
    %v3954 = vsub.f32 0.0, %v3698
    %v3955 = vsub.f32 0.0, %v3699
    %v3956 = vsub.f32 0.0, %v3700
    %v3957 = vsub.f32 0.0, %v3701
    %v3958 = vsub.f32 0.0, %v3702
    %v3959 = vsub.f32 0.0, %v3703
    %v3960 = vsub.f32 0.0, %v3704
    %v3961 = vsub.f32 0.0, %v3705
    %v3962 = vsub.f32 0.0, %v3706
    %v3963 = vsub.f32 0.0, %v3707
    %v3964 = vsub.f32 0.0, %v3708
    %v3965 = vsub.f32 0.0, %v3709
    %v3966 = vsub.f32 0.0, %v3710
    %v3967 = vsub.f32 0.0, %v3711
    %v3968 = vsub.f32 0.0, %v3712
    %v3969 = vsub.f32 0.0, %v3713
    %v3970 = vsub.f32 0.0, %v3714
    %v3971 = vsub.f32 0.0, %v3715
    %v3972 = vsub.f32 0.0, %v3716
    %v3973 = vsub.f32 0.0, %v3717
    %v3974 = vsub.f32 0.0, %v3718
    %v3975 = vsub.f32 0.0, %v3719
    %v3976 = vsub.f32 0.0, %v3720
    %v3977 = vsub.f32 0.0, %v3721
    %v3978 = vsub.f32 0.0, %v3722
    %v3979 = vsub.f32 0.0, %v3723
    %v3980 = vsub.f32 0.0, %v3724
    %v3981 = vsub.f32 0.0, %v3725
    %v3982 = vsub.f32 0.0, %v3726
    %v3983 = vsub.f32 0.0, %v3727
    %v3984 = vsub.f32 0.0, %v3728
    %v3985 = vsub.f32 0.0, %v3729
    %v3986 = vsub.f32 0.0, %v3730
    %v3987 = vsub.f32 0.0, %v3731
    %v3988 = vsub.f32 0.0, %v3732
    %v3989 = vsub.f32 0.0, %v3733
    %v3990 = vsub.f32 0.0, %v3734
    %v3991 = vsub.f32 0.0, %v3735
    %v3992 = vsub.f32 0.0, %v3736
    %v3993 = vsub.f32 0.0, %v3737
    %v3994 = vsub.f32 0.0, %v3738
    %v3995 = vsub.f32 0.0, %v3739
    %v3996 = vsub.f32 0.0, %v3740
    %v3997 = vsub.f32 0.0, %v3741
    %v3998 = vsub.f32 0.0, %v3742
    %v3999 = vsub.f32 0.0, %v3743
    %v4000 = vsub.f32 0.0, %v3744
    %v4001 = vsub.f32 0.0, %v3745
    %v4002 = vsub.f32 0.0, %v3746
    %v4003 = vsub.f32 0.0, %v3747
    %v4004 = vsub.f32 0.0, %v3748
    %v4005 = vsub.f32 0.0, %v3749
    %v4006 = vsub.f32 0.0, %v3750
    %v4007 = vsub.f32 0.0, %v3751
    %v4008 = vsub.f32 0.0, %v3752
    %v4009 = vsub.f32 0.0, %v3753
    %v4010 = vsub.f32 0.0, %v3754
    %v4011 = vsub.f32 0.0, %v3755
    %v4012 = vsub.f32 0.0, %v3756
    %v4013 = vsub.f32 0.0, %v3757
    %v4014 = vsub.f32 0.0, %v3758
    %v4015 = vsub.f32 0.0, %v3759
    %v4016 = vsub.f32 0.0, %v3760
    %v4017 = vsub.f32 0.0, %v3761
    %v4018 = vsub.f32 0.0, %v3762
    %v4019 = vsub.f32 0.0, %v3763
    %v4020 = vsub.f32 0.0, %v3764
    %v4021 = vsub.f32 0.0, %v3765
    %v4022 = vsub.f32 0.0, %v3766
    %v4023 = vsub.f32 0.0, %v3767
    %v4024 = vsub.f32 0.0, %v3768
    %v4025 = vsub.f32 0.0, %v3769
    %v4026 = vsub.f32 0.0, %v3770
    %v4027 = vsub.f32 0.0, %v3771
    %v4028 = vsub.f32 0.0, %v3772
    %v4029 = vsub.f32 0.0, %v3773
    %v4030 = vsub.f32 0.0, %v3774
    %v4031 = vsub.f32 0.0, %v3775
    %v4032 = vsub.f32 0.0, %v3776
    %v4033 = vsub.f32 0.0, %v3777
    %v4034 = vsub.f32 0.0, %v3778
    %v4035 = vsub.f32 0.0, %v3779
    %v4036 = vsub.f32 0.0, %v3780
    %v4037 = vsub.f32 0.0, %v3781
    %v4038 = vsub.f32 0.0, %v3782
    %v4039 = vsub.f32 0.0, %v3783
    %v4040 = vsub.f32 0.0, %v3784
    %v4041 = vsub.f32 0.0, %v3785
    %v4042 = vsub.f32 0.0, %v3786
    %v4043 = vsub.f32 0.0, %v3787
    %v4044 = vsub.f32 0.0, %v3788
    %v4045 = vsub.f32 0.0, %v3789
    %v4046 = vsub.f32 0.0, %v3790
    %v4047 = vsub.f32 0.0, %v3791
    %v4048 = vsub.f32 0.0, %v3792
    %v4049 = vsub.f32 0.0, %v3793
    %v4050 = vsub.f32 0.0, %v3794
    %v4051 = vsub.f32 0.0, %v3795
    %v4052 = vsel %vm3796, %v3924, %v3668
    %v4053 = vsel %vm3797, %v3925, %v3669
    %v4054 = vsel %vm3798, %v3926, %v3670
    %v4055 = vsel %vm3799, %v3927, %v3671
    %v4056 = vsel %vm3800, %v3928, %v3672
    %v4057 = vsel %vm3801, %v3929, %v3673
    %v4058 = vsel %vm3802, %v3930, %v3674
    %v4059 = vsel %vm3803, %v3931, %v3675
    %v4060 = vsel %vm3804, %v3932, %v3676
    %v4061 = vsel %vm3805, %v3933, %v3677
    %v4062 = vsel %vm3806, %v3934, %v3678
    %v4063 = vsel %vm3807, %v3935, %v3679
    %v4064 = vsel %vm3808, %v3936, %v3680
    %v4065 = vsel %vm3809, %v3937, %v3681
    %v4066 = vsel %vm3810, %v3938, %v3682
    %v4067 = vsel %vm3811, %v3939, %v3683
    %v4068 = vsel %vm3812, %v3940, %v3684
    %v4069 = vsel %vm3813, %v3941, %v3685
    %v4070 = vsel %vm3814, %v3942, %v3686
    %v4071 = vsel %vm3815, %v3943, %v3687
    %v4072 = vsel %vm3816, %v3944, %v3688
    %v4073 = vsel %vm3817, %v3945, %v3689
    %v4074 = vsel %vm3818, %v3946, %v3690
    %v4075 = vsel %vm3819, %v3947, %v3691
    %v4076 = vsel %vm3820, %v3948, %v3692
    %v4077 = vsel %vm3821, %v3949, %v3693
    %v4078 = vsel %vm3822, %v3950, %v3694
    %v4079 = vsel %vm3823, %v3951, %v3695
    %v4080 = vsel %vm3824, %v3952, %v3696
    %v4081 = vsel %vm3825, %v3953, %v3697
    %v4082 = vsel %vm3826, %v3954, %v3698
    %v4083 = vsel %vm3827, %v3955, %v3699
    %v4084 = vsel %vm3828, %v3956, %v3700
    %v4085 = vsel %vm3829, %v3957, %v3701
    %v4086 = vsel %vm3830, %v3958, %v3702
    %v4087 = vsel %vm3831, %v3959, %v3703
    %v4088 = vsel %vm3832, %v3960, %v3704
    %v4089 = vsel %vm3833, %v3961, %v3705
    %v4090 = vsel %vm3834, %v3962, %v3706
    %v4091 = vsel %vm3835, %v3963, %v3707
    %v4092 = vsel %vm3836, %v3964, %v3708
    %v4093 = vsel %vm3837, %v3965, %v3709
    %v4094 = vsel %vm3838, %v3966, %v3710
    %v4095 = vsel %vm3839, %v3967, %v3711
    %v4096 = vsel %vm3840, %v3968, %v3712
    %v4097 = vsel %vm3841, %v3969, %v3713
    %v4098 = vsel %vm3842, %v3970, %v3714
    %v4099 = vsel %vm3843, %v3971, %v3715
    %v4100 = vsel %vm3844, %v3972, %v3716
    %v4101 = vsel %vm3845, %v3973, %v3717
    %v4102 = vsel %vm3846, %v3974, %v3718
    %v4103 = vsel %vm3847, %v3975, %v3719
    %v4104 = vsel %vm3848, %v3976, %v3720
    %v4105 = vsel %vm3849, %v3977, %v3721
    %v4106 = vsel %vm3850, %v3978, %v3722
    %v4107 = vsel %vm3851, %v3979, %v3723
    %v4108 = vsel %vm3852, %v3980, %v3724
    %v4109 = vsel %vm3853, %v3981, %v3725
    %v4110 = vsel %vm3854, %v3982, %v3726
    %v4111 = vsel %vm3855, %v3983, %v3727
    %v4112 = vsel %vm3856, %v3984, %v3728
    %v4113 = vsel %vm3857, %v3985, %v3729
    %v4114 = vsel %vm3858, %v3986, %v3730
    %v4115 = vsel %vm3859, %v3987, %v3731
    %v4116 = vsel %vm3860, %v3988, %v3732
    %v4117 = vsel %vm3861, %v3989, %v3733
    %v4118 = vsel %vm3862, %v3990, %v3734
    %v4119 = vsel %vm3863, %v3991, %v3735
    %v4120 = vsel %vm3864, %v3992, %v3736
    %v4121 = vsel %vm3865, %v3993, %v3737
    %v4122 = vsel %vm3866, %v3994, %v3738
    %v4123 = vsel %vm3867, %v3995, %v3739
    %v4124 = vsel %vm3868, %v3996, %v3740
    %v4125 = vsel %vm3869, %v3997, %v3741
    %v4126 = vsel %vm3870, %v3998, %v3742
    %v4127 = vsel %vm3871, %v3999, %v3743
    %v4128 = vsel %vm3872, %v4000, %v3744
    %v4129 = vsel %vm3873, %v4001, %v3745
    %v4130 = vsel %vm3874, %v4002, %v3746
    %v4131 = vsel %vm3875, %v4003, %v3747
    %v4132 = vsel %vm3876, %v4004, %v3748
    %v4133 = vsel %vm3877, %v4005, %v3749
    %v4134 = vsel %vm3878, %v4006, %v3750
    %v4135 = vsel %vm3879, %v4007, %v3751
    %v4136 = vsel %vm3880, %v4008, %v3752
    %v4137 = vsel %vm3881, %v4009, %v3753
    %v4138 = vsel %vm3882, %v4010, %v3754
    %v4139 = vsel %vm3883, %v4011, %v3755
    %v4140 = vsel %vm3884, %v4012, %v3756
    %v4141 = vsel %vm3885, %v4013, %v3757
    %v4142 = vsel %vm3886, %v4014, %v3758
    %v4143 = vsel %vm3887, %v4015, %v3759
    %v4144 = vsel %vm3888, %v4016, %v3760
    %v4145 = vsel %vm3889, %v4017, %v3761
    %v4146 = vsel %vm3890, %v4018, %v3762
    %v4147 = vsel %vm3891, %v4019, %v3763
    %v4148 = vsel %vm3892, %v4020, %v3764
    %v4149 = vsel %vm3893, %v4021, %v3765
    %v4150 = vsel %vm3894, %v4022, %v3766
    %v4151 = vsel %vm3895, %v4023, %v3767
    %v4152 = vsel %vm3896, %v4024, %v3768
    %v4153 = vsel %vm3897, %v4025, %v3769
    %v4154 = vsel %vm3898, %v4026, %v3770
    %v4155 = vsel %vm3899, %v4027, %v3771
    %v4156 = vsel %vm3900, %v4028, %v3772
    %v4157 = vsel %vm3901, %v4029, %v3773
    %v4158 = vsel %vm3902, %v4030, %v3774
    %v4159 = vsel %vm3903, %v4031, %v3775
    %v4160 = vsel %vm3904, %v4032, %v3776
    %v4161 = vsel %vm3905, %v4033, %v3777
    %v4162 = vsel %vm3906, %v4034, %v3778
    %v4163 = vsel %vm3907, %v4035, %v3779
    %v4164 = vsel %vm3908, %v4036, %v3780
    %v4165 = vsel %vm3909, %v4037, %v3781
    %v4166 = vsel %vm3910, %v4038, %v3782
    %v4167 = vsel %vm3911, %v4039, %v3783
    %v4168 = vsel %vm3912, %v4040, %v3784
    %v4169 = vsel %vm3913, %v4041, %v3785
    %v4170 = vsel %vm3914, %v4042, %v3786
    %v4171 = vsel %vm3915, %v4043, %v3787
    %v4172 = vsel %vm3916, %v4044, %v3788
    %v4173 = vsel %vm3917, %v4045, %v3789
    %v4174 = vsel %vm3918, %v4046, %v3790
    %v4175 = vsel %vm3919, %v4047, %v3791
    %v4176 = vsel %vm3920, %v4048, %v3792
    %v4177 = vsel %vm3921, %v4049, %v3793
    %v4178 = vsel %vm3922, %v4050, %v3794
    %v4179 = vsel %vm3923, %v4051, %v3795
    %v4180 = vadd.f32 %v4052, 1.0
    %v4181 = vadd.f32 %v4053, 1.0
    %v4182 = vadd.f32 %v4054, 1.0
    %v4183 = vadd.f32 %v4055, 1.0
    %v4184 = vadd.f32 %v4056, 1.0
    %v4185 = vadd.f32 %v4057, 1.0
    %v4186 = vadd.f32 %v4058, 1.0
    %v4187 = vadd.f32 %v4059, 1.0
    %v4188 = vadd.f32 %v4060, 1.0
    %v4189 = vadd.f32 %v4061, 1.0
    %v4190 = vadd.f32 %v4062, 1.0
    %v4191 = vadd.f32 %v4063, 1.0
    %v4192 = vadd.f32 %v4064, 1.0
    %v4193 = vadd.f32 %v4065, 1.0
    %v4194 = vadd.f32 %v4066, 1.0
    %v4195 = vadd.f32 %v4067, 1.0
    %v4196 = vadd.f32 %v4068, 1.0
    %v4197 = vadd.f32 %v4069, 1.0
    %v4198 = vadd.f32 %v4070, 1.0
    %v4199 = vadd.f32 %v4071, 1.0
    %v4200 = vadd.f32 %v4072, 1.0
    %v4201 = vadd.f32 %v4073, 1.0
    %v4202 = vadd.f32 %v4074, 1.0
    %v4203 = vadd.f32 %v4075, 1.0
    %v4204 = vadd.f32 %v4076, 1.0
    %v4205 = vadd.f32 %v4077, 1.0
    %v4206 = vadd.f32 %v4078, 1.0
    %v4207 = vadd.f32 %v4079, 1.0
    %v4208 = vadd.f32 %v4080, 1.0
    %v4209 = vadd.f32 %v4081, 1.0
    %v4210 = vadd.f32 %v4082, 1.0
    %v4211 = vadd.f32 %v4083, 1.0
    %v4212 = vadd.f32 %v4084, 1.0
    %v4213 = vadd.f32 %v4085, 1.0
    %v4214 = vadd.f32 %v4086, 1.0
    %v4215 = vadd.f32 %v4087, 1.0
    %v4216 = vadd.f32 %v4088, 1.0
    %v4217 = vadd.f32 %v4089, 1.0
    %v4218 = vadd.f32 %v4090, 1.0
    %v4219 = vadd.f32 %v4091, 1.0
    %v4220 = vadd.f32 %v4092, 1.0
    %v4221 = vadd.f32 %v4093, 1.0
    %v4222 = vadd.f32 %v4094, 1.0
    %v4223 = vadd.f32 %v4095, 1.0
    %v4224 = vadd.f32 %v4096, 1.0
    %v4225 = vadd.f32 %v4097, 1.0
    %v4226 = vadd.f32 %v4098, 1.0
    %v4227 = vadd.f32 %v4099, 1.0
    %v4228 = vadd.f32 %v4100, 1.0
    %v4229 = vadd.f32 %v4101, 1.0
    %v4230 = vadd.f32 %v4102, 1.0
    %v4231 = vadd.f32 %v4103, 1.0
    %v4232 = vadd.f32 %v4104, 1.0
    %v4233 = vadd.f32 %v4105, 1.0
    %v4234 = vadd.f32 %v4106, 1.0
    %v4235 = vadd.f32 %v4107, 1.0
    %v4236 = vadd.f32 %v4108, 1.0
    %v4237 = vadd.f32 %v4109, 1.0
    %v4238 = vadd.f32 %v4110, 1.0
    %v4239 = vadd.f32 %v4111, 1.0
    %v4240 = vadd.f32 %v4112, 1.0
    %v4241 = vadd.f32 %v4113, 1.0
    %v4242 = vadd.f32 %v4114, 1.0
    %v4243 = vadd.f32 %v4115, 1.0
    %v4244 = vadd.f32 %v4116, 1.0
    %v4245 = vadd.f32 %v4117, 1.0
    %v4246 = vadd.f32 %v4118, 1.0
    %v4247 = vadd.f32 %v4119, 1.0
    %v4248 = vadd.f32 %v4120, 1.0
    %v4249 = vadd.f32 %v4121, 1.0
    %v4250 = vadd.f32 %v4122, 1.0
    %v4251 = vadd.f32 %v4123, 1.0
    %v4252 = vadd.f32 %v4124, 1.0
    %v4253 = vadd.f32 %v4125, 1.0
    %v4254 = vadd.f32 %v4126, 1.0
    %v4255 = vadd.f32 %v4127, 1.0
    %v4256 = vadd.f32 %v4128, 1.0
    %v4257 = vadd.f32 %v4129, 1.0
    %v4258 = vadd.f32 %v4130, 1.0
    %v4259 = vadd.f32 %v4131, 1.0
    %v4260 = vadd.f32 %v4132, 1.0
    %v4261 = vadd.f32 %v4133, 1.0
    %v4262 = vadd.f32 %v4134, 1.0
    %v4263 = vadd.f32 %v4135, 1.0
    %v4264 = vadd.f32 %v4136, 1.0
    %v4265 = vadd.f32 %v4137, 1.0
    %v4266 = vadd.f32 %v4138, 1.0
    %v4267 = vadd.f32 %v4139, 1.0
    %v4268 = vadd.f32 %v4140, 1.0
    %v4269 = vadd.f32 %v4141, 1.0
    %v4270 = vadd.f32 %v4142, 1.0
    %v4271 = vadd.f32 %v4143, 1.0
    %v4272 = vadd.f32 %v4144, 1.0
    %v4273 = vadd.f32 %v4145, 1.0
    %v4274 = vadd.f32 %v4146, 1.0
    %v4275 = vadd.f32 %v4147, 1.0
    %v4276 = vadd.f32 %v4148, 1.0
    %v4277 = vadd.f32 %v4149, 1.0
    %v4278 = vadd.f32 %v4150, 1.0
    %v4279 = vadd.f32 %v4151, 1.0
    %v4280 = vadd.f32 %v4152, 1.0
    %v4281 = vadd.f32 %v4153, 1.0
    %v4282 = vadd.f32 %v4154, 1.0
    %v4283 = vadd.f32 %v4155, 1.0
    %v4284 = vadd.f32 %v4156, 1.0
    %v4285 = vadd.f32 %v4157, 1.0
    %v4286 = vadd.f32 %v4158, 1.0
    %v4287 = vadd.f32 %v4159, 1.0
    %v4288 = vadd.f32 %v4160, 1.0
    %v4289 = vadd.f32 %v4161, 1.0
    %v4290 = vadd.f32 %v4162, 1.0
    %v4291 = vadd.f32 %v4163, 1.0
    %v4292 = vadd.f32 %v4164, 1.0
    %v4293 = vadd.f32 %v4165, 1.0
    %v4294 = vadd.f32 %v4166, 1.0
    %v4295 = vadd.f32 %v4167, 1.0
    %v4296 = vadd.f32 %v4168, 1.0
    %v4297 = vadd.f32 %v4169, 1.0
    %v4298 = vadd.f32 %v4170, 1.0
    %v4299 = vadd.f32 %v4171, 1.0
    %v4300 = vadd.f32 %v4172, 1.0
    %v4301 = vadd.f32 %v4173, 1.0
    %v4302 = vadd.f32 %v4174, 1.0
    %v4303 = vadd.f32 %v4175, 1.0
    %v4304 = vadd.f32 %v4176, 1.0
    %v4305 = vadd.f32 %v4177, 1.0
    %v4306 = vadd.f32 %v4178, 1.0
    %v4307 = vadd.f32 %v4179, 1.0
    %v4308 = vmul.f32 %v724, %v4180
    %v4309 = vmul.f32 %v725, %v4181
    %v4310 = vmul.f32 %v726, %v4182
    %v4311 = vmul.f32 %v727, %v4183
    %v4312 = vmul.f32 %v728, %v4184
    %v4313 = vmul.f32 %v729, %v4185
    %v4314 = vmul.f32 %v730, %v4186
    %v4315 = vmul.f32 %v731, %v4187
    %v4316 = vmul.f32 %v732, %v4188
    %v4317 = vmul.f32 %v733, %v4189
    %v4318 = vmul.f32 %v734, %v4190
    %v4319 = vmul.f32 %v735, %v4191
    %v4320 = vmul.f32 %v736, %v4192
    %v4321 = vmul.f32 %v737, %v4193
    %v4322 = vmul.f32 %v738, %v4194
    %v4323 = vmul.f32 %v739, %v4195
    %v4324 = vmul.f32 %v740, %v4196
    %v4325 = vmul.f32 %v741, %v4197
    %v4326 = vmul.f32 %v742, %v4198
    %v4327 = vmul.f32 %v743, %v4199
    %v4328 = vmul.f32 %v744, %v4200
    %v4329 = vmul.f32 %v745, %v4201
    %v4330 = vmul.f32 %v746, %v4202
    %v4331 = vmul.f32 %v747, %v4203
    %v4332 = vmul.f32 %v748, %v4204
    %v4333 = vmul.f32 %v749, %v4205
    %v4334 = vmul.f32 %v750, %v4206
    %v4335 = vmul.f32 %v751, %v4207
    %v4336 = vmul.f32 %v752, %v4208
    %v4337 = vmul.f32 %v753, %v4209
    %v4338 = vmul.f32 %v754, %v4210
    %v4339 = vmul.f32 %v755, %v4211
    %v4340 = vmul.f32 %v756, %v4212
    %v4341 = vmul.f32 %v757, %v4213
    %v4342 = vmul.f32 %v758, %v4214
    %v4343 = vmul.f32 %v759, %v4215
    %v4344 = vmul.f32 %v760, %v4216
    %v4345 = vmul.f32 %v761, %v4217
    %v4346 = vmul.f32 %v762, %v4218
    %v4347 = vmul.f32 %v763, %v4219
    %v4348 = vmul.f32 %v764, %v4220
    %v4349 = vmul.f32 %v765, %v4221
    %v4350 = vmul.f32 %v766, %v4222
    %v4351 = vmul.f32 %v767, %v4223
    %v4352 = vmul.f32 %v768, %v4224
    %v4353 = vmul.f32 %v769, %v4225
    %v4354 = vmul.f32 %v770, %v4226
    %v4355 = vmul.f32 %v771, %v4227
    %v4356 = vmul.f32 %v772, %v4228
    %v4357 = vmul.f32 %v773, %v4229
    %v4358 = vmul.f32 %v774, %v4230
    %v4359 = vmul.f32 %v775, %v4231
    %v4360 = vmul.f32 %v776, %v4232
    %v4361 = vmul.f32 %v777, %v4233
    %v4362 = vmul.f32 %v778, %v4234
    %v4363 = vmul.f32 %v779, %v4235
    %v4364 = vmul.f32 %v780, %v4236
    %v4365 = vmul.f32 %v781, %v4237
    %v4366 = vmul.f32 %v782, %v4238
    %v4367 = vmul.f32 %v783, %v4239
    %v4368 = vmul.f32 %v784, %v4240
    %v4369 = vmul.f32 %v785, %v4241
    %v4370 = vmul.f32 %v786, %v4242
    %v4371 = vmul.f32 %v787, %v4243
    %v4372 = vmul.f32 %v788, %v4244
    %v4373 = vmul.f32 %v789, %v4245
    %v4374 = vmul.f32 %v790, %v4246
    %v4375 = vmul.f32 %v791, %v4247
    %v4376 = vmul.f32 %v792, %v4248
    %v4377 = vmul.f32 %v793, %v4249
    %v4378 = vmul.f32 %v794, %v4250
    %v4379 = vmul.f32 %v795, %v4251
    %v4380 = vmul.f32 %v796, %v4252
    %v4381 = vmul.f32 %v797, %v4253
    %v4382 = vmul.f32 %v798, %v4254
    %v4383 = vmul.f32 %v799, %v4255
    %v4384 = vmul.f32 %v800, %v4256
    %v4385 = vmul.f32 %v801, %v4257
    %v4386 = vmul.f32 %v802, %v4258
    %v4387 = vmul.f32 %v803, %v4259
    %v4388 = vmul.f32 %v804, %v4260
    %v4389 = vmul.f32 %v805, %v4261
    %v4390 = vmul.f32 %v806, %v4262
    %v4391 = vmul.f32 %v807, %v4263
    %v4392 = vmul.f32 %v808, %v4264
    %v4393 = vmul.f32 %v809, %v4265
    %v4394 = vmul.f32 %v810, %v4266
    %v4395 = vmul.f32 %v811, %v4267
    %v4396 = vmul.f32 %v812, %v4268
    %v4397 = vmul.f32 %v813, %v4269
    %v4398 = vmul.f32 %v814, %v4270
    %v4399 = vmul.f32 %v815, %v4271
    %v4400 = vmul.f32 %v816, %v4272
    %v4401 = vmul.f32 %v817, %v4273
    %v4402 = vmul.f32 %v818, %v4274
    %v4403 = vmul.f32 %v819, %v4275
    %v4404 = vmul.f32 %v820, %v4276
    %v4405 = vmul.f32 %v821, %v4277
    %v4406 = vmul.f32 %v822, %v4278
    %v4407 = vmul.f32 %v823, %v4279
    %v4408 = vmul.f32 %v824, %v4280
    %v4409 = vmul.f32 %v825, %v4281
    %v4410 = vmul.f32 %v826, %v4282
    %v4411 = vmul.f32 %v827, %v4283
    %v4412 = vmul.f32 %v828, %v4284
    %v4413 = vmul.f32 %v829, %v4285
    %v4414 = vmul.f32 %v830, %v4286
    %v4415 = vmul.f32 %v831, %v4287
    %v4416 = vmul.f32 %v832, %v4288
    %v4417 = vmul.f32 %v833, %v4289
    %v4418 = vmul.f32 %v834, %v4290
    %v4419 = vmul.f32 %v835, %v4291
    %v4420 = vmul.f32 %v836, %v4292
    %v4421 = vmul.f32 %v837, %v4293
    %v4422 = vmul.f32 %v838, %v4294
    %v4423 = vmul.f32 %v839, %v4295
    %v4424 = vmul.f32 %v840, %v4296
    %v4425 = vmul.f32 %v841, %v4297
    %v4426 = vmul.f32 %v842, %v4298
    %v4427 = vmul.f32 %v843, %v4299
    %v4428 = vmul.f32 %v844, %v4300
    %v4429 = vmul.f32 %v845, %v4301
    %v4430 = vmul.f32 %v846, %v4302
    %v4431 = vmul.f32 %v847, %v4303
    %v4432 = vmul.f32 %v848, %v4304
    %v4433 = vmul.f32 %v849, %v4305
    %v4434 = vmul.f32 %v850, %v4306
    %v4435 = vmul.f32 %v851, %v4307
    %v4436 = vpack.c.bf16 %v4312, %v4308
    %v4437 = vpack.c.bf16 %v4313, %v4309
    %v4438 = vpack.c.bf16 %v4314, %v4310
    %v4439 = vpack.c.bf16 %v4315, %v4311
    %v4440 = vpack.c.bf16 %v4320, %v4316
    %v4441 = vpack.c.bf16 %v4321, %v4317
    %v4442 = vpack.c.bf16 %v4322, %v4318
    %v4443 = vpack.c.bf16 %v4323, %v4319
    %v4444 = vpack.c.bf16 %v4328, %v4324
    %v4445 = vpack.c.bf16 %v4329, %v4325
    %v4446 = vpack.c.bf16 %v4330, %v4326
    %v4447 = vpack.c.bf16 %v4331, %v4327
    %v4448 = vpack.c.bf16 %v4336, %v4332
    %v4449 = vpack.c.bf16 %v4337, %v4333
    %v4450 = vpack.c.bf16 %v4338, %v4334
    %v4451 = vpack.c.bf16 %v4339, %v4335
    %v4452 = vpack.c.bf16 %v4344, %v4340
    %v4453 = vpack.c.bf16 %v4345, %v4341
    %v4454 = vpack.c.bf16 %v4346, %v4342
    %v4455 = vpack.c.bf16 %v4347, %v4343
    %v4456 = vpack.c.bf16 %v4352, %v4348
    %v4457 = vpack.c.bf16 %v4353, %v4349
    %v4458 = vpack.c.bf16 %v4354, %v4350
    %v4459 = vpack.c.bf16 %v4355, %v4351
    %v4460 = vpack.c.bf16 %v4360, %v4356
    %v4461 = vpack.c.bf16 %v4361, %v4357
    %v4462 = vpack.c.bf16 %v4362, %v4358
    %v4463 = vpack.c.bf16 %v4363, %v4359
    %v4464 = vpack.c.bf16 %v4368, %v4364
    %v4465 = vpack.c.bf16 %v4369, %v4365
    %v4466 = vpack.c.bf16 %v4370, %v4366
    %v4467 = vpack.c.bf16 %v4371, %v4367
    %v4468 = vpack.c.bf16 %v4376, %v4372
    %v4469 = vpack.c.bf16 %v4377, %v4373
    %v4470 = vpack.c.bf16 %v4378, %v4374
    %v4471 = vpack.c.bf16 %v4379, %v4375
    %v4472 = vpack.c.bf16 %v4384, %v4380
    %v4473 = vpack.c.bf16 %v4385, %v4381
    %v4474 = vpack.c.bf16 %v4386, %v4382
    %v4475 = vpack.c.bf16 %v4387, %v4383
    %v4476 = vpack.c.bf16 %v4392, %v4388
    %v4477 = vpack.c.bf16 %v4393, %v4389
    %v4478 = vpack.c.bf16 %v4394, %v4390
    %v4479 = vpack.c.bf16 %v4395, %v4391
    %v4480 = vpack.c.bf16 %v4400, %v4396
    %v4481 = vpack.c.bf16 %v4401, %v4397
    %v4482 = vpack.c.bf16 %v4402, %v4398
    %v4483 = vpack.c.bf16 %v4403, %v4399
    %v4484 = vpack.c.bf16 %v4408, %v4404
    %v4485 = vpack.c.bf16 %v4409, %v4405
    %v4486 = vpack.c.bf16 %v4410, %v4406
    %v4487 = vpack.c.bf16 %v4411, %v4407
    %v4488 = vpack.c.bf16 %v4416, %v4412
    %v4489 = vpack.c.bf16 %v4417, %v4413
    %v4490 = vpack.c.bf16 %v4418, %v4414
    %v4491 = vpack.c.bf16 %v4419, %v4415
    %v4492 = vpack.c.bf16 %v4424, %v4420
    %v4493 = vpack.c.bf16 %v4425, %v4421
    %v4494 = vpack.c.bf16 %v4426, %v4422
    %v4495 = vpack.c.bf16 %v4427, %v4423
    %v4496 = vpack.c.bf16 %v4432, %v4428
    %v4497 = vpack.c.bf16 %v4433, %v4429
    %v4498 = vpack.c.bf16 %v4434, %v4430
    %v4499 = vpack.c.bf16 %v4435, %v4431
    %v4500 = vld [vmem:[#allocation2] sm:$0xff]
    %v4501 = vld [vmem:[#allocation2 + $0x8] sm:$0xff]
    %v4502 = vld [vmem:[#allocation2 + $0x10] sm:$0xff]
    %v4503 = vld [vmem:[#allocation2 + $0x18] sm:$0xff]
    %v4504 = vld [vmem:[#allocation2 + $0x20] sm:$0xff]
    %v4505 = vld [vmem:[#allocation2 + $0x28] sm:$0xff]
    %v4506 = vld [vmem:[#allocation2 + $0x30] sm:$0xff]
    %v4507 = vld [vmem:[#allocation2 + $0x38] sm:$0xff]
    %v4508 = vld [vmem:[#allocation2 + $0x40] sm:$0xff]
    %v4509 = vld [vmem:[#allocation2 + $0x48] sm:$0xff]
    %v4510 = vld [vmem:[#allocation2 + $0x50] sm:$0xff]
    %v4511 = vld [vmem:[#allocation2 + $0x58] sm:$0xff]
    %v4512 = vld [vmem:[#allocation2 + $0x60] sm:$0xff]
    %v4513 = vld [vmem:[#allocation2 + $0x68] sm:$0xff]
    %v4514 = vld [vmem:[#allocation2 + $0x70] sm:$0xff]
    %v4515 = vld [vmem:[#allocation2 + $0x78] sm:$0xff]
    %v4516 = vld [vmem:[#allocation2 + $0x80] sm:$0xff]
    %v4517 = vld [vmem:[#allocation2 + $0x88] sm:$0xff]
    %v4518 = vld [vmem:[#allocation2 + $0x90] sm:$0xff]
    %v4519 = vld [vmem:[#allocation2 + $0x98] sm:$0xff]
    %v4520 = vld [vmem:[#allocation2 + $0xa0] sm:$0xff]
    %v4521 = vld [vmem:[#allocation2 + $0xa8] sm:$0xff]
    %v4522 = vld [vmem:[#allocation2 + $0xb0] sm:$0xff]
    %v4523 = vld [vmem:[#allocation2 + $0xb8] sm:$0xff]
    %v4524 = vld [vmem:[#allocation2 + $0xc0] sm:$0xff]
    %v4525 = vld [vmem:[#allocation2 + $0xc8] sm:$0xff]
    %v4526 = vld [vmem:[#allocation2 + $0xd0] sm:$0xff]
    %v4527 = vld [vmem:[#allocation2 + $0xd8] sm:$0xff]
    %v4528 = vld [vmem:[#allocation2 + $0xe0] sm:$0xff]
    %v4529 = vld [vmem:[#allocation2 + $0xe8] sm:$0xff]
    %v4530 = vld [vmem:[#allocation2 + $0xf0] sm:$0xff]
    %v4531 = vld [vmem:[#allocation2 + $0xf8] sm:$0xff]
    %v4532 = vld [vmem:[#allocation9] sm:$0xf]
    %v4533 = vld [vmem:[#allocation9 + $0x4] sm:$0xf]
    %v4534 = vld [vmem:[#allocation9 + $0x8] sm:$0xf]
    %v4535 = vld [vmem:[#allocation9 + $0xc] sm:$0xf]
    %v4536 = vld [vmem:[#allocation9 + $0x10] sm:$0xf]
    %v4537 = vld [vmem:[#allocation9 + $0x14] sm:$0xf]
    %v4538 = vld [vmem:[#allocation9 + $0x18] sm:$0xf]
    %v4539 = vld [vmem:[#allocation9 + $0x1c] sm:$0xf]
    %v4540 = vld [vmem:[#allocation9 + $0x20] sm:$0xf]
    %v4541 = vld [vmem:[#allocation9 + $0x24] sm:$0xf]
    %v4542 = vld [vmem:[#allocation9 + $0x28] sm:$0xf]
    %v4543 = vld [vmem:[#allocation9 + $0x2c] sm:$0xf]
    %v4544 = vld [vmem:[#allocation9 + $0x30] sm:$0xf]
    %v4545 = vld [vmem:[#allocation9 + $0x34] sm:$0xf]
    %v4546 = vld [vmem:[#allocation9 + $0x38] sm:$0xf]
    %v4547 = vld [vmem:[#allocation9 + $0x3c] sm:$0xf]
    %v4548 = vld [vmem:[#allocation9 + $0x40] sm:$0xf]
    %v4549 = vld [vmem:[#allocation9 + $0x44] sm:$0xf]
    %v4550 = vld [vmem:[#allocation9 + $0x48] sm:$0xf]
    %v4551 = vld [vmem:[#allocation9 + $0x4c] sm:$0xf]
    %v4552 = vld [vmem:[#allocation9 + $0x50] sm:$0xf]
    %v4553 = vld [vmem:[#allocation9 + $0x54] sm:$0xf]
    %v4554 = vld [vmem:[#allocation9 + $0x58] sm:$0xf]
    %v4555 = vld [vmem:[#allocation9 + $0x5c] sm:$0xf]
    %v4556 = vld [vmem:[#allocation9 + $0x60] sm:$0xf]
    %v4557 = vld [vmem:[#allocation9 + $0x64] sm:$0xf]
    %v4558 = vld [vmem:[#allocation9 + $0x68] sm:$0xf]
    %v4559 = vld [vmem:[#allocation9 + $0x6c] sm:$0xf]
    %v4560 = vld [vmem:[#allocation9 + $0x70] sm:$0xf]
    %v4561 = vld [vmem:[#allocation9 + $0x74] sm:$0xf]
    %v4562 = vld [vmem:[#allocation9 + $0x78] sm:$0xf]
    %v4563 = vld [vmem:[#allocation9 + $0x7c] sm:$0xf]
    %v4564 = vld [vmem:[#allocation9 + $0x80] sm:$0xf]
    %v4565 = vld [vmem:[#allocation9 + $0x84] sm:$0xf]
    %v4566 = vld [vmem:[#allocation9 + $0x88] sm:$0xf]
    %v4567 = vld [vmem:[#allocation9 + $0x8c] sm:$0xf]
    %v4568 = vld [vmem:[#allocation9 + $0x90] sm:$0xf]
    %v4569 = vld [vmem:[#allocation9 + $0x94] sm:$0xf]
    %v4570 = vld [vmem:[#allocation9 + $0x98] sm:$0xf]
    %v4571 = vld [vmem:[#allocation9 + $0x9c] sm:$0xf]
    %v4572 = vld [vmem:[#allocation9 + $0xa0] sm:$0xf]
    %v4573 = vld [vmem:[#allocation9 + $0xa4] sm:$0xf]
    %v4574 = vld [vmem:[#allocation9 + $0xa8] sm:$0xf]
    %v4575 = vld [vmem:[#allocation9 + $0xac] sm:$0xf]
    %v4576 = vld [vmem:[#allocation9 + $0xb0] sm:$0xf]
    %v4577 = vld [vmem:[#allocation9 + $0xb4] sm:$0xf]
    %v4578 = vld [vmem:[#allocation9 + $0xb8] sm:$0xf]
    %v4579 = vld [vmem:[#allocation9 + $0xbc] sm:$0xf]
    %v4580 = vld [vmem:[#allocation9 + $0xc0] sm:$0xf]
    %v4581 = vld [vmem:[#allocation9 + $0xc4] sm:$0xf]
    %v4582 = vld [vmem:[#allocation9 + $0xc8] sm:$0xf]
    %v4583 = vld [vmem:[#allocation9 + $0xcc] sm:$0xf]
    %v4584 = vld [vmem:[#allocation9 + $0xd0] sm:$0xf]
    %v4585 = vld [vmem:[#allocation9 + $0xd4] sm:$0xf]
    %v4586 = vld [vmem:[#allocation9 + $0xd8] sm:$0xf]
    %v4587 = vld [vmem:[#allocation9 + $0xdc] sm:$0xf]
    %v4588 = vld [vmem:[#allocation9 + $0xe0] sm:$0xf]
    %v4589 = vld [vmem:[#allocation9 + $0xe4] sm:$0xf]
    %v4590 = vld [vmem:[#allocation9 + $0xe8] sm:$0xf]
    %v4591 = vld [vmem:[#allocation9 + $0xec] sm:$0xf]
    %v4592 = vld [vmem:[#allocation9 + $0xf0] sm:$0xf]
    %v4593 = vld [vmem:[#allocation9 + $0xf4] sm:$0xf]
    %v4594 = vld [vmem:[#allocation9 + $0xf8] sm:$0xf]
    %v4595 = vld [vmem:[#allocation9 + $0xfc] sm:$0xf]
    %v4660 = vunpack.c.l.b16 %v4532
    %v4661 = vunpack.c.l.b16 %v4533
    %v4662 = vunpack.c.l.b16 %v4534
    %v4663 = vunpack.c.l.b16 %v4535
    %v4664 = vunpack.c.l.b16 %v4536
    %v4665 = vunpack.c.l.b16 %v4537
    %v4666 = vunpack.c.l.b16 %v4538
    %v4667 = vunpack.c.l.b16 %v4539
    %v4668 = vunpack.c.l.b16 %v4540
    %v4669 = vunpack.c.l.b16 %v4541
    %v4670 = vunpack.c.l.b16 %v4542
    %v4671 = vunpack.c.l.b16 %v4543
    %v4672 = vunpack.c.l.b16 %v4544
    %v4673 = vunpack.c.l.b16 %v4545
    %v4674 = vunpack.c.l.b16 %v4546
    %v4675 = vunpack.c.l.b16 %v4547
    %v4676 = vunpack.c.l.b16 %v4548
    %v4677 = vunpack.c.l.b16 %v4549
    %v4678 = vunpack.c.l.b16 %v4550
    %v4679 = vunpack.c.l.b16 %v4551
    %v4680 = vunpack.c.l.b16 %v4552
    %v4681 = vunpack.c.l.b16 %v4553
    %v4682 = vunpack.c.l.b16 %v4554
    %v4683 = vunpack.c.l.b16 %v4555
    %v4684 = vunpack.c.l.b16 %v4556
    %v4685 = vunpack.c.l.b16 %v4557
    %v4686 = vunpack.c.l.b16 %v4558
    %v4687 = vunpack.c.l.b16 %v4559
    %v4688 = vunpack.c.l.b16 %v4560
    %v4689 = vunpack.c.l.b16 %v4561
    %v4690 = vunpack.c.l.b16 %v4562
    %v4691 = vunpack.c.l.b16 %v4563
    %v4692 = vunpack.c.l.b16 %v4564
    %v4693 = vunpack.c.l.b16 %v4565
    %v4694 = vunpack.c.l.b16 %v4566
    %v4695 = vunpack.c.l.b16 %v4567
    %v4696 = vunpack.c.l.b16 %v4568
    %v4697 = vunpack.c.l.b16 %v4569
    %v4698 = vunpack.c.l.b16 %v4570
    %v4699 = vunpack.c.l.b16 %v4571
    %v4700 = vunpack.c.l.b16 %v4572
    %v4701 = vunpack.c.l.b16 %v4573
    %v4702 = vunpack.c.l.b16 %v4574
    %v4703 = vunpack.c.l.b16 %v4575
    %v4704 = vunpack.c.l.b16 %v4576
    %v4705 = vunpack.c.l.b16 %v4577
    %v4706 = vunpack.c.l.b16 %v4578
    %v4707 = vunpack.c.l.b16 %v4579
    %v4708 = vunpack.c.l.b16 %v4580
    %v4709 = vunpack.c.l.b16 %v4581
    %v4710 = vunpack.c.l.b16 %v4582
    %v4711 = vunpack.c.l.b16 %v4583
    %v4712 = vunpack.c.l.b16 %v4584
    %v4713 = vunpack.c.l.b16 %v4585
    %v4714 = vunpack.c.l.b16 %v4586
    %v4715 = vunpack.c.l.b16 %v4587
    %v4716 = vunpack.c.l.b16 %v4588
    %v4717 = vunpack.c.l.b16 %v4589
    %v4718 = vunpack.c.l.b16 %v4590
    %v4719 = vunpack.c.l.b16 %v4591
    %v4720 = vunpack.c.l.b16 %v4592
    %v4721 = vunpack.c.l.b16 %v4593
    %v4722 = vunpack.c.l.b16 %v4594
    %v4723 = vunpack.c.l.b16 %v4595
    %v4724 = vpack.c.b16 %v4661, %v4660
    %v4725 = vpack.c.b16 %v4663, %v4662
    %v4726 = vpack.c.b16 %v4665, %v4664
    %v4727 = vpack.c.b16 %v4667, %v4666
    %v4728 = vpack.c.b16 %v4669, %v4668
    %v4729 = vpack.c.b16 %v4671, %v4670
    %v4730 = vpack.c.b16 %v4673, %v4672
    %v4731 = vpack.c.b16 %v4675, %v4674
    %v4732 = vpack.c.b16 %v4677, %v4676
    %v4733 = vpack.c.b16 %v4679, %v4678
    %v4734 = vpack.c.b16 %v4681, %v4680
    %v4735 = vpack.c.b16 %v4683, %v4682
    %v4736 = vpack.c.b16 %v4685, %v4684
    %v4737 = vpack.c.b16 %v4687, %v4686
    %v4738 = vpack.c.b16 %v4689, %v4688
    %v4739 = vpack.c.b16 %v4691, %v4690
    %v4740 = vpack.c.b16 %v4693, %v4692
    %v4741 = vpack.c.b16 %v4695, %v4694
    %v4742 = vpack.c.b16 %v4697, %v4696
    %v4743 = vpack.c.b16 %v4699, %v4698
    %v4744 = vpack.c.b16 %v4701, %v4700
    %v4745 = vpack.c.b16 %v4703, %v4702
    %v4746 = vpack.c.b16 %v4705, %v4704
    %v4747 = vpack.c.b16 %v4707, %v4706
    %v4748 = vpack.c.b16 %v4709, %v4708
    %v4749 = vpack.c.b16 %v4711, %v4710
    %v4750 = vpack.c.b16 %v4713, %v4712
    %v4751 = vpack.c.b16 %v4715, %v4714
    %v4752 = vpack.c.b16 %v4717, %v4716
    %v4753 = vpack.c.b16 %v4719, %v4718
    %v4754 = vpack.c.b16 %v4721, %v4720
    %v4755 = vpack.c.b16 %v4723, %v4722
    %4788 = vmatpush.bf16.msra.mxu0 %v4731
    %4789 = vmatpush.bf16.msra.mxu0 %v4730
    %4790 = vmatpush.bf16.msra.mxu0 %v4729
    %4791 = vmatpush.bf16.msra.mxu0 %v4728
    %4792 = vmatpush.bf16.msra.mxu0 %v4727
    %4793 = vmatpush.bf16.msra.mxu0 %v4726
    %4794 = vmatpush.bf16.msra.mxu0 %v4725
    %4795 = vmatpush.bf16.msra.mxu0 %v4724
    %4796 = vmatmul.bf16.gmra.mxu0 %v4436
    %v4797 = vpop.f32.mrf.mxu0
    %v4798 = vadd.f32 0.0, %v4797
    %v4799 = vpop.f32.mrf.mxu0
    %v4800 = vadd.f32 0.0, %v4799
    %4801 = vmatmul.bf16.gmra.mxu0 %v4440
    %v4802 = vpop.f32.mrf.mxu0
    %v4803 = vadd.f32 0.0, %v4802
    %v4804 = vpop.f32.mrf.mxu0
    %v4805 = vadd.f32 0.0, %v4804
    %4806 = vmatmul.bf16.gmra.mxu0 %v4444
    %v4807 = vpop.f32.mrf.mxu0
    %v4808 = vadd.f32 0.0, %v4807
    %v4809 = vpop.f32.mrf.mxu0
    %v4810 = vadd.f32 0.0, %v4809
    %4811 = vmatmul.bf16.gmra.mxu0 %v4448
    %v4812 = vpop.f32.mrf.mxu0
    %v4813 = vadd.f32 0.0, %v4812
    %v4814 = vpop.f32.mrf.mxu0
    %v4815 = vadd.f32 0.0, %v4814
    %4816 = vmatmul.bf16.gmra.mxu0 %v4452
    %v4817 = vpop.f32.mrf.mxu0
    %v4818 = vadd.f32 0.0, %v4817
    %v4819 = vpop.f32.mrf.mxu0
    %v4820 = vadd.f32 0.0, %v4819
    %4821 = vmatmul.bf16.gmra.mxu0 %v4456
    %v4822 = vpop.f32.mrf.mxu0
    %v4823 = vadd.f32 0.0, %v4822
    %v4824 = vpop.f32.mrf.mxu0
    %v4825 = vadd.f32 0.0, %v4824
    %4826 = vmatmul.bf16.gmra.mxu0 %v4460
    %v4827 = vpop.f32.mrf.mxu0
    %v4828 = vadd.f32 0.0, %v4827
    %v4829 = vpop.f32.mrf.mxu0
    %v4830 = vadd.f32 0.0, %v4829
    %4831 = vmatmul.bf16.gmra.mxu0 %v4464
    %v4832 = vpop.f32.mrf.mxu0
    %v4833 = vadd.f32 0.0, %v4832
    %v4834 = vpop.f32.mrf.mxu0
    %v4835 = vadd.f32 0.0, %v4834
    %4836 = vmatmul.bf16.gmra.mxu0 %v4468
    %v4837 = vpop.f32.mrf.mxu0
    %v4838 = vadd.f32 0.0, %v4837
    %v4839 = vpop.f32.mrf.mxu0
    %v4840 = vadd.f32 0.0, %v4839
    %4841 = vmatmul.bf16.gmra.mxu0 %v4472
    %v4842 = vpop.f32.mrf.mxu0
    %v4843 = vadd.f32 0.0, %v4842
    %v4844 = vpop.f32.mrf.mxu0
    %v4845 = vadd.f32 0.0, %v4844
    %4846 = vmatmul.bf16.gmra.mxu0 %v4476
    %v4847 = vpop.f32.mrf.mxu0
    %v4848 = vadd.f32 0.0, %v4847
    %v4849 = vpop.f32.mrf.mxu0
    %v4850 = vadd.f32 0.0, %v4849
    %4851 = vmatmul.bf16.gmra.mxu0 %v4480
    %v4852 = vpop.f32.mrf.mxu0
    %v4853 = vadd.f32 0.0, %v4852
    %v4854 = vpop.f32.mrf.mxu0
    %v4855 = vadd.f32 0.0, %v4854
    %4856 = vmatmul.bf16.gmra.mxu0 %v4484
    %v4857 = vpop.f32.mrf.mxu0
    %v4858 = vadd.f32 0.0, %v4857
    %v4859 = vpop.f32.mrf.mxu0
    %v4860 = vadd.f32 0.0, %v4859
    %4861 = vmatmul.bf16.gmra.mxu0 %v4488
    %v4862 = vpop.f32.mrf.mxu0
    %v4863 = vadd.f32 0.0, %v4862
    %v4864 = vpop.f32.mrf.mxu0
    %v4865 = vadd.f32 0.0, %v4864
    %4866 = vmatmul.bf16.gmra.mxu0 %v4492
    %v4867 = vpop.f32.mrf.mxu0
    %v4868 = vadd.f32 0.0, %v4867
    %v4869 = vpop.f32.mrf.mxu0
    %v4870 = vadd.f32 0.0, %v4869
    %4871 = vmatmul.bf16.gmra.mxu0 %v4496
    %v4872 = vpop.f32.mrf.mxu0
    %v4873 = vadd.f32 0.0, %v4872
    %v4874 = vpop.f32.mrf.mxu0
    %v4875 = vadd.f32 0.0, %v4874
    %4876 = vdwg.mxu0
    %4877 = vmatpush.bf16.msra.mxu0 %v4739
    %4878 = vmatpush.bf16.msra.mxu0 %v4738
    %4879 = vmatpush.bf16.msra.mxu0 %v4737
    %4880 = vmatpush.bf16.msra.mxu0 %v4736
    %4881 = vmatpush.bf16.msra.mxu0 %v4735
    %4882 = vmatpush.bf16.msra.mxu0 %v4734
    %4883 = vmatpush.bf16.msra.mxu0 %v4733
    %4884 = vmatpush.bf16.msra.mxu0 %v4732
    %4885 = vmatmul.bf16.gmra.mxu0 %v4437
    %v4886 = vpop.f32.mrf.mxu0
    %v4887 = vadd.f32 %v4798, %v4886
    %v4888 = vpop.f32.mrf.mxu0
    %v4889 = vadd.f32 %v4800, %v4888
    %4890 = vmatmul.bf16.gmra.mxu0 %v4441
    %v4891 = vpop.f32.mrf.mxu0
    %v4892 = vadd.f32 %v4803, %v4891
    %v4893 = vpop.f32.mrf.mxu0
    %v4894 = vadd.f32 %v4805, %v4893
    %4895 = vmatmul.bf16.gmra.mxu0 %v4445
    %v4896 = vpop.f32.mrf.mxu0
    %v4897 = vadd.f32 %v4808, %v4896
    %v4898 = vpop.f32.mrf.mxu0
    %v4899 = vadd.f32 %v4810, %v4898
    %4900 = vmatmul.bf16.gmra.mxu0 %v4449
    %v4901 = vpop.f32.mrf.mxu0
    %v4902 = vadd.f32 %v4813, %v4901
    %v4903 = vpop.f32.mrf.mxu0
    %v4904 = vadd.f32 %v4815, %v4903
    %4905 = vmatmul.bf16.gmra.mxu0 %v4453
    %v4906 = vpop.f32.mrf.mxu0
    %v4907 = vadd.f32 %v4818, %v4906
    %v4908 = vpop.f32.mrf.mxu0
    %v4909 = vadd.f32 %v4820, %v4908
    %4910 = vmatmul.bf16.gmra.mxu0 %v4457
    %v4911 = vpop.f32.mrf.mxu0
    %v4912 = vadd.f32 %v4823, %v4911
    %v4913 = vpop.f32.mrf.mxu0
    %v4914 = vadd.f32 %v4825, %v4913
    %4915 = vmatmul.bf16.gmra.mxu0 %v4461
    %v4916 = vpop.f32.mrf.mxu0
    %v4917 = vadd.f32 %v4828, %v4916
    %v4918 = vpop.f32.mrf.mxu0
    %v4919 = vadd.f32 %v4830, %v4918
    %4920 = vmatmul.bf16.gmra.mxu0 %v4465
    %v4921 = vpop.f32.mrf.mxu0
    %v4922 = vadd.f32 %v4833, %v4921
    %v4923 = vpop.f32.mrf.mxu0
    %v4924 = vadd.f32 %v4835, %v4923
    %4925 = vmatmul.bf16.gmra.mxu0 %v4469
    %v4926 = vpop.f32.mrf.mxu0
    %v4927 = vadd.f32 %v4838, %v4926
    %v4928 = vpop.f32.mrf.mxu0
    %v4929 = vadd.f32 %v4840, %v4928
    %4930 = vmatmul.bf16.gmra.mxu0 %v4473
    %v4931 = vpop.f32.mrf.mxu0
    %v4932 = vadd.f32 %v4843, %v4931
    %v4933 = vpop.f32.mrf.mxu0
    %v4934 = vadd.f32 %v4845, %v4933
    %4935 = vmatmul.bf16.gmra.mxu0 %v4477
    %v4936 = vpop.f32.mrf.mxu0
    %v4937 = vadd.f32 %v4848, %v4936
    %v4938 = vpop.f32.mrf.mxu0
    %v4939 = vadd.f32 %v4850, %v4938
    %4940 = vmatmul.bf16.gmra.mxu0 %v4481
    %v4941 = vpop.f32.mrf.mxu0
    %v4942 = vadd.f32 %v4853, %v4941
    %v4943 = vpop.f32.mrf.mxu0
    %v4944 = vadd.f32 %v4855, %v4943
    %4945 = vmatmul.bf16.gmra.mxu0 %v4485
    %v4946 = vpop.f32.mrf.mxu0
    %v4947 = vadd.f32 %v4858, %v4946
    %v4948 = vpop.f32.mrf.mxu0
    %v4949 = vadd.f32 %v4860, %v4948
    %4950 = vmatmul.bf16.gmra.mxu0 %v4489
    %v4951 = vpop.f32.mrf.mxu0
    %v4952 = vadd.f32 %v4863, %v4951
    %v4953 = vpop.f32.mrf.mxu0
    %v4954 = vadd.f32 %v4865, %v4953
    %4955 = vmatmul.bf16.gmra.mxu0 %v4493
    %v4956 = vpop.f32.mrf.mxu0
    %v4957 = vadd.f32 %v4868, %v4956
    %v4958 = vpop.f32.mrf.mxu0
    %v4959 = vadd.f32 %v4870, %v4958
    %4960 = vmatmul.bf16.gmra.mxu0 %v4497
    %v4961 = vpop.f32.mrf.mxu0
    %v4962 = vadd.f32 %v4873, %v4961
    %v4963 = vpop.f32.mrf.mxu0
    %v4964 = vadd.f32 %v4875, %v4963
    %4965 = vdwg.mxu0
    %4966 = vmatpush.bf16.msra.mxu0 %v4747
    %4967 = vmatpush.bf16.msra.mxu0 %v4746
    %4968 = vmatpush.bf16.msra.mxu0 %v4745
    %4969 = vmatpush.bf16.msra.mxu0 %v4744
    %4970 = vmatpush.bf16.msra.mxu0 %v4743
    %4971 = vmatpush.bf16.msra.mxu0 %v4742
    %4972 = vmatpush.bf16.msra.mxu0 %v4741
    %4973 = vmatpush.bf16.msra.mxu0 %v4740
    %4974 = vmatmul.bf16.gmra.mxu0 %v4438
    %v4975 = vpop.f32.mrf.mxu0
    %v4976 = vadd.f32 %v4887, %v4975
    %v4977 = vpop.f32.mrf.mxu0
    %v4978 = vadd.f32 %v4889, %v4977
    %4979 = vmatmul.bf16.gmra.mxu0 %v4442
    %v4980 = vpop.f32.mrf.mxu0
    %v4981 = vadd.f32 %v4892, %v4980
    %v4982 = vpop.f32.mrf.mxu0
    %v4983 = vadd.f32 %v4894, %v4982
    %4984 = vmatmul.bf16.gmra.mxu0 %v4446
    %v4985 = vpop.f32.mrf.mxu0
    %v4986 = vadd.f32 %v4897, %v4985
    %v4987 = vpop.f32.mrf.mxu0
    %v4988 = vadd.f32 %v4899, %v4987
    %4989 = vmatmul.bf16.gmra.mxu0 %v4450
    %v4990 = vpop.f32.mrf.mxu0
    %v4991 = vadd.f32 %v4902, %v4990
    %v4992 = vpop.f32.mrf.mxu0
    %v4993 = vadd.f32 %v4904, %v4992
    %4994 = vmatmul.bf16.gmra.mxu0 %v4454
    %v4995 = vpop.f32.mrf.mxu0
    %v4996 = vadd.f32 %v4907, %v4995
    %v4997 = vpop.f32.mrf.mxu0
    %v4998 = vadd.f32 %v4909, %v4997
    %4999 = vmatmul.bf16.gmra.mxu0 %v4458
    %v5000 = vpop.f32.mrf.mxu0
    %v5001 = vadd.f32 %v4912, %v5000
    %v5002 = vpop.f32.mrf.mxu0
    %v5003 = vadd.f32 %v4914, %v5002
    %5004 = vmatmul.bf16.gmra.mxu0 %v4462
    %v5005 = vpop.f32.mrf.mxu0
    %v5006 = vadd.f32 %v4917, %v5005
    %v5007 = vpop.f32.mrf.mxu0
    %v5008 = vadd.f32 %v4919, %v5007
    %5009 = vmatmul.bf16.gmra.mxu0 %v4466
    %v5010 = vpop.f32.mrf.mxu0
    %v5011 = vadd.f32 %v4922, %v5010
    %v5012 = vpop.f32.mrf.mxu0
    %v5013 = vadd.f32 %v4924, %v5012
    %5014 = vmatmul.bf16.gmra.mxu0 %v4470
    %v5015 = vpop.f32.mrf.mxu0
    %v5016 = vadd.f32 %v4927, %v5015
    %v5017 = vpop.f32.mrf.mxu0
    %v5018 = vadd.f32 %v4929, %v5017
    %5019 = vmatmul.bf16.gmra.mxu0 %v4474
    %v5020 = vpop.f32.mrf.mxu0
    %v5021 = vadd.f32 %v4932, %v5020
    %v5022 = vpop.f32.mrf.mxu0
    %v5023 = vadd.f32 %v4934, %v5022
    %5024 = vmatmul.bf16.gmra.mxu0 %v4478
    %v5025 = vpop.f32.mrf.mxu0
    %v5026 = vadd.f32 %v4937, %v5025
    %v5027 = vpop.f32.mrf.mxu0
    %v5028 = vadd.f32 %v4939, %v5027
    %5029 = vmatmul.bf16.gmra.mxu0 %v4482
    %v5030 = vpop.f32.mrf.mxu0
    %v5031 = vadd.f32 %v4942, %v5030
    %v5032 = vpop.f32.mrf.mxu0
    %v5033 = vadd.f32 %v4944, %v5032
    %5034 = vmatmul.bf16.gmra.mxu0 %v4486
    %v5035 = vpop.f32.mrf.mxu0
    %v5036 = vadd.f32 %v4947, %v5035
    %v5037 = vpop.f32.mrf.mxu0
    %v5038 = vadd.f32 %v4949, %v5037
    %5039 = vmatmul.bf16.gmra.mxu0 %v4490
    %v5040 = vpop.f32.mrf.mxu0
    %v5041 = vadd.f32 %v4952, %v5040
    %v5042 = vpop.f32.mrf.mxu0
    %v5043 = vadd.f32 %v4954, %v5042
    %5044 = vmatmul.bf16.gmra.mxu0 %v4494
    %v5045 = vpop.f32.mrf.mxu0
    %v5046 = vadd.f32 %v4957, %v5045
    %v5047 = vpop.f32.mrf.mxu0
    %v5048 = vadd.f32 %v4959, %v5047
    %5049 = vmatmul.bf16.gmra.mxu0 %v4498
    %v5050 = vpop.f32.mrf.mxu0
    %v5051 = vadd.f32 %v4962, %v5050
    %v5052 = vpop.f32.mrf.mxu0
    %v5053 = vadd.f32 %v4964, %v5052
    %5054 = vdwg.mxu0
    %5055 = vmatpush.bf16.msra.mxu0 %v4755
    %5056 = vmatpush.bf16.msra.mxu0 %v4754
    %5057 = vmatpush.bf16.msra.mxu0 %v4753
    %5058 = vmatpush.bf16.msra.mxu0 %v4752
    %5059 = vmatpush.bf16.msra.mxu0 %v4751
    %5060 = vmatpush.bf16.msra.mxu0 %v4750
    %5061 = vmatpush.bf16.msra.mxu0 %v4749
    %5062 = vmatpush.bf16.msra.mxu0 %v4748
    %5063 = vmatmul.bf16.gmra.mxu0 %v4439
    %v5064 = vpop.f32.mrf.mxu0
    %v5065 = vadd.f32 %v4976, %v5064
    %v5066 = vpop.f32.mrf.mxu0
    %v5067 = vadd.f32 %v4978, %v5066
    %5068 = vmatmul.bf16.gmra.mxu0 %v4443
    %v5069 = vpop.f32.mrf.mxu0
    %v5070 = vadd.f32 %v4981, %v5069
    %v5071 = vpop.f32.mrf.mxu0
    %v5072 = vadd.f32 %v4983, %v5071
    %5073 = vmatmul.bf16.gmra.mxu0 %v4447
    %v5074 = vpop.f32.mrf.mxu0
    %v5075 = vadd.f32 %v4986, %v5074
    %v5076 = vpop.f32.mrf.mxu0
    %v5077 = vadd.f32 %v4988, %v5076
    %5078 = vmatmul.bf16.gmra.mxu0 %v4451
    %v5079 = vpop.f32.mrf.mxu0
    %v5080 = vadd.f32 %v4991, %v5079
    %v5081 = vpop.f32.mrf.mxu0
    %v5082 = vadd.f32 %v4993, %v5081
    %5083 = vmatmul.bf16.gmra.mxu0 %v4455
    %v5084 = vpop.f32.mrf.mxu0
    %v5085 = vadd.f32 %v4996, %v5084
    %v5086 = vpop.f32.mrf.mxu0
    %v5087 = vadd.f32 %v4998, %v5086
    %5088 = vmatmul.bf16.gmra.mxu0 %v4459
    %v5089 = vpop.f32.mrf.mxu0
    %v5090 = vadd.f32 %v5001, %v5089
    %v5091 = vpop.f32.mrf.mxu0
    %v5092 = vadd.f32 %v5003, %v5091
    %5093 = vmatmul.bf16.gmra.mxu0 %v4463
    %v5094 = vpop.f32.mrf.mxu0
    %v5095 = vadd.f32 %v5006, %v5094
    %v5096 = vpop.f32.mrf.mxu0
    %v5097 = vadd.f32 %v5008, %v5096
    %5098 = vmatmul.bf16.gmra.mxu0 %v4467
    %v5099 = vpop.f32.mrf.mxu0
    %v5100 = vadd.f32 %v5011, %v5099
    %v5101 = vpop.f32.mrf.mxu0
    %v5102 = vadd.f32 %v5013, %v5101
    %5103 = vmatmul.bf16.gmra.mxu0 %v4471
    %v5104 = vpop.f32.mrf.mxu0
    %v5105 = vadd.f32 %v5016, %v5104
    %v5106 = vpop.f32.mrf.mxu0
    %v5107 = vadd.f32 %v5018, %v5106
    %5108 = vmatmul.bf16.gmra.mxu0 %v4475
    %v5109 = vpop.f32.mrf.mxu0
    %v5110 = vadd.f32 %v5021, %v5109
    %v5111 = vpop.f32.mrf.mxu0
    %v5112 = vadd.f32 %v5023, %v5111
    %5113 = vmatmul.bf16.gmra.mxu0 %v4479
    %v5114 = vpop.f32.mrf.mxu0
    %v5115 = vadd.f32 %v5026, %v5114
    %v5116 = vpop.f32.mrf.mxu0
    %v5117 = vadd.f32 %v5028, %v5116
    %5118 = vmatmul.bf16.gmra.mxu0 %v4483
    %v5119 = vpop.f32.mrf.mxu0
    %v5120 = vadd.f32 %v5031, %v5119
    %v5121 = vpop.f32.mrf.mxu0
    %v5122 = vadd.f32 %v5033, %v5121
    %5123 = vmatmul.bf16.gmra.mxu0 %v4487
    %v5124 = vpop.f32.mrf.mxu0
    %v5125 = vadd.f32 %v5036, %v5124
    %v5126 = vpop.f32.mrf.mxu0
    %v5127 = vadd.f32 %v5038, %v5126
    %5128 = vmatmul.bf16.gmra.mxu0 %v4491
    %v5129 = vpop.f32.mrf.mxu0
    %v5130 = vadd.f32 %v5041, %v5129
    %v5131 = vpop.f32.mrf.mxu0
    %v5132 = vadd.f32 %v5043, %v5131
    %5133 = vmatmul.bf16.gmra.mxu0 %v4495
    %v5134 = vpop.f32.mrf.mxu0
    %v5135 = vadd.f32 %v5046, %v5134
    %v5136 = vpop.f32.mrf.mxu0
    %v5137 = vadd.f32 %v5048, %v5136
    %5138 = vmatmul.bf16.gmra.mxu0 %v4499
    %v5139 = vpop.f32.mrf.mxu0
    %v5140 = vadd.f32 %v5051, %v5139
    %v5141 = vpop.f32.mrf.mxu0
    %v5142 = vadd.f32 %v5053, %v5141
    %5143 = vdwg.mxu0
    %v5144 = vadd.f32 %v4500, %v5065
    %v5145 = vadd.f32 %v4501, %v5067
    %v5146 = vadd.f32 %v4502, %v5070
    %v5147 = vadd.f32 %v4503, %v5072
    %v5148 = vadd.f32 %v4504, %v5075
    %v5149 = vadd.f32 %v4505, %v5077
    %v5150 = vadd.f32 %v4506, %v5080
    %v5151 = vadd.f32 %v4507, %v5082
    %v5152 = vadd.f32 %v4508, %v5085
    %v5153 = vadd.f32 %v4509, %v5087
    %v5154 = vadd.f32 %v4510, %v5090
    %v5155 = vadd.f32 %v4511, %v5092
    %v5156 = vadd.f32 %v4512, %v5095
    %v5157 = vadd.f32 %v4513, %v5097
    %v5158 = vadd.f32 %v4514, %v5100
    %v5159 = vadd.f32 %v4515, %v5102
    %v5160 = vadd.f32 %v4516, %v5105
    %v5161 = vadd.f32 %v4517, %v5107
    %v5162 = vadd.f32 %v4518, %v5110
    %v5163 = vadd.f32 %v4519, %v5112
    %v5164 = vadd.f32 %v4520, %v5115
    %v5165 = vadd.f32 %v4521, %v5117
    %v5166 = vadd.f32 %v4522, %v5120
    %v5167 = vadd.f32 %v4523, %v5122
    %v5168 = vadd.f32 %v4524, %v5125
    %v5169 = vadd.f32 %v4525, %v5127
    %v5170 = vadd.f32 %v4526, %v5130
    %v5171 = vadd.f32 %v4527, %v5132
    %v5172 = vadd.f32 %v4528, %v5135
    %v5173 = vadd.f32 %v4529, %v5137
    %v5174 = vadd.f32 %v4530, %v5140
    %v5175 = vadd.f32 %v4531, %v5142
    %5176 = vst [vmem:[#allocation2] sm:$0xff] %v5144
    %5177 = vst [vmem:[#allocation2 + $0x8] sm:$0xff] %v5145
    %5178 = vst [vmem:[#allocation2 + $0x10] sm:$0xff] %v5146
    %5179 = vst [vmem:[#allocation2 + $0x18] sm:$0xff] %v5147
    %5180 = vst [vmem:[#allocation2 + $0x20] sm:$0xff] %v5148
    %5181 = vst [vmem:[#allocation2 + $0x28] sm:$0xff] %v5149
    %5182 = vst [vmem:[#allocation2 + $0x30] sm:$0xff] %v5150
    %5183 = vst [vmem:[#allocation2 + $0x38] sm:$0xff] %v5151
    %5184 = vst [vmem:[#allocation2 + $0x40] sm:$0xff] %v5152
    %5185 = vst [vmem:[#allocation2 + $0x48] sm:$0xff] %v5153
    %5186 = vst [vmem:[#allocation2 + $0x50] sm:$0xff] %v5154
    %5187 = vst [vmem:[#allocation2 + $0x58] sm:$0xff] %v5155
    %5188 = vst [vmem:[#allocation2 + $0x60] sm:$0xff] %v5156
    %5189 = vst [vmem:[#allocation2 + $0x68] sm:$0xff] %v5157
    %5190 = vst [vmem:[#allocation2 + $0x70] sm:$0xff] %v5158
    %5191 = vst [vmem:[#allocation2 + $0x78] sm:$0xff] %v5159
    %5192 = vst [vmem:[#allocation2 + $0x80] sm:$0xff] %v5160
    %5193 = vst [vmem:[#allocation2 + $0x88] sm:$0xff] %v5161
    %5194 = vst [vmem:[#allocation2 + $0x90] sm:$0xff] %v5162
    %5195 = vst [vmem:[#allocation2 + $0x98] sm:$0xff] %v5163
    %5196 = vst [vmem:[#allocation2 + $0xa0] sm:$0xff] %v5164
    %5197 = vst [vmem:[#allocation2 + $0xa8] sm:$0xff] %v5165
    %5198 = vst [vmem:[#allocation2 + $0xb0] sm:$0xff] %v5166
    %5199 = vst [vmem:[#allocation2 + $0xb8] sm:$0xff] %v5167
    %5200 = vst [vmem:[#allocation2 + $0xc0] sm:$0xff] %v5168
    %5201 = vst [vmem:[#allocation2 + $0xc8] sm:$0xff] %v5169
    %5202 = vst [vmem:[#allocation2 + $0xd0] sm:$0xff] %v5170
    %5203 = vst [vmem:[#allocation2 + $0xd8] sm:$0xff] %v5171
    %5204 = vst [vmem:[#allocation2 + $0xe0] sm:$0xff] %v5172
    %5205 = vst [vmem:[#allocation2 + $0xe8] sm:$0xff] %v5173
    %5206 = vst [vmem:[#allocation2 + $0xf0] sm:$0xff] %v5174
    %5207 = vst [vmem:[#allocation2 + $0xf8] sm:$0xff] %v5175
    // Predicated region
    $region42: #{tpu_custom_call.1} parent=1 // pred_check
      %p5208 = pneg %p82
    $region43: #{tpu_custom_call.1} parent=1 // pred_check_branch
      %5210 = sbr.rel (%p5208) target = $region45
    $region44: #{tpu_custom_call.1} parent=1 // pred_region
      %v5211 = vld [vmem:[#allocation2] sm:$0xff]
      %v5212 = vld [vmem:[#allocation2 + $0x8] sm:$0xff]
      %v5213 = vld [vmem:[#allocation2 + $0x10] sm:$0xff]
      %v5214 = vld [vmem:[#allocation2 + $0x18] sm:$0xff]
      %v5215 = vld [vmem:[#allocation2 + $0x20] sm:$0xff]
      %v5216 = vld [vmem:[#allocation2 + $0x28] sm:$0xff]
      %v5217 = vld [vmem:[#allocation2 + $0x30] sm:$0xff]
      %v5218 = vld [vmem:[#allocation2 + $0x38] sm:$0xff]
      %v5219 = vld [vmem:[#allocation2 + $0x40] sm:$0xff]
      %v5220 = vld [vmem:[#allocation2 + $0x48] sm:$0xff]
      %v5221 = vld [vmem:[#allocation2 + $0x50] sm:$0xff]
      %v5222 = vld [vmem:[#allocation2 + $0x58] sm:$0xff]
      %v5223 = vld [vmem:[#allocation2 + $0x60] sm:$0xff]
      %v5224 = vld [vmem:[#allocation2 + $0x68] sm:$0xff]
      %v5225 = vld [vmem:[#allocation2 + $0x70] sm:$0xff]
      %v5226 = vld [vmem:[#allocation2 + $0x78] sm:$0xff]
      %v5227 = vld [vmem:[#allocation2 + $0x80] sm:$0xff]
      %v5228 = vld [vmem:[#allocation2 + $0x88] sm:$0xff]
      %v5229 = vld [vmem:[#allocation2 + $0x90] sm:$0xff]
      %v5230 = vld [vmem:[#allocation2 + $0x98] sm:$0xff]
      %v5231 = vld [vmem:[#allocation2 + $0xa0] sm:$0xff]
      %v5232 = vld [vmem:[#allocation2 + $0xa8] sm:$0xff]
      %v5233 = vld [vmem:[#allocation2 + $0xb0] sm:$0xff]
      %v5234 = vld [vmem:[#allocation2 + $0xb8] sm:$0xff]
      %v5235 = vld [vmem:[#allocation2 + $0xc0] sm:$0xff]
      %v5236 = vld [vmem:[#allocation2 + $0xc8] sm:$0xff]
      %v5237 = vld [vmem:[#allocation2 + $0xd0] sm:$0xff]
      %v5238 = vld [vmem:[#allocation2 + $0xd8] sm:$0xff]
      %v5239 = vld [vmem:[#allocation2 + $0xe0] sm:$0xff]
      %v5240 = vld [vmem:[#allocation2 + $0xe8] sm:$0xff]
      %v5241 = vld [vmem:[#allocation2 + $0xf0] sm:$0xff]
      %v5242 = vld [vmem:[#allocation2 + $0xf8] sm:$0xff]
      %v5243 = vld [vmem:[%s4] sm:$0x1]
      %v5245 = vperm.slane %v5243, 0
      %v5247 = vadd.f32 %v5211, %v5245
      %v5248 = vadd.f32 %v5212, %v5245
      %v5249 = vadd.f32 %v5213, %v5245
      %v5250 = vadd.f32 %v5214, %v5245
      %v5251 = vadd.f32 %v5215, %v5245
      %v5252 = vadd.f32 %v5216, %v5245
      %v5253 = vadd.f32 %v5217, %v5245
      %v5254 = vadd.f32 %v5218, %v5245
      %v5255 = vadd.f32 %v5219, %v5245
      %v5256 = vadd.f32 %v5220, %v5245
      %v5257 = vadd.f32 %v5221, %v5245
      %v5258 = vadd.f32 %v5222, %v5245
      %v5259 = vadd.f32 %v5223, %v5245
      %v5260 = vadd.f32 %v5224, %v5245
      %v5261 = vadd.f32 %v5225, %v5245
      %v5262 = vadd.f32 %v5226, %v5245
      %v5263 = vadd.f32 %v5227, %v5245
      %v5264 = vadd.f32 %v5228, %v5245
      %v5265 = vadd.f32 %v5229, %v5245
      %v5266 = vadd.f32 %v5230, %v5245
      %v5267 = vadd.f32 %v5231, %v5245
      %v5268 = vadd.f32 %v5232, %v5245
      %v5269 = vadd.f32 %v5233, %v5245
      %v5270 = vadd.f32 %v5234, %v5245
      %v5271 = vadd.f32 %v5235, %v5245
      %v5272 = vadd.f32 %v5236, %v5245
      %v5273 = vadd.f32 %v5237, %v5245
      %v5274 = vadd.f32 %v5238, %v5245
      %v5275 = vadd.f32 %v5239, %v5245
      %v5276 = vadd.f32 %v5240, %v5245
      %v5277 = vadd.f32 %v5241, %v5245
      %v5278 = vadd.f32 %v5242, %v5245
      %5279 = vst [vmem:[#allocation11] sm:$0xff] %v5247
      %5280 = vst [vmem:[#allocation11 + $0x8] sm:$0xff] %v5248
      %5281 = vst [vmem:[#allocation11 + $0x10] sm:$0xff] %v5249
      %5282 = vst [vmem:[#allocation11 + $0x18] sm:$0xff] %v5250
      %5283 = vst [vmem:[#allocation11 + $0x20] sm:$0xff] %v5251
      %5284 = vst [vmem:[#allocation11 + $0x28] sm:$0xff] %v5252
      %5285 = vst [vmem:[#allocation11 + $0x30] sm:$0xff] %v5253
      %5286 = vst [vmem:[#allocation11 + $0x38] sm:$0xff] %v5254
      %5287 = vst [vmem:[#allocation11 + $0x40] sm:$0xff] %v5255
      %5288 = vst [vmem:[#allocation11 + $0x48] sm:$0xff] %v5256
      %5289 = vst [vmem:[#allocation11 + $0x50] sm:$0xff] %v5257
      %5290 = vst [vmem:[#allocation11 + $0x58] sm:$0xff] %v5258
      %5291 = vst [vmem:[#allocation11 + $0x60] sm:$0xff] %v5259
      %5292 = vst [vmem:[#allocation11 + $0x68] sm:$0xff] %v5260
      %5293 = vst [vmem:[#allocation11 + $0x70] sm:$0xff] %v5261
      %5294 = vst [vmem:[#allocation11 + $0x78] sm:$0xff] %v5262
      %5295 = vst [vmem:[#allocation11 + $0x80] sm:$0xff] %v5263
      %5296 = vst [vmem:[#allocation11 + $0x88] sm:$0xff] %v5264
      %5297 = vst [vmem:[#allocation11 + $0x90] sm:$0xff] %v5265
      %5298 = vst [vmem:[#allocation11 + $0x98] sm:$0xff] %v5266
      %5299 = vst [vmem:[#allocation11 + $0xa0] sm:$0xff] %v5267
      %5300 = vst [vmem:[#allocation11 + $0xa8] sm:$0xff] %v5268
      %5301 = vst [vmem:[#allocation11 + $0xb0] sm:$0xff] %v5269
      %5302 = vst [vmem:[#allocation11 + $0xb8] sm:$0xff] %v5270
      %5303 = vst [vmem:[#allocation11 + $0xc0] sm:$0xff] %v5271
      %5304 = vst [vmem:[#allocation11 + $0xc8] sm:$0xff] %v5272
      %5305 = vst [vmem:[#allocation11 + $0xd0] sm:$0xff] %v5273
      %5306 = vst [vmem:[#allocation11 + $0xd8] sm:$0xff] %v5274
      %5307 = vst [vmem:[#allocation11 + $0xe0] sm:$0xff] %v5275
      %5308 = vst [vmem:[#allocation11 + $0xe8] sm:$0xff] %v5276
      %5309 = vst [vmem:[#allocation11 + $0xf0] sm:$0xff] %v5277
      %5310 = vst [vmem:[#allocation11 + $0xf8] sm:$0xff] %v5278
    $region45: #{tpu_custom_call.1} parent=1 // pred_fallthru
      _
    // Predicated region
    $region46: #{tpu_custom_call.1} parent=1 // pred_check
      _
    $region47: #{tpu_custom_call.1} parent=1 // pred_check_branch
      %5312 = sbr.rel (0) target = $region49
    $region48: #{tpu_custom_call.1} parent=1 // pred_region
      %5314 = vsyncadd [#allocation5], 0
      %s5315 = sshll.u32 [#allocation11], 4
      %s5316 = int_to_ptr.vmem [resolvable:$true] %s5315
      %s5317 = sshll.u32 %s5, 4
      %s5318 = int_to_ptr.hbm [resolvable:$true] %s5317
      %5323 = dma.vmem_to_hbm [thread:$0]  %s5316, 4096, %s5318, [#allocation5], 128, 128, 8
    $region49: #{tpu_custom_call.1} parent=1 // pred_fallthru
      _
    // Predicated region
    $region50: #{tpu_custom_call.1} parent=1 // pred_check
      _
    $region51: #{tpu_custom_call.1} parent=1 // pred_check_branch
      %5325 = sbr.rel (0) target = $region53
    $region52: #{tpu_custom_call.1} parent=1 // pred_region
      %5327 = dma.done [#allocation5], 4096
    $region53: #{tpu_custom_call.1} parent=1 // pred_fallthru
      _
    %5328 = vsyncpa [#allocation4], 1
    %5329 = vsyncpa [#allocation7], 1
    %5330 = vsyncpa [#allocation10], 1
    %5331 = vsyncpa [#allocation5], 1

</llo_original>
